<compile_context>
chip_gen: v5e
topology: v5e:2x2
jax: 0.10.0
libtpu: 0.0.40
codegen_flags: <defaults>
</compile_context>

<pallas_src>
import functools

import numpy as np
import jax
import jax.numpy as jnp
from jax import lax
from jax.experimental import pallas as pl
from jax.experimental.pallas import tpu as pltpu

EPS = 1e-5                       # BatchNorm eps (PyTorch default)
COMPUTE_DTYPE = jnp.float32      # flip to jnp.bfloat16 on v6e/v7x (operands only; acc/epilogue stay f32)


# ------------------------------- fused kernel --------------------------------

def _sre_bottleneck_kernel(x_ref, cm_ref, w1_ref, b1_ref, w2_ref, b2_ref,
                           w3_ref, b3_ref, o_ref, y1pad_ref, *, H, W, k):
    p = k // 2
    hw = H * W
    width = w1_ref.shape[1]
    pad0 = p * (W + 1)            # flat padding so every shifted tap window is in-bounds

    x = x_ref[0]                  # (hw, Cin) COMPUTE_DTYPE -- also the residual (identity)

    # ---- conv1 (1x1, bn1 scale folded into w1) + bias + relu; MXU accumulates in f32 ----
    y1 = jnp.dot(x, w1_ref[...], preferred_element_type=jnp.float32)
    y1 = jnp.maximum(y1 + b1_ref[...], 0.0)                         # (hw, width) f32
    y1c = y1.astype(COMPUTE_DTYPE)

    # ---- stage y1 in a flat zero-padded VMEM buffer (pads rewritten each step: cheap,
    #      and safe under megacore grid sharding where grid index 0 may never run here) --
    zpad = jnp.zeros((pad0, width), COMPUTE_DTYPE)
    y1pad_ref[0:pad0, :] = zpad
    y1pad_ref[pad0:pad0 + hw, :] = y1c
    y1pad_ref[pad0 + hw:2 * pad0 + hw, :] = zpad

    # ---- conv2 (kxk SRE conv, stride 1, pad k//2, bn2 scale folded) + bias + relu ------
    # k*k accumulated MXU dots; each tap is a statically shifted slice of the staged
    # buffer.  Row-out-of-range taps hit the zero pad; column wraparound is killed by the
    # precomputed column masks (only needed for dx != center).
    acc = None
    for dy in range(k):
        for dx in range(k):
            t = dy * k + dx
            if dy == p and dx == p:
                tap = y1c                                            # in-register center tap
            else:
                s = (dy - p) * W + (dx - p)
                tap = y1pad_ref[pad0 + s:pad0 + s + hw, :]           # (hw, width)
                if dx != p:
                    tap = tap * cm_ref[dx]                           # (hw,1) {0,1} mask
            part = jnp.dot(tap, w2_ref[t * width:(t + 1) * width, :],
                           preferred_element_type=jnp.float32)
            acc = part if acc is None else acc + part
    y2 = jnp.maximum(acc + b2_ref[...], 0.0)                         # (hw, width) f32

    # ---- conv3 (1x1, bn3 scale folded) + bias + residual add + relu (f32 epilogue) -----
    y3 = jnp.dot(y2.astype(COMPUTE_DTYPE), w3_ref[...],
                 preferred_element_type=jnp.float32)
    y3 = y3 + b3_ref[...] + x.astype(jnp.float32)
    o_ref[0] = jnp.maximum(y3, 0.0).astype(o_ref.dtype)


# ---------------------------------- wrapper -----------------------------------

def sre_bottleneck_forward(x_nchw, params):
    """SREBottleneck.forward (stride=1, downsample=None). Input/output: NCHW."""
    N, cin, H, W = x_nchw.shape
    k = params["k"]
    width = params["w1"].shape[1]
    cout = params["w3"].shape[1]
    hw = H * W
    p = k // 2
    pad0 = p * (W + 1)

    # NCHW -> (N, H*W, C); one XLA transpose per module boundary (boundary is NCHW).
    x = jnp.transpose(x_nchw, (0, 2, 3, 1)).reshape(N, hw, cin).astype(COMPUTE_DTYPE)

    # Column-validity masks (k, hw, 1): plane dx zeroes taps whose shifted column falls
    # outside the image row (kills flat-layout wraparound).  Center plane is all ones
    # (unused).  Tiny array, computed once, DMA'd once per grid step.
    col = jnp.tile(jnp.arange(W, dtype=jnp.int32), H)                # (hw,)
    cmask = jnp.stack(
        [((col + (dx - p) >= 0) & (col + (dx - p) < W)).astype(COMPUTE_DTYPE)
         for dx in range(k)], axis=0)[:, :, None]                    # (k, hw, 1)

    # Explicit VMEM budget: blocks x2 (double buffering) + weights + scratch + f32 temps.
    isz = np.dtype(COMPUTE_DTYPE).itemsize
    x_blk = hw * cin * isz
    o_blk = hw * cout * 4
    w_bytes = (cin * width + k * k * width * width + width * cout) * isz
    b_bytes = (2 * width + cout) * 4 + k * hw * isz
    scratch = (hw + 2 * pad0) * width * isz
    temps = 4 * hw * width * 4 + hw * cout * 4
    need = 2 * (x_blk + o_blk) + w_bytes + b_bytes + scratch + temps + (2 << 20)
    vmem_limit = int(min(max(need, 32 << 20), 64 << 20))             # 64 MiB = v7x physical

    kernel = functools.partial(_sre_bottleneck_kernel, H=H, W=W, k=k)

    out = pl.pallas_call(
        kernel,
        out_shape=jax.ShapeDtypeStruct((N, hw, cout), jnp.float32),
        grid=(N,),
        in_specs=[
            pl.BlockSpec((1, hw, cin), lambda n: (n, 0, 0)),          # x / residual
            pl.BlockSpec((k, hw, 1), lambda n: (0, 0, 0)),            # column masks
            pl.BlockSpec((cin, width), lambda n: (0, 0)),             # w1 (scale-folded)
            pl.BlockSpec((1, width), lambda n: (0, 0)),               # b1
            pl.BlockSpec((k * k * width, width), lambda n: (0, 0)),   # w2 (K-packed, folded)
            pl.BlockSpec((1, width), lambda n: (0, 0)),               # b2
            pl.BlockSpec((width, cout), lambda n: (0, 0)),            # w3 (scale-folded)
            pl.BlockSpec((1, cout), lambda n: (0, 0)),                # b3
        ],
        out_specs=pl.BlockSpec((1, hw, cout), lambda n: (n, 0, 0)),
        scratch_shapes=[
            pltpu.VMEM((hw + 2 * pad0, width), COMPUTE_DTYPE),        # padded y1 stage
        ],
        compiler_params=pltpu.CompilerParams(
            dimension_semantics=("parallel",),
            vmem_limit_bytes=vmem_limit),
    )(x, cmask, params["w1"], params["b1"], params["w2"], params["b2"],
      params["w3"], params["b3"])

    return jnp.transpose(out.reshape(N, H, W, cout), (0, 3, 1, 2))


# ------------------------- deterministic parameters ---------------------------

def make_params(key, inplanes, planes, k=3, base_width=64, groups=1):
    width = int(planes * (base_width / 64.0)) * groups
    out_ch = planes * 4  # expansion = 4
    assert inplanes == out_ch, "downsample=None path requires inplanes == planes*4"
    keys = jax.random.split(key, 16)

    w1_oi = 0.1 * jax.random.normal(keys[0], (width, inplanes), jnp.float32)   # (O, I)
    w3_oi = 0.1 * jax.random.normal(keys[1], (out_ch, width), jnp.float32)     # (O, I)

    # SRE kxk kernel: one (O, I) weight per concentric ring, tiled over the kxk window.
    n_rings = (k + 1) // 2
    ring_w = 0.1 * jax.random.normal(keys[2], (n_rings, width, width), jnp.float32)
    c = k // 2
    ring_idx = jnp.maximum(jnp.abs(jnp.arange(k) - c)[:, None],
                           jnp.abs(jnp.arange(k) - c)[None, :])                # (k, k)
    w2_oihw = jnp.transpose(ring_w[ring_idx], (2, 3, 0, 1))                    # (O, I, k, k)

    def bn_raw(k0, ch):
        gamma = 1.0 + 0.1 * jax.random.normal(keys[k0], (ch,), jnp.float32)
        beta = 0.1 * jax.random.normal(keys[k0 + 1], (ch,), jnp.float32)
        mean = 0.1 * jax.random.normal(keys[k0 + 2], (ch,), jnp.float32)
        var = 0.5 + jax.random.uniform(keys[k0 + 3], (ch,), jnp.float32)
        return gamma, beta, mean, var

    bn1, bn2, bn3 = bn_raw(3, width), bn_raw(7, width), bn_raw(11, out_ch)

    def fold(bn):
        g, b, m, v = bn
        s = g / jnp.sqrt(v + EPS)
        return s[None, :], (b - m * s)[None, :]

    s1, b1 = fold(bn1)
    s2, b2 = fold(bn2)
    s3, b3 = fold(bn3)

    # Fold BN scales into the output-channel columns, then cast operands to COMPUTE_DTYPE
    # so the kernel DMAs compute-dtype bytes and the in-kernel epilogue is bias+ReLU only.
    w1 = (jnp.transpose(w1_oi) * s1).astype(COMPUTE_DTYPE)                    # (I, O)
    w2_packed = (jnp.transpose(w2_oihw, (2, 3, 1, 0))                          # (ky,kx,I,O)
                 .reshape(k * k * width, width) * s2).astype(COMPUTE_DTYPE)
    w3 = (jnp.transpose(w3_oi) * s3).astype(COMPUTE_DTYPE)                    # (I, O)

    params = dict(k=k, w1=w1, b1=b1, w2=w2_packed, b2=b2, w3=w3, b3=b3)
    raw = dict(
        w1_oihw=w1_oi[:, :, None, None],
        w2_oihw=w2_oihw,
        w3_oihw=w3_oi[:, :, None, None],
        bn1=bn1, bn2=bn2, bn3=bn3, k=k,
    )
    return params, raw


# ----------------------- pure-JAX reference (PyTorch semantics) ----------------

def reference_forward(x, raw):
    dn = ("NCHW", "OIHW", "NCHW")
    p = raw["k"] // 2

    def bn(y, bnp):
        g, b, m, v = bnp
        return (g[None, :, None, None] * (y - m[None, :, None, None])
                / jnp.sqrt(v[None, :, None, None] + EPS) + b[None, :, None, None])

    out = lax.conv_general_dilated(x, raw["w1_oihw"], (1, 1), ((0, 0), (0, 0)),
                                   dimension_numbers=dn)
    out = jax.nn.relu(bn(out, raw["bn1"]))
    out = lax.conv_general_dilated(out, raw["w2_oihw"], (1, 1), ((p, p), (p, p)),
                                   dimension_numbers=dn)
    out = jax.nn.relu(bn(out, raw["bn2"]))
    out = lax.conv_general_dilated(out, raw["w3_oihw"], (1, 1), ((0, 0), (0, 0)),
                                   dimension_numbers=dn)
    out = bn(out, raw["bn3"])
    return jax.nn.relu(out + x)


# ------------------------------------ main -------------------------------------

if __name__ == "__main__":
    key = jax.random.PRNGKey(0)
    kx, kp = jax.random.split(key)

    N, planes, H, W = 2, 4, 16, 16
    inplanes = planes * 4            # = 16, so identity add works with downsample=None
    x = jax.random.normal(kx, (N, inplanes, H, W), jnp.float32)

    params, raw = make_params(kp, inplanes, planes, k=3)

    fwd = jax.jit(functools.partial(sre_bottleneck_forward, params=params))
    out = jax.block_until_ready(fwd(x))

    assert out.shape == (N, planes * 4, H, W), out.shape
    ref = reference_forward(x, raw)
    err = float(jnp.max(jnp.abs(out - ref)))
    if err < 1e-3:
        print("KERNEL_OK")
    else:
        print(f"MISMATCH max_abs_err={err}")
</pallas_src>

<mosaic_0001>
module attributes {stable_mosaic.version = 11 : i64} {
  func.func @_sre_bottleneck_kernel(%arg0: i32, %arg1: memref<1x256x16xf32, #tpu.memory_space<vmem>>, %arg2: memref<3x256x1xf32, #tpu.memory_space<vmem>>, %arg3: memref<16x4xf32, #tpu.memory_space<vmem>>, %arg4: memref<1x4xf32, #tpu.memory_space<vmem>>, %arg5: memref<36x4xf32, #tpu.memory_space<vmem>>, %arg6: memref<1x4xf32, #tpu.memory_space<vmem>>, %arg7: memref<4x16xf32, #tpu.memory_space<vmem>>, %arg8: memref<1x16xf32, #tpu.memory_space<vmem>>, %arg9: memref<1x256x16xf32, #tpu.memory_space<vmem>>, %arg10: memref<290x4xf32, #tpu.memory_space<vmem>>) attributes {dimension_semantics = [#tpu.dimension_semantics<parallel>], iteration_bounds = array<i64: 2>, scalar_prefetch = 0 : i64, scratch_operands = 1 : i64, tpu.core_type = #tpu.core_type<tc>, window_params = [{transform_indices = @transform_0, window_bounds = array<i64: 1, 256, 16>}, {pipeline_mode = #tpu.pipeline_mode<synchronous>, transform_indices = @transform_1, window_bounds = array<i64: 3, 256, 1>}, {pipeline_mode = #tpu.pipeline_mode<synchronous>, transform_indices = @transform_2, window_bounds = array<i64: 16, 4>}, {pipeline_mode = #tpu.pipeline_mode<synchronous>, transform_indices = @transform_3, window_bounds = array<i64: 1, 4>}, {pipeline_mode = #tpu.pipeline_mode<synchronous>, transform_indices = @transform_4, window_bounds = array<i64: 36, 4>}, {pipeline_mode = #tpu.pipeline_mode<synchronous>, transform_indices = @transform_5, window_bounds = array<i64: 1, 4>}, {pipeline_mode = #tpu.pipeline_mode<synchronous>, transform_indices = @transform_6, window_bounds = array<i64: 4, 16>}, {pipeline_mode = #tpu.pipeline_mode<synchronous>, transform_indices = @transform_7, window_bounds = array<i64: 1, 16>}, {transform_indices = @transform_8, window_bounds = array<i64: 1, 256, 16>}]} {
    %c0 = arith.constant 0 : index
    %c0_0 = arith.constant 0 : index
    %c0_1 = arith.constant 0 : index
    %0 = vector.load %arg1[%c0, %c0_0, %c0_1] : memref<1x256x16xf32, #tpu.memory_space<vmem>>, vector<1x256x16xf32>
    %1 = vector.shape_cast %0 : vector<1x256x16xf32> to vector<256x16xf32>
    %c0_2 = arith.constant 0 : index
    %c0_3 = arith.constant 0 : index
    %2 = vector.load %arg3[%c0_2, %c0_3] : memref<16x4xf32, #tpu.memory_space<vmem>>, vector<16x4xf32>
    %cst = arith.constant dense<0.000000e+00> : vector<256x4xf32>
    %3 = tpu.matmul %1, %2, %cst {dimension_numbers = #tpu.dot_dimension_numbers<[1], [0], [0], [1], [0, 0, 1, 1], [], []>} : vector<256x16xf32>, vector<16x4xf32>, vector<256x4xf32> -> vector<256x4xf32>
    %c0_4 = arith.constant 0 : index
    %c0_5 = arith.constant 0 : index
    %4 = vector.load %arg4[%c0_4, %c0_5] : memref<1x4xf32, #tpu.memory_space<vmem>>, vector<1x4xf32>
    %5 = vector.broadcast %4 : vector<1x4xf32> to vector<256x4xf32>
    %6 = arith.addf %3, %5 : vector<256x4xf32>
    %cst_6 = arith.constant 0.000000e+00 : f32
    %7 = vector.broadcast %cst_6 : f32 to vector<256x4xf32>
    %8 = arith.maximumf %6, %7 : vector<256x4xf32>
    %cst_7 = arith.constant 0.000000e+00 : f32
    %9 = vector.broadcast %cst_7 : f32 to vector<17x4xf32>
    %c0_8 = arith.constant 0 : index
    %c0_9 = arith.constant 0 : index
    %10 = vector.load %arg10[%c0_8, %c0_9] : memref<290x4xf32, #tpu.memory_space<vmem>>, vector<17x4xf32>
    tpu.vector_store %arg10[%c0_8, %c0_9], %9 {strides = array<i32>} : memref<290x4xf32, #tpu.memory_space<vmem>>, vector<17x4xf32>,
    %c17 = arith.constant 17 : index
    %c0_10 = arith.constant 0 : index
    %11 = vector.load %arg10[%c17, %c0_10] : memref<290x4xf32, #tpu.memory_space<vmem>>, vector<256x4xf32>
    tpu.vector_store %arg10[%c17, %c0_10], %8 {strides = array<i32>} : memref<290x4xf32, #tpu.memory_space<vmem>>, vector<256x4xf32>,
    %c273 = arith.constant 273 : index
    %c0_11 = arith.constant 0 : index
    %12 = vector.load %arg10[%c273, %c0_11] : memref<290x4xf32, #tpu.memory_space<vmem>>, vector<17x4xf32>
    tpu.vector_store %arg10[%c273, %c0_11], %9 {strides = array<i32>} : memref<290x4xf32, #tpu.memory_space<vmem>>, vector<17x4xf32>,
    %c0_12 = arith.constant 0 : index
    %c0_13 = arith.constant 0 : index
    %13 = vector.load %arg10[%c0_12, %c0_13] : memref<290x4xf32, #tpu.memory_space<vmem>>, vector<256x4xf32>
    %c0_14 = arith.constant 0 : index
    %c0_15 = arith.constant 0 : index
    %c0_16 = arith.constant 0 : index
    %14 = vector.load %arg2[%c0_14, %c0_15, %c0_16] : memref<3x256x1xf32, #tpu.memory_space<vmem>>, vector<1x256x1xf32>
    %15 = vector.shape_cast %14 : vector<1x256x1xf32> to vector<256x1xf32>
    %16 = vector.broadcast %15 : vector<256x1xf32> to vector<256x4xf32>
    %17 = arith.mulf %13, %16 : vector<256x4xf32>
    %c0_17 = arith.constant 0 : index
    %c0_18 = arith.constant 0 : index
    %18 = vector.load %arg5[%c0_17, %c0_18] : memref<36x4xf32, #tpu.memory_space<vmem>>, vector<4x4xf32>
    %cst_19 = arith.constant dense<0.000000e+00> : vector<256x4xf32>
    %19 = tpu.matmul %17, %18, %cst_19 {dimension_numbers = #tpu.dot_dimension_numbers<[1], [0], [0], [1], [0, 0, 1, 1], [], []>} : vector<256x4xf32>, vector<4x4xf32>, vector<256x4xf32> -> vector<256x4xf32>
    %c1 = arith.constant 1 : index
    %c0_20 = arith.constant 0 : index
    %20 = vector.load %arg10[%c1, %c0_20] : memref<290x4xf32, #tpu.memory_space<vmem>>, vector<256x4xf32>
    %c4 = arith.constant 4 : index
    %c0_21 = arith.constant 0 : index
    %21 = vector.load %arg5[%c4, %c0_21] : memref<36x4xf32, #tpu.memory_space<vmem>>, vector<4x4xf32>
    %cst_22 = arith.constant dense<0.000000e+00> : vector<256x4xf32>
    %22 = tpu.matmul %20, %21, %cst_22 {dimension_numbers = #tpu.dot_dimension_numbers<[1], [0], [0], [1], [0, 0, 1, 1], [], []>} : vector<256x4xf32>, vector<4x4xf32>, vector<256x4xf32> -> vector<256x4xf32>
    %23 = arith.addf %19, %22 : vector<256x4xf32>
    %c2 = arith.constant 2 : index
    %c0_23 = arith.constant 0 : index
    %24 = vector.load %arg10[%c2, %c0_23] : memref<290x4xf32, #tpu.memory_space<vmem>>, vector<256x4xf32>
    %c2_24 = arith.constant 2 : index
    %c0_25 = arith.constant 0 : index
    %c0_26 = arith.constant 0 : index
    %25 = vector.load %arg2[%c2_24, %c0_25, %c0_26] : memref<3x256x1xf32, #tpu.memory_space<vmem>>, vector<1x256x1xf32>
    %26 = vector.shape_cast %25 : vector<1x256x1xf32> to vector<256x1xf32>
    %27 = vector.broadcast %26 : vector<256x1xf32> to vector<256x4xf32>
    %28 = arith.mulf %24, %27 : vector<256x4xf32>
    %c8 = arith.constant 8 : index
    %c0_27 = arith.constant 0 : index
    %29 = vector.load %arg5[%c8, %c0_27] : memref<36x4xf32, #tpu.memory_space<vmem>>, vector<4x4xf32>
    %cst_28 = arith.constant dense<0.000000e+00> : vector<256x4xf32>
    %30 = tpu.matmul %28, %29, %cst_28 {dimension_numbers = #tpu.dot_dimension_numbers<[1], [0], [0], [1], [0, 0, 1, 1], [], []>} : vector<256x4xf32>, vector<4x4xf32>, vector<256x4xf32> -> vector<256x4xf32>
    %31 = arith.addf %23, %30 : vector<256x4xf32>
    %c16 = arith.constant 16 : index
    %c0_29 = arith.constant 0 : index
    %32 = vector.load %arg10[%c16, %c0_29] : memref<290x4xf32, #tpu.memory_space<vmem>>, vector<256x4xf32>
    %c0_30 = arith.constant 0 : index
    %c0_31 = arith.constant 0 : index
    %c0_32 = arith.constant 0 : index
    %33 = vector.load %arg2[%c0_30, %c0_31, %c0_32] : memref<3x256x1xf32, #tpu.memory_space<vmem>>, vector<1x256x1xf32>
    %34 = vector.shape_cast %33 : vector<1x256x1xf32> to vector<256x1xf32>
    %35 = vector.broadcast %34 : vector<256x1xf32> to vector<256x4xf32>
    %36 = arith.mulf %32, %35 : vector<256x4xf32>
    %c12 = arith.constant 12 : index
    %c0_33 = arith.constant 0 : index
    %37 = vector.load %arg5[%c12, %c0_33] : memref<36x4xf32, #tpu.memory_space<vmem>>, vector<4x4xf32>
    %cst_34 = arith.constant dense<0.000000e+00> : vector<256x4xf32>
    %38 = tpu.matmul %36, %37, %cst_34 {dimension_numbers = #tpu.dot_dimension_numbers<[1], [0], [0], [1], [0, 0, 1, 1], [], []>} : vector<256x4xf32>, vector<4x4xf32>, vector<256x4xf32> -> vector<256x4xf32>
    %39 = arith.addf %31, %38 : vector<256x4xf32>
    %c16_35 = arith.constant 16 : index
    %c0_36 = arith.constant 0 : index
    %40 = vector.load %arg5[%c16_35, %c0_36] : memref<36x4xf32, #tpu.memory_space<vmem>>, vector<4x4xf32>
    %cst_37 = arith.constant dense<0.000000e+00> : vector<256x4xf32>
    %41 = tpu.matmul %8, %40, %cst_37 {dimension_numbers = #tpu.dot_dimension_numbers<[1], [0], [0], [1], [0, 0, 1, 1], [], []>} : vector<256x4xf32>, vector<4x4xf32>, vector<256x4xf32> -> vector<256x4xf32>
    %42 = arith.addf %39, %41 : vector<256x4xf32>
    %c18 = arith.constant 18 : index
    %c0_38 = arith.constant 0 : index
    %43 = vector.load %arg10[%c18, %c0_38] : memref<290x4xf32, #tpu.memory_space<vmem>>, vector<256x4xf32>
    %c2_39 = arith.constant 2 : index
    %c0_40 = arith.constant 0 : index
    %c0_41 = arith.constant 0 : index
    %44 = vector.load %arg2[%c2_39, %c0_40, %c0_41] : memref<3x256x1xf32, #tpu.memory_space<vmem>>, vector<1x256x1xf32>
    %45 = vector.shape_cast %44 : vector<1x256x1xf32> to vector<256x1xf32>
    %46 = vector.broadcast %45 : vector<256x1xf32> to vector<256x4xf32>
    %47 = arith.mulf %43, %46 : vector<256x4xf32>
    %c20 = arith.constant 20 : index
    %c0_42 = arith.constant 0 : index
    %48 = vector.load %arg5[%c20, %c0_42] : memref<36x4xf32, #tpu.memory_space<vmem>>, vector<4x4xf32>
    %cst_43 = arith.constant dense<0.000000e+00> : vector<256x4xf32>
    %49 = tpu.matmul %47, %48, %cst_43 {dimension_numbers = #tpu.dot_dimension_numbers<[1], [0], [0], [1], [0, 0, 1, 1], [], []>} : vector<256x4xf32>, vector<4x4xf32>, vector<256x4xf32> -> vector<256x4xf32>
    %50 = arith.addf %42, %49 : vector<256x4xf32>
    %c32 = arith.constant 32 : index
    %c0_44 = arith.constant 0 : index
    %51 = vector.load %arg10[%c32, %c0_44] : memref<290x4xf32, #tpu.memory_space<vmem>>, vector<256x4xf32>
    %c0_45 = arith.constant 0 : index
    %c0_46 = arith.constant 0 : index
    %c0_47 = arith.constant 0 : index
    %52 = vector.load %arg2[%c0_45, %c0_46, %c0_47] : memref<3x256x1xf32, #tpu.memory_space<vmem>>, vector<1x256x1xf32>
    %53 = vector.shape_cast %52 : vector<1x256x1xf32> to vector<256x1xf32>
    %54 = vector.broadcast %53 : vector<256x1xf32> to vector<256x4xf32>
    %55 = arith.mulf %51, %54 : vector<256x4xf32>
    %c24 = arith.constant 24 : index
    %c0_48 = arith.constant 0 : index
    %56 = vector.load %arg5[%c24, %c0_48] : memref<36x4xf32, #tpu.memory_space<vmem>>, vector<4x4xf32>
    %cst_49 = arith.constant dense<0.000000e+00> : vector<256x4xf32>
    %57 = tpu.matmul %55, %56, %cst_49 {dimension_numbers = #tpu.dot_dimension_numbers<[1], [0], [0], [1], [0, 0, 1, 1], [], []>} : vector<256x4xf32>, vector<4x4xf32>, vector<256x4xf32> -> vector<256x4xf32>
    %58 = arith.addf %50, %57 : vector<256x4xf32>
    %c33 = arith.constant 33 : index
    %c0_50 = arith.constant 0 : index
    %59 = vector.load %arg10[%c33, %c0_50] : memref<290x4xf32, #tpu.memory_space<vmem>>, vector<256x4xf32>
    %c28 = arith.constant 28 : index
    %c0_51 = arith.constant 0 : index
    %60 = vector.load %arg5[%c28, %c0_51] : memref<36x4xf32, #tpu.memory_space<vmem>>, vector<4x4xf32>
    %cst_52 = arith.constant dense<0.000000e+00> : vector<256x4xf32>
    %61 = tpu.matmul %59, %60, %cst_52 {dimension_numbers = #tpu.dot_dimension_numbers<[1], [0], [0], [1], [0, 0, 1, 1], [], []>} : vector<256x4xf32>, vector<4x4xf32>, vector<256x4xf32> -> vector<256x4xf32>
    %62 = arith.addf %58, %61 : vector<256x4xf32>
    %c34 = arith.constant 34 : index
    %c0_53 = arith.constant 0 : index
    %63 = vector.load %arg10[%c34, %c0_53] : memref<290x4xf32, #tpu.memory_space<vmem>>, vector<256x4xf32>
    %c2_54 = arith.constant 2 : index
    %c0_55 = arith.constant 0 : index
    %c0_56 = arith.constant 0 : index
    %64 = vector.load %arg2[%c2_54, %c0_55, %c0_56] : memref<3x256x1xf32, #tpu.memory_space<vmem>>, vector<1x256x1xf32>
    %65 = vector.shape_cast %64 : vector<1x256x1xf32> to vector<256x1xf32>
    %66 = vector.broadcast %65 : vector<256x1xf32> to vector<256x4xf32>
    %67 = arith.mulf %63, %66 : vector<256x4xf32>
    %c32_57 = arith.constant 32 : index
    %c0_58 = arith.constant 0 : index
    %68 = vector.load %arg5[%c32_57, %c0_58] : memref<36x4xf32, #tpu.memory_space<vmem>>, vector<4x4xf32>
    %cst_59 = arith.constant dense<0.000000e+00> : vector<256x4xf32>
    %69 = tpu.matmul %67, %68, %cst_59 {dimension_numbers = #tpu.dot_dimension_numbers<[1], [0], [0], [1], [0, 0, 1, 1], [], []>} : vector<256x4xf32>, vector<4x4xf32>, vector<256x4xf32> -> vector<256x4xf32>
    %70 = arith.addf %62, %69 : vector<256x4xf32>
    %c0_60 = arith.constant 0 : index
    %c0_61 = arith.constant 0 : index
    %71 = vector.load %arg6[%c0_60, %c0_61] : memref<1x4xf32, #tpu.memory_space<vmem>>, vector<1x4xf32>
    %72 = vector.broadcast %71 : vector<1x4xf32> to vector<256x4xf32>
    %73 = arith.addf %70, %72 : vector<256x4xf32>
    %cst_62 = arith.constant 0.000000e+00 : f32
    %74 = vector.broadcast %cst_62 : f32 to vector<256x4xf32>
    %75 = arith.maximumf %73, %74 : vector<256x4xf32>
    %c0_63 = arith.constant 0 : index
    %c0_64 = arith.constant 0 : index
    %76 = vector.load %arg7[%c0_63, %c0_64] : memref<4x16xf32, #tpu.memory_space<vmem>>, vector<4x16xf32>
    %cst_65 = arith.constant dense<0.000000e+00> : vector<256x16xf32>
    %77 = tpu.matmul %75, %76, %cst_65 {dimension_numbers = #tpu.dot_dimension_numbers<[1], [0], [0], [1], [0, 0, 1, 1], [], []>} : vector<256x4xf32>, vector<4x16xf32>, vector<256x16xf32> -> vector<256x16xf32>
    %c0_66 = arith.constant 0 : index
    %c0_67 = arith.constant 0 : index
    %78 = vector.load %arg8[%c0_66, %c0_67] : memref<1x16xf32, #tpu.memory_space<vmem>>, vector<1x16xf32>
    %79 = vector.broadcast %78 : vector<1x16xf32> to vector<256x16xf32>
    %80 = arith.addf %77, %79 : vector<256x16xf32>
    %81 = arith.addf %80, %1 : vector<256x16xf32>
    %cst_68 = arith.constant 0.000000e+00 : f32
    %82 = vector.broadcast %cst_68 : f32 to vector<256x16xf32>
    %83 = arith.maximumf %81, %82 : vector<256x16xf32>
    %c0_69 = arith.constant 0 : index
    %c0_70 = arith.constant 0 : index
    %c0_71 = arith.constant 0 : index
    %84 = vector.load %arg9[%c0_69, %c0_70, %c0_71] : memref<1x256x16xf32, #tpu.memory_space<vmem>>, vector<1x256x16xf32>
    %85 = vector.shape_cast %84 : vector<1x256x16xf32> to vector<256x16xf32>
    %86 = vector.shape_cast %83 : vector<256x16xf32> to vector<1x256x16xf32>
    tpu.vector_store %arg9[%c0_69, %c0_70, %c0_71], %86 {strides = array<i32>} : memref<1x256x16xf32, #tpu.memory_space<vmem>>, vector<1x256x16xf32>,
    return
  }
  func.func @transform_0(%arg0: i32) -> (i32, i32, i32) {
    %c0_i32 = arith.constant 0 : i32
    %c0_i32_0 = arith.constant 0 : i32
    %c0_i32_1 = arith.constant 0 : i32
    return %arg0, %c0_i32, %c0_i32_0 : i32, i32, i32
  }
  func.func @transform_1(%arg0: i32) -> (i32, i32, i32) {
    %c0_i32 = arith.constant 0 : i32
    %c0_i32_0 = arith.constant 0 : i32
    %c0_i32_1 = arith.constant 0 : i32
    %c0_i32_2 = arith.constant 0 : i32
    return %c0_i32, %c0_i32_0, %c0_i32_1 : i32, i32, i32
  }
  func.func @transform_2(%arg0: i32) -> (i32, i32) {
    %c0_i32 = arith.constant 0 : i32
    %c0_i32_0 = arith.constant 0 : i32
    %c0_i32_1 = arith.constant 0 : i32
    return %c0_i32, %c0_i32_0 : i32, i32
  }
  func.func @transform_3(%arg0: i32) -> (i32, i32) {
    %c0_i32 = arith.constant 0 : i32
    %c0_i32_0 = arith.constant 0 : i32
    %c0_i32_1 = arith.constant 0 : i32
    return %c0_i32, %c0_i32_0 : i32, i32
  }
  func.func @transform_4(%arg0: i32) -> (i32, i32) {
    %c0_i32 = arith.constant 0 : i32
    %c0_i32_0 = arith.constant 0 : i32
    %c0_i32_1 = arith.constant 0 : i32
    return %c0_i32, %c0_i32_0 : i32, i32
  }
  func.func @transform_5(%arg0: i32) -> (i32, i32) {
    %c0_i32 = arith.constant 0 : i32
    %c0_i32_0 = arith.constant 0 : i32
    %c0_i32_1 = arith.constant 0 : i32
    return %c0_i32, %c0_i32_0 : i32, i32
  }
  func.func @transform_6(%arg0: i32) -> (i32, i32) {
    %c0_i32 = arith.constant 0 : i32
    %c0_i32_0 = arith.constant 0 : i32
    %c0_i32_1 = arith.constant 0 : i32
    return %c0_i32, %c0_i32_0 : i32, i32
  }
  func.func @transform_7(%arg0: i32) -> (i32, i32) {
    %c0_i32 = arith.constant 0 : i32
    %c0_i32_0 = arith.constant 0 : i32
    %c0_i32_1 = arith.constant 0 : i32
    return %c0_i32, %c0_i32_0 : i32, i32
  }
  func.func @transform_8(%arg0: i32) -> (i32, i32, i32) {
    %c0_i32 = arith.constant 0 : i32
    %c0_i32_0 = arith.constant 0 : i32
    %c0_i32_1 = arith.constant 0 : i32
    return %arg0, %c0_i32, %c0_i32_0 : i32, i32, i32
  }
}

</mosaic_0001>

<llo_original>
// kernel: sre_bottleneck_forward.1
$region0: #{sre_bottleneck_forward.1}
  #allocation0 [shape = 'u32[]', space=smem, size = 0x4, offset = 0x4, fixed_abs, tag = 'smem constant byte address 0x4 - core index']
  #allocation1 [shape = 'u32[72,128]{1,0:T(1,128)}', space=vmem, size = 0x9000, scoped, tag = 'internal scratch']
  #allocation2 [shape = 'f32[290,4]{1,0:T(8,128)}', space=vmem, size = 0x25000, scoped, tag = 'scratch operand']
  %s0 = inlined_call_operand.vmem [shape: f32[2,256,16], index: 0, kind: input, shape index: {}]
  %s1 = inlined_call_operand.vmem [shape: f32[3,256,1], index: 1, kind: input, shape index: {}]
  %s2 = inlined_call_operand.vmem [shape: f32[16,4], index: 2, kind: input, shape index: {}]
  %s3 = inlined_call_operand.vmem [shape: f32[1,4], index: 3, kind: input, shape index: {}]
  %s4 = inlined_call_operand.vmem [shape: f32[36,4], index: 4, kind: input, shape index: {}]
  %s5 = inlined_call_operand.vmem [shape: f32[1,4], index: 5, kind: input, shape index: {}]
  %s6 = inlined_call_operand.vmem [shape: f32[4,16], index: 6, kind: input, shape index: {}]
  %s7 = inlined_call_operand.vmem [shape: f32[1,16], index: 7, kind: input, shape index: {}]
  %s8 = inlined_call_operand.vmem [shape: f32[2,256,16], index: 8, kind: output, shape index: {}]
  %s9 = sld [smem:[#allocation0]]
  $region65: #{sre_bottleneck_forward.1} parent=0
    _
  %s11 = ssub.s32 1, %s9
  %s12 = scalar_select 0, %s11, %s9
  loop: start=0, step=1, limit=4
  $region2: #{sre_bottleneck_forward.1} parent=0 // loop_pre_header
    _
  $region3: #{sre_bottleneck_forward.1} parent=0 // loop_header
    %s14 = sphi 0, %s18
    %p15 = scmp.ge.s32.totalorder %s14, 4
    %s24 = sphi 0, %s26
    %s27 = sphi 0, %s24
    %s28 = sphi 0, %s27
    %s44 = sphi 0, %s28
    %s48 = sphi 0, %s48
    %s50 = sphi 0, %s48
    %s51 = sphi 0, %s50
    %s65 = sphi 0, %s51
    %s69 = sphi 0, %s69
    %s71 = sphi 0, %s69
    %s72 = sphi 0, %s71
    %s86 = sphi 0, %s72
    %s90 = sphi 0, %s90
    %s92 = sphi 0, %s90
    %s93 = sphi 0, %s92
    %s107 = sphi 0, %s93
    %s111 = sphi 0, %s111
    %s113 = sphi 0, %s111
    %s114 = sphi 0, %s113
    %s128 = sphi 0, %s114
    %s132 = sphi 0, %s132
    %s134 = sphi 0, %s132
    %s135 = sphi 0, %s134
    %s149 = sphi 0, %s135
    %s153 = sphi 0, %s153
    %s155 = sphi 0, %s153
    %s156 = sphi 0, %s155
    %s170 = sphi 0, %s156
    %s174 = sphi 0, %s174
    %s176 = sphi 0, %s174
    %s177 = sphi 0, %s176
    %s191 = sphi 0, %s177
    %s197 = sphi 0, %s199
    %s200 = sphi 0, %s197
    %s201 = sphi 0, %s200
    %s217 = sphi 0, %s201
  $region4: #{sre_bottleneck_forward.1} parent=0 // loop_header_branch
    %17 = sbr.rel (%p15) target = $region8
  $region5: #{sre_bottleneck_forward.1} parent=0 // loop_body
    %s19 = ssub.s32 %s14, 1
    %s20 = ssub.s32 %s14, 2
    %s21 = sadd.s32 %s14, 1
    %s22 = ssub.s32 %s14, %s21
    %p23 = scmp.eq.s32.totalorder %s22, 0
    %s25 = sadd.s32 %s24, 1
    %s26 = scalar_select %p23, %s24, %s25
    %p29 = pneg %p23
    %p30 = scmp.eq.s32.totalorder %s14, 1
    %p31 = por %p29, %p30
    %p32 = scmp.ne.s32.totalorder %s24, %s27
    %p33 = scmp.eq.s32.totalorder %s14, 0
    %p34 = por %p32, %p33
    %p35 = scmp.ne.s32.totalorder %s24, %s27
    %p36 = scmp.eq.s32.totalorder %s19, 1
    %p37 = por %p35, %p36
    %p38 = scmp.ne.s32.totalorder %s27, %s28
    %p39 = scmp.eq.s32.totalorder %s19, 0
    %p40 = por %p38, %p39
    %p41 = scmp.ne.s32.totalorder %s27, %s28
    %p42 = scmp.eq.s32.totalorder %s20, 1
    %p43 = por %p41, %p42
    %p45 = scmp.ne.s32.totalorder %s28, %s44
    %p46 = scmp.eq.s32.totalorder %s20, 0
    %p47 = por %p45, %p46
    %s49 = sadd.s32 %s48, 1
    %p52 = scmp.eq.s32.totalorder %s14, 1
    %p53 = scmp.ne.s32.totalorder %s48, %s50
    %p54 = scmp.eq.s32.totalorder %s14, 0
    %p55 = por %p53, %p54
    %p56 = scmp.ne.s32.totalorder %s48, %s50
    %p57 = scmp.eq.s32.totalorder %s19, 1
    %p58 = por %p56, %p57
    %p59 = scmp.ne.s32.totalorder %s50, %s51
    %p60 = scmp.eq.s32.totalorder %s19, 0
    %p61 = por %p59, %p60
    %p62 = scmp.ne.s32.totalorder %s50, %s51
    %p63 = scmp.eq.s32.totalorder %s20, 1
    %p64 = por %p62, %p63
    %p66 = scmp.ne.s32.totalorder %s51, %s65
    %p67 = scmp.eq.s32.totalorder %s20, 0
    %p68 = por %p66, %p67
    %s70 = sadd.s32 %s69, 1
    %p73 = scmp.eq.s32.totalorder %s14, 1
    %p74 = scmp.ne.s32.totalorder %s69, %s71
    %p75 = scmp.eq.s32.totalorder %s14, 0
    %p76 = por %p74, %p75
    %p77 = scmp.ne.s32.totalorder %s69, %s71
    %p78 = scmp.eq.s32.totalorder %s19, 1
    %p79 = por %p77, %p78
    %p80 = scmp.ne.s32.totalorder %s71, %s72
    %p81 = scmp.eq.s32.totalorder %s19, 0
    %p82 = por %p80, %p81
    %p83 = scmp.ne.s32.totalorder %s71, %s72
    %p84 = scmp.eq.s32.totalorder %s20, 1
    %p85 = por %p83, %p84
    %p87 = scmp.ne.s32.totalorder %s72, %s86
    %p88 = scmp.eq.s32.totalorder %s20, 0
    %p89 = por %p87, %p88
    %s91 = sadd.s32 %s90, 1
    %p94 = scmp.eq.s32.totalorder %s14, 1
    %p95 = scmp.ne.s32.totalorder %s90, %s92
    %p96 = scmp.eq.s32.totalorder %s14, 0
    %p97 = por %p95, %p96
    %p98 = scmp.ne.s32.totalorder %s90, %s92
    %p99 = scmp.eq.s32.totalorder %s19, 1
    %p100 = por %p98, %p99
    %p101 = scmp.ne.s32.totalorder %s92, %s93
    %p102 = scmp.eq.s32.totalorder %s19, 0
    %p103 = por %p101, %p102
    %p104 = scmp.ne.s32.totalorder %s92, %s93
    %p105 = scmp.eq.s32.totalorder %s20, 1
    %p106 = por %p104, %p105
    %p108 = scmp.ne.s32.totalorder %s93, %s107
    %p109 = scmp.eq.s32.totalorder %s20, 0
    %p110 = por %p108, %p109
    %s112 = sadd.s32 %s111, 1
    %p115 = scmp.eq.s32.totalorder %s14, 1
    %p116 = scmp.ne.s32.totalorder %s111, %s113
    %p117 = scmp.eq.s32.totalorder %s14, 0
    %p118 = por %p116, %p117
    %p119 = scmp.ne.s32.totalorder %s111, %s113
    %p120 = scmp.eq.s32.totalorder %s19, 1
    %p121 = por %p119, %p120
    %p122 = scmp.ne.s32.totalorder %s113, %s114
    %p123 = scmp.eq.s32.totalorder %s19, 0
    %p124 = por %p122, %p123
    %p125 = scmp.ne.s32.totalorder %s113, %s114
    %p126 = scmp.eq.s32.totalorder %s20, 1
    %p127 = por %p125, %p126
    %p129 = scmp.ne.s32.totalorder %s114, %s128
    %p130 = scmp.eq.s32.totalorder %s20, 0
    %p131 = por %p129, %p130
    %s133 = sadd.s32 %s132, 1
    %p136 = scmp.eq.s32.totalorder %s14, 1
    %p137 = scmp.ne.s32.totalorder %s132, %s134
    %p138 = scmp.eq.s32.totalorder %s14, 0
    %p139 = por %p137, %p138
    %p140 = scmp.ne.s32.totalorder %s132, %s134
    %p141 = scmp.eq.s32.totalorder %s19, 1
    %p142 = por %p140, %p141
    %p143 = scmp.ne.s32.totalorder %s134, %s135
    %p144 = scmp.eq.s32.totalorder %s19, 0
    %p145 = por %p143, %p144
    %p146 = scmp.ne.s32.totalorder %s134, %s135
    %p147 = scmp.eq.s32.totalorder %s20, 1
    %p148 = por %p146, %p147
    %p150 = scmp.ne.s32.totalorder %s135, %s149
    %p151 = scmp.eq.s32.totalorder %s20, 0
    %p152 = por %p150, %p151
    %s154 = sadd.s32 %s153, 1
    %p157 = scmp.eq.s32.totalorder %s14, 1
    %p158 = scmp.ne.s32.totalorder %s153, %s155
    %p159 = scmp.eq.s32.totalorder %s14, 0
    %p160 = por %p158, %p159
    %p161 = scmp.ne.s32.totalorder %s153, %s155
    %p162 = scmp.eq.s32.totalorder %s19, 1
    %p163 = por %p161, %p162
    %p164 = scmp.ne.s32.totalorder %s155, %s156
    %p165 = scmp.eq.s32.totalorder %s19, 0
    %p166 = por %p164, %p165
    %p167 = scmp.ne.s32.totalorder %s155, %s156
    %p168 = scmp.eq.s32.totalorder %s20, 1
    %p169 = por %p167, %p168
    %p171 = scmp.ne.s32.totalorder %s156, %s170
    %p172 = scmp.eq.s32.totalorder %s20, 0
    %p173 = por %p171, %p172
    %s175 = sadd.s32 %s174, 1
    %p178 = scmp.eq.s32.totalorder %s14, 1
    %p179 = scmp.ne.s32.totalorder %s174, %s176
    %p180 = scmp.eq.s32.totalorder %s14, 0
    %p181 = por %p179, %p180
    %p182 = scmp.ne.s32.totalorder %s174, %s176
    %p183 = scmp.eq.s32.totalorder %s19, 1
    %p184 = por %p182, %p183
    %p185 = scmp.ne.s32.totalorder %s176, %s177
    %p186 = scmp.eq.s32.totalorder %s19, 0
    %p187 = por %p185, %p186
    %p188 = scmp.ne.s32.totalorder %s176, %s177
    %p189 = scmp.eq.s32.totalorder %s20, 1
    %p190 = por %p188, %p189
    %p192 = scmp.ne.s32.totalorder %s177, %s191
    %p193 = scmp.eq.s32.totalorder %s20, 0
    %p194 = por %p192, %p193
    %s195 = ssub.s32 %s14, %s21
    %p196 = scmp.eq.s32.totalorder %s195, 0
    %s198 = sadd.s32 %s197, 1
    %s199 = scalar_select %p196, %s197, %s198
    %p202 = pneg %p196
    %p203 = scmp.eq.s32.totalorder %s14, 1
    %p204 = por %p202, %p203
    %p205 = scmp.ne.s32.totalorder %s197, %s200
    %p206 = scmp.eq.s32.totalorder %s14, 0
    %p207 = por %p205, %p206
    %p208 = scmp.ne.s32.totalorder %s197, %s200
    %p209 = scmp.eq.s32.totalorder %s19, 1
    %p210 = por %p208, %p209
    %p211 = scmp.ne.s32.totalorder %s200, %s201
    %p212 = scmp.eq.s32.totalorder %s19, 0
    %p213 = por %p211, %p212
    %p214 = scmp.ne.s32.totalorder %s200, %s201
    %p215 = scmp.eq.s32.totalorder %s20, 1
    %p216 = por %p214, %p215
    %p218 = scmp.ne.s32.totalorder %s201, %s217
    %p219 = scmp.eq.s32.totalorder %s20, 0
    %p220 = por %p218, %p219
    %p221 = scmp.le.s32.totalorder 1, %s14
    %p222 = scmp.lt.s32.totalorder %s14, 3
    %p223 = pnand %p221, %p222
    %p224 = pneg %p223
    // Predicated region
    $region9: #{sre_bottleneck_forward.1} parent=5 // pred_check
      _
    $region10: #{sre_bottleneck_forward.1} parent=5 // pred_check_branch
      %226 = sbr.rel (%p223) target = $region12
    $region11: #{sre_bottleneck_forward.1} parent=5 // pred_region
      %s227 = ssub.s32 %s14, 1
      // Predicated region
      $region13: #{sre_bottleneck_forward.1} parent=11 // pred_check
        %p228 = pneg %p61
      $region14: #{sre_bottleneck_forward.1} parent=11 // pred_check_branch
        %230 = sbr.rel (%p228) target = $region16
      $region15: #{sre_bottleneck_forward.1} parent=11 // pred_region
        _
      $region16: #{sre_bottleneck_forward.1} parent=11 // pred_fallthru
        _
      // Predicated region
      $region17: #{sre_bottleneck_forward.1} parent=11 // pred_check
        %p231 = pneg %p82
      $region18: #{sre_bottleneck_forward.1} parent=11 // pred_check_branch
        %233 = sbr.rel (%p231) target = $region20
      $region19: #{sre_bottleneck_forward.1} parent=11 // pred_region
        _
      $region20: #{sre_bottleneck_forward.1} parent=11 // pred_fallthru
        _
      // Predicated region
      $region21: #{sre_bottleneck_forward.1} parent=11 // pred_check
        %p234 = pneg %p103
      $region22: #{sre_bottleneck_forward.1} parent=11 // pred_check_branch
        %236 = sbr.rel (%p234) target = $region24
      $region23: #{sre_bottleneck_forward.1} parent=11 // pred_region
        _
      $region24: #{sre_bottleneck_forward.1} parent=11 // pred_fallthru
        _
      // Predicated region
      $region25: #{sre_bottleneck_forward.1} parent=11 // pred_check
        %p237 = pneg %p124
      $region26: #{sre_bottleneck_forward.1} parent=11 // pred_check_branch
        %239 = sbr.rel (%p237) target = $region28
      $region27: #{sre_bottleneck_forward.1} parent=11 // pred_region
        _
      $region28: #{sre_bottleneck_forward.1} parent=11 // pred_fallthru
        _
      // Predicated region
      $region29: #{sre_bottleneck_forward.1} parent=11 // pred_check
        %p240 = pneg %p145
      $region30: #{sre_bottleneck_forward.1} parent=11 // pred_check_branch
        %242 = sbr.rel (%p240) target = $region32
      $region31: #{sre_bottleneck_forward.1} parent=11 // pred_region
        _
      $region32: #{sre_bottleneck_forward.1} parent=11 // pred_fallthru
        _
      // Predicated region
      $region33: #{sre_bottleneck_forward.1} parent=11 // pred_check
        %p243 = pneg %p166
      $region34: #{sre_bottleneck_forward.1} parent=11 // pred_check_branch
        %245 = sbr.rel (%p243) target = $region36
      $region35: #{sre_bottleneck_forward.1} parent=11 // pred_region
        _
      $region36: #{sre_bottleneck_forward.1} parent=11 // pred_fallthru
        _
      // Predicated region
      $region37: #{sre_bottleneck_forward.1} parent=11 // pred_check
        %p246 = pneg %p187
      $region38: #{sre_bottleneck_forward.1} parent=11 // pred_check_branch
        %248 = sbr.rel (%p246) target = $region40
      $region39: #{sre_bottleneck_forward.1} parent=11 // pred_region
        _
      $region40: #{sre_bottleneck_forward.1} parent=11 // pred_fallthru
        _
    $region12: #{sre_bottleneck_forward.1} parent=5 // pred_fallthru
      _
    %p249 = scmp.lt.s32.totalorder %s14, 2
    // Predicated region
    $region41: #{sre_bottleneck_forward.1} parent=5 // pred_check
      %p250 = pneg %p249
    $region42: #{sre_bottleneck_forward.1} parent=5 // pred_check_branch
      %252 = sbr.rel (%p250) target = $region44
    $region43: #{sre_bottleneck_forward.1} parent=5 // pred_region
      // Predicated region
      $region45: #{sre_bottleneck_forward.1} parent=43 // pred_check
        %p253 = pneg %p34
      $region46: #{sre_bottleneck_forward.1} parent=43 // pred_check_branch
        %255 = sbr.rel (%p253) target = $region48
      $region47: #{sre_bottleneck_forward.1} parent=43 // pred_region
        %p256 = scmp.lt.s32.totalorder %s14, 1
        %s257 = scalar_select %p256, %s14, 1
        %s258 = smul.addr %s257, 32
        %s259 = smul.addr %s258, 8
        %s260 = scalar_lea.vmem %s0, %s259
      $region48: #{sre_bottleneck_forward.1} parent=43 // pred_fallthru
        _
    $region44: #{sre_bottleneck_forward.1} parent=5 // pred_fallthru
      _
    %p261 = scmp.le.s32.totalorder 1, %s14
    %p262 = scmp.lt.s32.totalorder %s14, 3
    %p263 = pnand %p261, %p262
    %p264 = pneg %p263
    // Predicated region
    $region49: #{sre_bottleneck_forward.1} parent=5 // pred_check
      _
    $region50: #{sre_bottleneck_forward.1} parent=5 // pred_check_branch
      %266 = sbr.rel (%p263) target = $region52
    $region51: #{sre_bottleneck_forward.1} parent=5 // pred_region
      %s267 = ssub.s32 %s14, 1
      %p268 = scmp.lt.s32.totalorder %s19, 1
      %s269 = scalar_select %p268, %s19, 1
      %s270 = smul.addr %s269, 32
      %s271 = smul.addr %s270, 8
      %s272 = scalar_lea.vmem %s0, %s271
      %p273 = pneg %p40
      %p274 = pneg %p37
      %p275 = pneg %p61
      %p276 = pneg %p58
      %p277 = pneg %p82
      %p278 = pneg %p79
      %p279 = pneg %p103
      %p280 = pneg %p100
      %p281 = pneg %p124
      %p282 = pneg %p121
      %p283 = pneg %p145
      %p284 = pneg %p142
      %p285 = pneg %p166
      %p286 = pneg %p163
      %p287 = pneg %p187
      %p288 = pneg %p184
      %p289 = pneg %p213
      %p290 = pneg %p210
      %p291 = scmp.lt.s32.totalorder %s19, 1
      %s292 = scalar_select %p291, %s19, 1
      %s293 = smul.addr %s292, 32
      %s294 = smul.addr %s293, 8
      %s295 = scalar_lea.vmem %s8, %s294
      %p296 = scmp.lt.s32.totalorder %s19, 1
      %s297 = scalar_select %p296, %s19, 1
      %s298 = smul.addr %s297, 32
      %s299 = smul.addr %s298, 8
      %s300 = scalar_lea.vmem %s0, %s299
      %p301 = scmp.lt.s32.totalorder %s19, 1
      %s302 = scalar_select %p301, %s19, 1
      %s303 = smul.addr %s302, 32
      %s304 = smul.addr %s303, 8
      %s305 = scalar_lea.vmem %s8, %s304
      %v306 = vld [vmem:[%s300] sm:$0xff]
      %v307 = vld [vmem:[%s300 + $0x8] sm:$0xff]
      %v308 = vld [vmem:[%s300 + $0x10] sm:$0xff]
      %v309 = vld [vmem:[%s300 + $0x18] sm:$0xff]
      %v310 = vld [vmem:[%s300 + $0x20] sm:$0xff]
      %v311 = vld [vmem:[%s300 + $0x28] sm:$0xff]
      %v312 = vld [vmem:[%s300 + $0x30] sm:$0xff]
      %v313 = vld [vmem:[%s300 + $0x38] sm:$0xff]
      %v314 = vld [vmem:[%s300 + $0x40] sm:$0xff]
      %v315 = vld [vmem:[%s300 + $0x48] sm:$0xff]
      %v316 = vld [vmem:[%s300 + $0x50] sm:$0xff]
      %v317 = vld [vmem:[%s300 + $0x58] sm:$0xff]
      %v318 = vld [vmem:[%s300 + $0x60] sm:$0xff]
      %v319 = vld [vmem:[%s300 + $0x68] sm:$0xff]
      %v320 = vld [vmem:[%s300 + $0x70] sm:$0xff]
      %v321 = vld [vmem:[%s300 + $0x78] sm:$0xff]
      %v322 = vld [vmem:[%s300 + $0x80] sm:$0xff]
      %v323 = vld [vmem:[%s300 + $0x88] sm:$0xff]
      %v324 = vld [vmem:[%s300 + $0x90] sm:$0xff]
      %v325 = vld [vmem:[%s300 + $0x98] sm:$0xff]
      %v326 = vld [vmem:[%s300 + $0xa0] sm:$0xff]
      %v327 = vld [vmem:[%s300 + $0xa8] sm:$0xff]
      %v328 = vld [vmem:[%s300 + $0xb0] sm:$0xff]
      %v329 = vld [vmem:[%s300 + $0xb8] sm:$0xff]
      %v330 = vld [vmem:[%s300 + $0xc0] sm:$0xff]
      %v331 = vld [vmem:[%s300 + $0xc8] sm:$0xff]
      %v332 = vld [vmem:[%s300 + $0xd0] sm:$0xff]
      %v333 = vld [vmem:[%s300 + $0xd8] sm:$0xff]
      %v334 = vld [vmem:[%s300 + $0xe0] sm:$0xff]
      %v335 = vld [vmem:[%s300 + $0xe8] sm:$0xff]
      %v336 = vld [vmem:[%s300 + $0xf0] sm:$0xff]
      %v337 = vld [vmem:[%s300 + $0xf8] sm:$0xff]
      %v338 = vld [vmem:[%s2] sm:$0xff]
      %v339 = vld [vmem:[%s2 + $0x8] sm:$0xff]
      %v340 = vld [vmem:[%s3] sm:$0x1]
      %v342 = vperm.slane %v340, 0
      %vm344 = vcmask 130048
      %v346 = vsel %vm344, %v306, 0
      %v349 = vsel %vm344, %v307, 0
      %v352 = vsel %vm344, %v308, 0
      %v355 = vsel %vm344, %v309, 0
      %v358 = vsel %vm344, %v310, 0
      %v361 = vsel %vm344, %v311, 0
      %v364 = vsel %vm344, %v312, 0
      %v367 = vsel %vm344, %v313, 0
      %v370 = vsel %vm344, %v314, 0
      %v373 = vsel %vm344, %v315, 0
      %v376 = vsel %vm344, %v316, 0
      %v379 = vsel %vm344, %v317, 0
      %v382 = vsel %vm344, %v318, 0
      %v385 = vsel %vm344, %v319, 0
      %v388 = vsel %vm344, %v320, 0
      %v391 = vsel %vm344, %v321, 0
      %v394 = vsel %vm344, %v322, 0
      %v397 = vsel %vm344, %v323, 0
      %v400 = vsel %vm344, %v324, 0
      %v403 = vsel %vm344, %v325, 0
      %v406 = vsel %vm344, %v326, 0
      %v409 = vsel %vm344, %v327, 0
      %v412 = vsel %vm344, %v328, 0
      %v415 = vsel %vm344, %v329, 0
      %v418 = vsel %vm344, %v330, 0
      %v421 = vsel %vm344, %v331, 0
      %v424 = vsel %vm344, %v332, 0
      %v427 = vsel %vm344, %v333, 0
      %v430 = vsel %vm344, %v334, 0
      %v433 = vsel %vm344, %v335, 0
      %v436 = vsel %vm344, %v336, 0
      %v439 = vsel %vm344, %v337, 0
      %441 = vmatpush.msra.mxu0 0.0
      %442 = vmatpush.msra.mxu0 0.0
      %443 = vmatpush.msra.mxu0 0.0
      %444 = vmatpush.msra.mxu0 0.0
      %445 = vmatpush.msra.mxu0 0.0
      %446 = vmatpush.msra.mxu0 0.0
      %447 = vmatpush.msra.mxu0 0.0
      %448 = vmatpush.msra.mxu0 0.0
      %449 = vmatpush.msra.mxu0 0.0
      %450 = vmatpush.msra.mxu0 0.0
      %451 = vmatpush.msra.mxu0 0.0
      %452 = vmatpush.msra.mxu0 0.0
      %453 = vmatpush.msra.mxu0 0.0
      %454 = vmatpush.msra.mxu0 0.0
      %455 = vmatpush.msra.mxu0 %v339
      %456 = vmatpush.msra.mxu0 %v338
      %457 = vmatmul.f32.gmra.mxu0 %v346
      %v458 = vpop.f32.mrf.mxu0
      %v459 = vadd.f32 %v342, %v458
      %460 = vmatmul.f32.gmra.mxu0 %v349
      %v461 = vpop.f32.mrf.mxu0
      %v462 = vadd.f32 %v342, %v461
      %463 = vmatmul.f32.gmra.mxu0 %v352
      %v464 = vpop.f32.mrf.mxu0
      %v465 = vadd.f32 %v342, %v464
      %466 = vmatmul.f32.gmra.mxu0 %v355
      %v467 = vpop.f32.mrf.mxu0
      %v468 = vadd.f32 %v342, %v467
      %469 = vmatmul.f32.gmra.mxu0 %v358
      %v470 = vpop.f32.mrf.mxu0
      %v471 = vadd.f32 %v342, %v470
      %472 = vmatmul.f32.gmra.mxu0 %v361
      %v473 = vpop.f32.mrf.mxu0
      %v474 = vadd.f32 %v342, %v473
      %475 = vmatmul.f32.gmra.mxu0 %v364
      %v476 = vpop.f32.mrf.mxu0
      %v477 = vadd.f32 %v342, %v476
      %478 = vmatmul.f32.gmra.mxu0 %v367
      %v479 = vpop.f32.mrf.mxu0
      %v480 = vadd.f32 %v342, %v479
      %481 = vmatmul.f32.gmra.mxu0 %v370
      %v482 = vpop.f32.mrf.mxu0
      %v483 = vadd.f32 %v342, %v482
      %484 = vmatmul.f32.gmra.mxu0 %v373
      %v485 = vpop.f32.mrf.mxu0
      %v486 = vadd.f32 %v342, %v485
      %487 = vmatmul.f32.gmra.mxu0 %v376
      %v488 = vpop.f32.mrf.mxu0
      %v489 = vadd.f32 %v342, %v488
      %490 = vmatmul.f32.gmra.mxu0 %v379
      %v491 = vpop.f32.mrf.mxu0
      %v492 = vadd.f32 %v342, %v491
      %493 = vmatmul.f32.gmra.mxu0 %v382
      %v494 = vpop.f32.mrf.mxu0
      %v495 = vadd.f32 %v342, %v494
      %496 = vmatmul.f32.gmra.mxu0 %v385
      %v497 = vpop.f32.mrf.mxu0
      %v498 = vadd.f32 %v342, %v497
      %499 = vmatmul.f32.gmra.mxu0 %v388
      %v500 = vpop.f32.mrf.mxu0
      %v501 = vadd.f32 %v342, %v500
      %502 = vmatmul.f32.gmra.mxu0 %v391
      %v503 = vpop.f32.mrf.mxu0
      %v504 = vadd.f32 %v342, %v503
      %505 = vmatmul.f32.gmra.mxu0 %v394
      %v506 = vpop.f32.mrf.mxu0
      %v507 = vadd.f32 %v342, %v506
      %508 = vmatmul.f32.gmra.mxu0 %v397
      %v509 = vpop.f32.mrf.mxu0
      %v510 = vadd.f32 %v342, %v509
      %511 = vmatmul.f32.gmra.mxu0 %v400
      %v512 = vpop.f32.mrf.mxu0
      %v513 = vadd.f32 %v342, %v512
      %514 = vmatmul.f32.gmra.mxu0 %v403
      %v515 = vpop.f32.mrf.mxu0
      %v516 = vadd.f32 %v342, %v515
      %517 = vmatmul.f32.gmra.mxu0 %v406
      %v518 = vpop.f32.mrf.mxu0
      %v519 = vadd.f32 %v342, %v518
      %520 = vmatmul.f32.gmra.mxu0 %v409
      %v521 = vpop.f32.mrf.mxu0
      %v522 = vadd.f32 %v342, %v521
      %523 = vmatmul.f32.gmra.mxu0 %v412
      %v524 = vpop.f32.mrf.mxu0
      %v525 = vadd.f32 %v342, %v524
      %526 = vmatmul.f32.gmra.mxu0 %v415
      %v527 = vpop.f32.mrf.mxu0
      %v528 = vadd.f32 %v342, %v527
      %529 = vmatmul.f32.gmra.mxu0 %v418
      %v530 = vpop.f32.mrf.mxu0
      %v531 = vadd.f32 %v342, %v530
      %532 = vmatmul.f32.gmra.mxu0 %v421
      %v533 = vpop.f32.mrf.mxu0
      %v534 = vadd.f32 %v342, %v533
      %535 = vmatmul.f32.gmra.mxu0 %v424
      %v536 = vpop.f32.mrf.mxu0
      %v537 = vadd.f32 %v342, %v536
      %538 = vmatmul.f32.gmra.mxu0 %v427
      %v539 = vpop.f32.mrf.mxu0
      %v540 = vadd.f32 %v342, %v539
      %541 = vmatmul.f32.gmra.mxu0 %v430
      %v542 = vpop.f32.mrf.mxu0
      %v543 = vadd.f32 %v342, %v542
      %544 = vmatmul.f32.gmra.mxu0 %v433
      %v545 = vpop.f32.mrf.mxu0
      %v546 = vadd.f32 %v342, %v545
      %547 = vmatmul.f32.gmra.mxu0 %v436
      %v548 = vpop.f32.mrf.mxu0
      %v549 = vadd.f32 %v342, %v548
      %550 = vmatmul.f32.gmra.mxu0 %v439
      %v551 = vpop.f32.mrf.mxu0
      %v552 = vadd.f32 %v342, %v551
      %553 = vdwg.mxu0
      %v554 = vmax.f32 %v459, 0.0
      %v555 = vmax.f32 %v462, 0.0
      %v556 = vmax.f32 %v465, 0.0
      %v557 = vmax.f32 %v468, 0.0
      %v558 = vmax.f32 %v471, 0.0
      %v559 = vmax.f32 %v474, 0.0
      %v560 = vmax.f32 %v477, 0.0
      %v561 = vmax.f32 %v480, 0.0
      %v562 = vmax.f32 %v483, 0.0
      %v563 = vmax.f32 %v486, 0.0
      %v564 = vmax.f32 %v489, 0.0
      %v565 = vmax.f32 %v492, 0.0
      %v566 = vmax.f32 %v495, 0.0
      %v567 = vmax.f32 %v498, 0.0
      %v568 = vmax.f32 %v501, 0.0
      %v569 = vmax.f32 %v504, 0.0
      %v570 = vmax.f32 %v507, 0.0
      %v571 = vmax.f32 %v510, 0.0
      %v572 = vmax.f32 %v513, 0.0
      %v573 = vmax.f32 %v516, 0.0
      %v574 = vmax.f32 %v519, 0.0
      %v575 = vmax.f32 %v522, 0.0
      %v576 = vmax.f32 %v525, 0.0
      %v577 = vmax.f32 %v528, 0.0
      %v578 = vmax.f32 %v531, 0.0
      %v579 = vmax.f32 %v534, 0.0
      %v580 = vmax.f32 %v537, 0.0
      %v581 = vmax.f32 %v540, 0.0
      %v582 = vmax.f32 %v543, 0.0
      %v583 = vmax.f32 %v546, 0.0
      %v584 = vmax.f32 %v549, 0.0
      %v585 = vmax.f32 %v552, 0.0
      %vm586 = vcmask 31744
      %587 = vst.msk [vmem:[#allocation2] sm:$0xff] %vm586, 0.0
      %588 = vst.msk [vmem:[#allocation2 + $0x8] sm:$0xff] %vm586, 0.0
      %vm589 = vcmask 24576
      %590 = vst.msk [vmem:[#allocation2 + $0x10] sm:$0x1] %vm589, 0.0
      %591 = vst.msk [vmem:[#allocation2 + $0x11] sm:$0xff] %vm586, %v554
      %592 = vst.msk [vmem:[#allocation2 + $0x19] sm:$0xff] %vm586, %v555
      %593 = vst.msk [vmem:[#allocation2 + $0x21] sm:$0xff] %vm586, %v556
      %594 = vst.msk [vmem:[#allocation2 + $0x29] sm:$0xff] %vm586, %v557
      %595 = vst.msk [vmem:[#allocation2 + $0x31] sm:$0xff] %vm586, %v558
      %596 = vst.msk [vmem:[#allocation2 + $0x39] sm:$0xff] %vm586, %v559
      %597 = vst.msk [vmem:[#allocation2 + $0x41] sm:$0xff] %vm586, %v560
      %598 = vst.msk [vmem:[#allocation2 + $0x49] sm:$0xff] %vm586, %v561
      %599 = vst.msk [vmem:[#allocation2 + $0x51] sm:$0xff] %vm586, %v562
      %600 = vst.msk [vmem:[#allocation2 + $0x59] sm:$0xff] %vm586, %v563
      %601 = vst.msk [vmem:[#allocation2 + $0x61] sm:$0xff] %vm586, %v564
      %602 = vst.msk [vmem:[#allocation2 + $0x69] sm:$0xff] %vm586, %v565
      %603 = vst.msk [vmem:[#allocation2 + $0x71] sm:$0xff] %vm586, %v566
      %604 = vst.msk [vmem:[#allocation2 + $0x79] sm:$0xff] %vm586, %v567
      %605 = vst.msk [vmem:[#allocation2 + $0x81] sm:$0xff] %vm586, %v568
      %606 = vst.msk [vmem:[#allocation2 + $0x89] sm:$0xff] %vm586, %v569
      %607 = vst.msk [vmem:[#allocation2 + $0x91] sm:$0xff] %vm586, %v570
      %608 = vst.msk [vmem:[#allocation2 + $0x99] sm:$0xff] %vm586, %v571
      %609 = vst.msk [vmem:[#allocation2 + $0xa1] sm:$0xff] %vm586, %v572
      %610 = vst.msk [vmem:[#allocation2 + $0xa9] sm:$0xff] %vm586, %v573
      %611 = vst.msk [vmem:[#allocation2 + $0xb1] sm:$0xff] %vm586, %v574
      %612 = vst.msk [vmem:[#allocation2 + $0xb9] sm:$0xff] %vm586, %v575
      %613 = vst.msk [vmem:[#allocation2 + $0xc1] sm:$0xff] %vm586, %v576
      %614 = vst.msk [vmem:[#allocation2 + $0xc9] sm:$0xff] %vm586, %v577
      %615 = vst.msk [vmem:[#allocation2 + $0xd1] sm:$0xff] %vm586, %v578
      %616 = vst.msk [vmem:[#allocation2 + $0xd9] sm:$0xff] %vm586, %v579
      %617 = vst.msk [vmem:[#allocation2 + $0xe1] sm:$0xff] %vm586, %v580
      %618 = vst.msk [vmem:[#allocation2 + $0xe9] sm:$0xff] %vm586, %v581
      %619 = vst.msk [vmem:[#allocation2 + $0xf1] sm:$0xff] %vm586, %v582
      %620 = vst.msk [vmem:[#allocation2 + $0xf9] sm:$0xff] %vm586, %v583
      %621 = vst.msk [vmem:[#allocation2 + $0x101] sm:$0xff] %vm586, %v584
      %622 = vst.msk [vmem:[#allocation2 + $0x109] sm:$0xff] %vm586, %v585
      %623 = vst.msk [vmem:[#allocation2 + $0x111] sm:$0xff] %vm586, 0.0
      %624 = vst.msk [vmem:[#allocation2 + $0x119] sm:$0xff] %vm586, 0.0
      %625 = vst.msk [vmem:[#allocation2 + $0x121] sm:$0x1] %vm589, 0.0
      %v626 = vld [vmem:[#allocation2] sm:$0xff]
      %v627 = vld [vmem:[#allocation2 + $0x8] sm:$0xff]
      %v628 = vld [vmem:[#allocation2 + $0x10] sm:$0xff]
      %v629 = vld [vmem:[#allocation2 + $0x18] sm:$0xff]
      %v630 = vld [vmem:[#allocation2 + $0x20] sm:$0xff]
      %v631 = vld [vmem:[#allocation2 + $0x28] sm:$0xff]
      %v632 = vld [vmem:[#allocation2 + $0x30] sm:$0xff]
      %v633 = vld [vmem:[#allocation2 + $0x38] sm:$0xff]
      %v634 = vld [vmem:[#allocation2 + $0x40] sm:$0xff]
      %v635 = vld [vmem:[#allocation2 + $0x48] sm:$0xff]
      %v636 = vld [vmem:[#allocation2 + $0x50] sm:$0xff]
      %v637 = vld [vmem:[#allocation2 + $0x58] sm:$0xff]
      %v638 = vld [vmem:[#allocation2 + $0x60] sm:$0xff]
      %v639 = vld [vmem:[#allocation2 + $0x68] sm:$0xff]
      %v640 = vld [vmem:[#allocation2 + $0x70] sm:$0xff]
      %v641 = vld [vmem:[#allocation2 + $0x78] sm:$0xff]
      %v642 = vld [vmem:[#allocation2 + $0x80] sm:$0xff]
      %v643 = vld [vmem:[#allocation2 + $0x88] sm:$0xff]
      %v644 = vld [vmem:[#allocation2 + $0x90] sm:$0xff]
      %v645 = vld [vmem:[#allocation2 + $0x98] sm:$0xff]
      %v646 = vld [vmem:[#allocation2 + $0xa0] sm:$0xff]
      %v647 = vld [vmem:[#allocation2 + $0xa8] sm:$0xff]
      %v648 = vld [vmem:[#allocation2 + $0xb0] sm:$0xff]
      %v649 = vld [vmem:[#allocation2 + $0xb8] sm:$0xff]
      %v650 = vld [vmem:[#allocation2 + $0xc0] sm:$0xff]
      %v651 = vld [vmem:[#allocation2 + $0xc8] sm:$0xff]
      %v652 = vld [vmem:[#allocation2 + $0xd0] sm:$0xff]
      %v653 = vld [vmem:[#allocation2 + $0xd8] sm:$0xff]
      %v654 = vld [vmem:[#allocation2 + $0xe0] sm:$0xff]
      %v655 = vld [vmem:[#allocation2 + $0xe8] sm:$0xff]
      %v656 = vld [vmem:[#allocation2 + $0xf0] sm:$0xff]
      %v657 = vld [vmem:[#allocation2 + $0xf8] sm:$0xff]
      %v658 = vld [vmem:[%s1] sm:$0xff]
      %v659 = vld [vmem:[%s1 + $0x8] sm:$0xff]
      %v660 = vld [vmem:[%s1 + $0x10] sm:$0xff]
      %v661 = vld [vmem:[%s1 + $0x18] sm:$0xff]
      %v662 = vld [vmem:[%s1 + $0x20] sm:$0xff]
      %v663 = vld [vmem:[%s1 + $0x28] sm:$0xff]
      %v664 = vld [vmem:[%s1 + $0x30] sm:$0xff]
      %v665 = vld [vmem:[%s1 + $0x38] sm:$0xff]
      %v666 = vld [vmem:[%s1 + $0x40] sm:$0xff]
      %v667 = vld [vmem:[%s1 + $0x48] sm:$0xff]
      %v668 = vld [vmem:[%s1 + $0x50] sm:$0xff]
      %v669 = vld [vmem:[%s1 + $0x58] sm:$0xff]
      %v670 = vld [vmem:[%s1 + $0x60] sm:$0xff]
      %v671 = vld [vmem:[%s1 + $0x68] sm:$0xff]
      %v672 = vld [vmem:[%s1 + $0x70] sm:$0xff]
      %v673 = vld [vmem:[%s1 + $0x78] sm:$0xff]
      %v674 = vld [vmem:[%s1 + $0x80] sm:$0xff]
      %v675 = vld [vmem:[%s1 + $0x88] sm:$0xff]
      %v676 = vld [vmem:[%s1 + $0x90] sm:$0xff]
      %v677 = vld [vmem:[%s1 + $0x98] sm:$0xff]
      %v678 = vld [vmem:[%s1 + $0xa0] sm:$0xff]
      %v679 = vld [vmem:[%s1 + $0xa8] sm:$0xff]
      %v680 = vld [vmem:[%s1 + $0xb0] sm:$0xff]
      %v681 = vld [vmem:[%s1 + $0xb8] sm:$0xff]
      %v682 = vld [vmem:[%s1 + $0xc0] sm:$0xff]
      %v683 = vld [vmem:[%s1 + $0xc8] sm:$0xff]
      %v684 = vld [vmem:[%s1 + $0xd0] sm:$0xff]
      %v685 = vld [vmem:[%s1 + $0xd8] sm:$0xff]
      %v686 = vld [vmem:[%s1 + $0xe0] sm:$0xff]
      %v687 = vld [vmem:[%s1 + $0xe8] sm:$0xff]
      %v688 = vld [vmem:[%s1 + $0xf0] sm:$0xff]
      %v689 = vld [vmem:[%s1 + $0xf8] sm:$0xff]
      %691 = vset.pattern.permute.xlu0 0
      %692 = vperm.xlu0 %691, %v658
      %v693 = vpop.permute.xlu0 %692
      %696 = vset.pattern.permute.xlu0 0
      %697 = vperm.xlu0 %696, %v659
      %v698 = vpop.permute.xlu0 %697
      %701 = vset.pattern.permute.xlu0 0
      %702 = vperm.xlu0 %701, %v660
      %v703 = vpop.permute.xlu0 %702
      %706 = vset.pattern.permute.xlu0 0
      %707 = vperm.xlu0 %706, %v661
      %v708 = vpop.permute.xlu0 %707
      %711 = vset.pattern.permute.xlu0 0
      %712 = vperm.xlu0 %711, %v662
      %v713 = vpop.permute.xlu0 %712
      %716 = vset.pattern.permute.xlu0 0
      %717 = vperm.xlu0 %716, %v663
      %v718 = vpop.permute.xlu0 %717
      %721 = vset.pattern.permute.xlu0 0
      %722 = vperm.xlu0 %721, %v664
      %v723 = vpop.permute.xlu0 %722
      %726 = vset.pattern.permute.xlu0 0
      %727 = vperm.xlu0 %726, %v665
      %v728 = vpop.permute.xlu0 %727
      %731 = vset.pattern.permute.xlu0 0
      %732 = vperm.xlu0 %731, %v666
      %v733 = vpop.permute.xlu0 %732
      %736 = vset.pattern.permute.xlu0 0
      %737 = vperm.xlu0 %736, %v667
      %v738 = vpop.permute.xlu0 %737
      %741 = vset.pattern.permute.xlu0 0
      %742 = vperm.xlu0 %741, %v668
      %v743 = vpop.permute.xlu0 %742
      %746 = vset.pattern.permute.xlu0 0
      %747 = vperm.xlu0 %746, %v669
      %v748 = vpop.permute.xlu0 %747
      %751 = vset.pattern.permute.xlu0 0
      %752 = vperm.xlu0 %751, %v670
      %v753 = vpop.permute.xlu0 %752
      %756 = vset.pattern.permute.xlu0 0
      %757 = vperm.xlu0 %756, %v671
      %v758 = vpop.permute.xlu0 %757
      %761 = vset.pattern.permute.xlu0 0
      %762 = vperm.xlu0 %761, %v672
      %v763 = vpop.permute.xlu0 %762
      %766 = vset.pattern.permute.xlu0 0
      %767 = vperm.xlu0 %766, %v673
      %v768 = vpop.permute.xlu0 %767
      %771 = vset.pattern.permute.xlu0 0
      %772 = vperm.xlu0 %771, %v674
      %v773 = vpop.permute.xlu0 %772
      %776 = vset.pattern.permute.xlu0 0
      %777 = vperm.xlu0 %776, %v675
      %v778 = vpop.permute.xlu0 %777
      %781 = vset.pattern.permute.xlu0 0
      %782 = vperm.xlu0 %781, %v676
      %v783 = vpop.permute.xlu0 %782
      %786 = vset.pattern.permute.xlu0 0
      %787 = vperm.xlu0 %786, %v677
      %v788 = vpop.permute.xlu0 %787
      %791 = vset.pattern.permute.xlu0 0
      %792 = vperm.xlu0 %791, %v678
      %v793 = vpop.permute.xlu0 %792
      %796 = vset.pattern.permute.xlu0 0
      %797 = vperm.xlu0 %796, %v679
      %v798 = vpop.permute.xlu0 %797
      %801 = vset.pattern.permute.xlu0 0
      %802 = vperm.xlu0 %801, %v680
      %v803 = vpop.permute.xlu0 %802
      %806 = vset.pattern.permute.xlu0 0
      %807 = vperm.xlu0 %806, %v681
      %v808 = vpop.permute.xlu0 %807
      %811 = vset.pattern.permute.xlu0 0
      %812 = vperm.xlu0 %811, %v682
      %v813 = vpop.permute.xlu0 %812
      %816 = vset.pattern.permute.xlu0 0
      %817 = vperm.xlu0 %816, %v683
      %v818 = vpop.permute.xlu0 %817
      %821 = vset.pattern.permute.xlu0 0
      %822 = vperm.xlu0 %821, %v684
      %v823 = vpop.permute.xlu0 %822
      %826 = vset.pattern.permute.xlu0 0
      %827 = vperm.xlu0 %826, %v685
      %v828 = vpop.permute.xlu0 %827
      %831 = vset.pattern.permute.xlu0 0
      %832 = vperm.xlu0 %831, %v686
      %v833 = vpop.permute.xlu0 %832
      %836 = vset.pattern.permute.xlu0 0
      %837 = vperm.xlu0 %836, %v687
      %v838 = vpop.permute.xlu0 %837
      %841 = vset.pattern.permute.xlu0 0
      %842 = vperm.xlu0 %841, %v688
      %v843 = vpop.permute.xlu0 %842
      %846 = vset.pattern.permute.xlu0 0
      %847 = vperm.xlu0 %846, %v689
      %v848 = vpop.permute.xlu0 %847
      %v850 = vmul.f32 %v626, %v693
      %v851 = vmul.f32 %v627, %v698
      %v852 = vmul.f32 %v628, %v703
      %v853 = vmul.f32 %v629, %v708
      %v854 = vmul.f32 %v630, %v713
      %v855 = vmul.f32 %v631, %v718
      %v856 = vmul.f32 %v632, %v723
      %v857 = vmul.f32 %v633, %v728
      %v858 = vmul.f32 %v634, %v733
      %v859 = vmul.f32 %v635, %v738
      %v860 = vmul.f32 %v636, %v743
      %v861 = vmul.f32 %v637, %v748
      %v862 = vmul.f32 %v638, %v753
      %v863 = vmul.f32 %v639, %v758
      %v864 = vmul.f32 %v640, %v763
      %v865 = vmul.f32 %v641, %v768
      %v866 = vmul.f32 %v642, %v773
      %v867 = vmul.f32 %v643, %v778
      %v868 = vmul.f32 %v644, %v783
      %v869 = vmul.f32 %v645, %v788
      %v870 = vmul.f32 %v646, %v793
      %v871 = vmul.f32 %v647, %v798
      %v872 = vmul.f32 %v648, %v803
      %v873 = vmul.f32 %v649, %v808
      %v874 = vmul.f32 %v650, %v813
      %v875 = vmul.f32 %v651, %v818
      %v876 = vmul.f32 %v652, %v823
      %v877 = vmul.f32 %v653, %v828
      %v878 = vmul.f32 %v654, %v833
      %v879 = vmul.f32 %v655, %v838
      %v880 = vmul.f32 %v656, %v843
      %v881 = vmul.f32 %v657, %v848
      %v882 = vld [vmem:[%s4] sm:$0xf]
      %v883 = vld [vmem:[#allocation2 + $0x1] sm:$0xff]
      %v884 = vld [vmem:[#allocation2 + $0x9] sm:$0xff]
      %v885 = vld [vmem:[#allocation2 + $0x11] sm:$0xff]
      %v886 = vld [vmem:[#allocation2 + $0x19] sm:$0xff]
      %v887 = vld [vmem:[#allocation2 + $0x21] sm:$0xff]
      %v888 = vld [vmem:[#allocation2 + $0x29] sm:$0xff]
      %v889 = vld [vmem:[#allocation2 + $0x31] sm:$0xff]
      %v890 = vld [vmem:[#allocation2 + $0x39] sm:$0xff]
      %v891 = vld [vmem:[#allocation2 + $0x41] sm:$0xff]
      %v892 = vld [vmem:[#allocation2 + $0x49] sm:$0xff]
      %v893 = vld [vmem:[#allocation2 + $0x51] sm:$0xff]
      %v894 = vld [vmem:[#allocation2 + $0x59] sm:$0xff]
      %v895 = vld [vmem:[#allocation2 + $0x61] sm:$0xff]
      %v896 = vld [vmem:[#allocation2 + $0x69] sm:$0xff]
      %v897 = vld [vmem:[#allocation2 + $0x71] sm:$0xff]
      %v898 = vld [vmem:[#allocation2 + $0x79] sm:$0xff]
      %v899 = vld [vmem:[#allocation2 + $0x81] sm:$0xff]
      %v900 = vld [vmem:[#allocation2 + $0x89] sm:$0xff]
      %v901 = vld [vmem:[#allocation2 + $0x91] sm:$0xff]
      %v902 = vld [vmem:[#allocation2 + $0x99] sm:$0xff]
      %v903 = vld [vmem:[#allocation2 + $0xa1] sm:$0xff]
      %v904 = vld [vmem:[#allocation2 + $0xa9] sm:$0xff]
      %v905 = vld [vmem:[#allocation2 + $0xb1] sm:$0xff]
      %v906 = vld [vmem:[#allocation2 + $0xb9] sm:$0xff]
      %v907 = vld [vmem:[#allocation2 + $0xc1] sm:$0xff]
      %v908 = vld [vmem:[#allocation2 + $0xc9] sm:$0xff]
      %v909 = vld [vmem:[#allocation2 + $0xd1] sm:$0xff]
      %v910 = vld [vmem:[#allocation2 + $0xd9] sm:$0xff]
      %v911 = vld [vmem:[#allocation2 + $0xe1] sm:$0xff]
      %v912 = vld [vmem:[#allocation2 + $0xe9] sm:$0xff]
      %v913 = vld [vmem:[#allocation2 + $0xf1] sm:$0xff]
      %v914 = vld [vmem:[#allocation2 + $0xf9] sm:$0xff]
      %v915 = vld [vmem:[%s4 + $0x4] sm:$0xf]
      %v917 = vsel %vm586, %v883, 0
      %v920 = vsel %vm586, %v884, 0
      %v923 = vsel %vm586, %v885, 0
      %v926 = vsel %vm586, %v886, 0
      %v929 = vsel %vm586, %v887, 0
      %v932 = vsel %vm586, %v888, 0
      %v935 = vsel %vm586, %v889, 0
      %v938 = vsel %vm586, %v890, 0
      %v941 = vsel %vm586, %v891, 0
      %v944 = vsel %vm586, %v892, 0
      %v947 = vsel %vm586, %v893, 0
      %v950 = vsel %vm586, %v894, 0
      %v953 = vsel %vm586, %v895, 0
      %v956 = vsel %vm586, %v896, 0
      %v959 = vsel %vm586, %v897, 0
      %v962 = vsel %vm586, %v898, 0
      %v965 = vsel %vm586, %v899, 0
      %v968 = vsel %vm586, %v900, 0
      %v971 = vsel %vm586, %v901, 0
      %v974 = vsel %vm586, %v902, 0
      %v977 = vsel %vm586, %v903, 0
      %v980 = vsel %vm586, %v904, 0
      %v983 = vsel %vm586, %v905, 0
      %v986 = vsel %vm586, %v906, 0
      %v989 = vsel %vm586, %v907, 0
      %v992 = vsel %vm586, %v908, 0
      %v995 = vsel %vm586, %v909, 0
      %v998 = vsel %vm586, %v910, 0
      %v1001 = vsel %vm586, %v911, 0
      %v1004 = vsel %vm586, %v912, 0
      %v1007 = vsel %vm586, %v913, 0
      %v1010 = vsel %vm586, %v914, 0
      %vm1012 = vcmask 1043456
      %v1014 = vsel %vm1012, %v915, 0
      %1016 = vmatpush.msra.mxu0 0.0
      %1017 = vmatpush.msra.mxu0 0.0
      %1018 = vmatpush.msra.mxu0 0.0
      %1019 = vmatpush.msra.mxu0 0.0
      %1020 = vmatpush.msra.mxu0 0.0
      %1021 = vmatpush.msra.mxu0 0.0
      %1022 = vmatpush.msra.mxu0 0.0
      %1023 = vmatpush.msra.mxu0 0.0
      %1024 = vmatpush.msra.mxu0 0.0
      %1025 = vmatpush.msra.mxu0 0.0
      %1026 = vmatpush.msra.mxu0 0.0
      %1027 = vmatpush.msra.mxu0 0.0
      %1028 = vmatpush.msra.mxu0 0.0
      %1029 = vmatpush.msra.mxu0 0.0
      %1030 = vmatpush.msra.mxu0 0.0
      %1031 = vmatpush.msra.mxu0 %v1014
      %1032 = vmatmul.f32.gmra.mxu0 %v917
      %v1033 = vpop.f32.mrf.mxu0
      %v1034 = vadd.f32 0.0, %v1033
      %1035 = vmatmul.f32.gmra.mxu0 %v920
      %v1036 = vpop.f32.mrf.mxu0
      %v1037 = vadd.f32 0.0, %v1036
      %1038 = vmatmul.f32.gmra.mxu0 %v923
      %v1039 = vpop.f32.mrf.mxu0
      %v1040 = vadd.f32 0.0, %v1039
      %1041 = vmatmul.f32.gmra.mxu0 %v926
      %v1042 = vpop.f32.mrf.mxu0
      %v1043 = vadd.f32 0.0, %v1042
      %1044 = vmatmul.f32.gmra.mxu0 %v929
      %v1045 = vpop.f32.mrf.mxu0
      %v1046 = vadd.f32 0.0, %v1045
      %1047 = vmatmul.f32.gmra.mxu0 %v932
      %v1048 = vpop.f32.mrf.mxu0
      %v1049 = vadd.f32 0.0, %v1048
      %1050 = vmatmul.f32.gmra.mxu0 %v935
      %v1051 = vpop.f32.mrf.mxu0
      %v1052 = vadd.f32 0.0, %v1051
      %1053 = vmatmul.f32.gmra.mxu0 %v938
      %v1054 = vpop.f32.mrf.mxu0
      %v1055 = vadd.f32 0.0, %v1054
      %1056 = vmatmul.f32.gmra.mxu0 %v941
      %v1057 = vpop.f32.mrf.mxu0
      %v1058 = vadd.f32 0.0, %v1057
      %1059 = vmatmul.f32.gmra.mxu0 %v944
      %v1060 = vpop.f32.mrf.mxu0
      %v1061 = vadd.f32 0.0, %v1060
      %1062 = vmatmul.f32.gmra.mxu0 %v947
      %v1063 = vpop.f32.mrf.mxu0
      %v1064 = vadd.f32 0.0, %v1063
      %1065 = vmatmul.f32.gmra.mxu0 %v950
      %v1066 = vpop.f32.mrf.mxu0
      %v1067 = vadd.f32 0.0, %v1066
      %1068 = vmatmul.f32.gmra.mxu0 %v953
      %v1069 = vpop.f32.mrf.mxu0
      %v1070 = vadd.f32 0.0, %v1069
      %1071 = vmatmul.f32.gmra.mxu0 %v956
      %v1072 = vpop.f32.mrf.mxu0
      %v1073 = vadd.f32 0.0, %v1072
      %1074 = vmatmul.f32.gmra.mxu0 %v959
      %v1075 = vpop.f32.mrf.mxu0
      %v1076 = vadd.f32 0.0, %v1075
      %1077 = vmatmul.f32.gmra.mxu0 %v962
      %v1078 = vpop.f32.mrf.mxu0
      %v1079 = vadd.f32 0.0, %v1078
      %1080 = vmatmul.f32.gmra.mxu0 %v965
      %v1081 = vpop.f32.mrf.mxu0
      %v1082 = vadd.f32 0.0, %v1081
      %1083 = vmatmul.f32.gmra.mxu0 %v968
      %v1084 = vpop.f32.mrf.mxu0
      %v1085 = vadd.f32 0.0, %v1084
      %1086 = vmatmul.f32.gmra.mxu0 %v971
      %v1087 = vpop.f32.mrf.mxu0
      %v1088 = vadd.f32 0.0, %v1087
      %1089 = vmatmul.f32.gmra.mxu0 %v974
      %v1090 = vpop.f32.mrf.mxu0
      %v1091 = vadd.f32 0.0, %v1090
      %1092 = vmatmul.f32.gmra.mxu0 %v977
      %v1093 = vpop.f32.mrf.mxu0
      %v1094 = vadd.f32 0.0, %v1093
      %1095 = vmatmul.f32.gmra.mxu0 %v980
      %v1096 = vpop.f32.mrf.mxu0
      %v1097 = vadd.f32 0.0, %v1096
      %1098 = vmatmul.f32.gmra.mxu0 %v983
      %v1099 = vpop.f32.mrf.mxu0
      %v1100 = vadd.f32 0.0, %v1099
      %1101 = vmatmul.f32.gmra.mxu0 %v986
      %v1102 = vpop.f32.mrf.mxu0
      %v1103 = vadd.f32 0.0, %v1102
      %1104 = vmatmul.f32.gmra.mxu0 %v989
      %v1105 = vpop.f32.mrf.mxu0
      %v1106 = vadd.f32 0.0, %v1105
      %1107 = vmatmul.f32.gmra.mxu0 %v992
      %v1108 = vpop.f32.mrf.mxu0
      %v1109 = vadd.f32 0.0, %v1108
      %1110 = vmatmul.f32.gmra.mxu0 %v995
      %v1111 = vpop.f32.mrf.mxu0
      %v1112 = vadd.f32 0.0, %v1111
      %1113 = vmatmul.f32.gmra.mxu0 %v998
      %v1114 = vpop.f32.mrf.mxu0
      %v1115 = vadd.f32 0.0, %v1114
      %1116 = vmatmul.f32.gmra.mxu0 %v1001
      %v1117 = vpop.f32.mrf.mxu0
      %v1118 = vadd.f32 0.0, %v1117
      %1119 = vmatmul.f32.gmra.mxu0 %v1004
      %v1120 = vpop.f32.mrf.mxu0
      %v1121 = vadd.f32 0.0, %v1120
      %1122 = vmatmul.f32.gmra.mxu0 %v1007
      %v1123 = vpop.f32.mrf.mxu0
      %v1124 = vadd.f32 0.0, %v1123
      %1125 = vmatmul.f32.gmra.mxu0 %v1010
      %v1126 = vpop.f32.mrf.mxu0
      %v1127 = vadd.f32 0.0, %v1126
      %1128 = vdwg.mxu0
      %v1130 = vsel %vm586, %v850, 0
      %v1133 = vsel %vm586, %v851, 0
      %v1136 = vsel %vm586, %v852, 0
      %v1139 = vsel %vm586, %v853, 0
      %v1142 = vsel %vm586, %v854, 0
      %v1145 = vsel %vm586, %v855, 0
      %v1148 = vsel %vm586, %v856, 0
      %v1151 = vsel %vm586, %v857, 0
      %v1154 = vsel %vm586, %v858, 0
      %v1157 = vsel %vm586, %v859, 0
      %v1160 = vsel %vm586, %v860, 0
      %v1163 = vsel %vm586, %v861, 0
      %v1166 = vsel %vm586, %v862, 0
      %v1169 = vsel %vm586, %v863, 0
      %v1172 = vsel %vm586, %v864, 0
      %v1175 = vsel %vm586, %v865, 0
      %v1178 = vsel %vm586, %v866, 0
      %v1181 = vsel %vm586, %v867, 0
      %v1184 = vsel %vm586, %v868, 0
      %v1187 = vsel %vm586, %v869, 0
      %v1190 = vsel %vm586, %v870, 0
      %v1193 = vsel %vm586, %v871, 0
      %v1196 = vsel %vm586, %v872, 0
      %v1199 = vsel %vm586, %v873, 0
      %v1202 = vsel %vm586, %v874, 0
      %v1205 = vsel %vm586, %v875, 0
      %v1208 = vsel %vm586, %v876, 0
      %v1211 = vsel %vm586, %v877, 0
      %v1214 = vsel %vm586, %v878, 0
      %v1217 = vsel %vm586, %v879, 0
      %v1220 = vsel %vm586, %v880, 0
      %v1223 = vsel %vm586, %v881, 0
      %v1226 = vsel %vm1012, %v882, 0
      %1228 = vmatpush.msra.mxu0 0.0
      %1229 = vmatpush.msra.mxu0 0.0
      %1230 = vmatpush.msra.mxu0 0.0
      %1231 = vmatpush.msra.mxu0 0.0
      %1232 = vmatpush.msra.mxu0 0.0
      %1233 = vmatpush.msra.mxu0 0.0
      %1234 = vmatpush.msra.mxu0 0.0
      %1235 = vmatpush.msra.mxu0 0.0
      %1236 = vmatpush.msra.mxu0 0.0
      %1237 = vmatpush.msra.mxu0 0.0
      %1238 = vmatpush.msra.mxu0 0.0
      %1239 = vmatpush.msra.mxu0 0.0
      %1240 = vmatpush.msra.mxu0 0.0
      %1241 = vmatpush.msra.mxu0 0.0
      %1242 = vmatpush.msra.mxu0 0.0
      %1243 = vmatpush.msra.mxu0 %v1226
      %1244 = vmatmul.f32.gmra.mxu0 %v1130
      %v1245 = vpop.f32.mrf.mxu0
      %v1246 = vadd.f32 %v1034, %v1245
      %1247 = vmatmul.f32.gmra.mxu0 %v1133
      %v1248 = vpop.f32.mrf.mxu0
      %v1249 = vadd.f32 %v1037, %v1248
      %1250 = vmatmul.f32.gmra.mxu0 %v1136
      %v1251 = vpop.f32.mrf.mxu0
      %v1252 = vadd.f32 %v1040, %v1251
      %1253 = vmatmul.f32.gmra.mxu0 %v1139
      %v1254 = vpop.f32.mrf.mxu0
      %v1255 = vadd.f32 %v1043, %v1254
      %1256 = vmatmul.f32.gmra.mxu0 %v1142
      %v1257 = vpop.f32.mrf.mxu0
      %v1258 = vadd.f32 %v1046, %v1257
      %1259 = vmatmul.f32.gmra.mxu0 %v1145
      %v1260 = vpop.f32.mrf.mxu0
      %v1261 = vadd.f32 %v1049, %v1260
      %1262 = vmatmul.f32.gmra.mxu0 %v1148
      %v1263 = vpop.f32.mrf.mxu0
      %v1264 = vadd.f32 %v1052, %v1263
      %1265 = vmatmul.f32.gmra.mxu0 %v1151
      %v1266 = vpop.f32.mrf.mxu0
      %v1267 = vadd.f32 %v1055, %v1266
      %1268 = vmatmul.f32.gmra.mxu0 %v1154
      %v1269 = vpop.f32.mrf.mxu0
      %v1270 = vadd.f32 %v1058, %v1269
      %1271 = vmatmul.f32.gmra.mxu0 %v1157
      %v1272 = vpop.f32.mrf.mxu0
      %v1273 = vadd.f32 %v1061, %v1272
      %1274 = vmatmul.f32.gmra.mxu0 %v1160
      %v1275 = vpop.f32.mrf.mxu0
      %v1276 = vadd.f32 %v1064, %v1275
      %1277 = vmatmul.f32.gmra.mxu0 %v1163
      %v1278 = vpop.f32.mrf.mxu0
      %v1279 = vadd.f32 %v1067, %v1278
      %1280 = vmatmul.f32.gmra.mxu0 %v1166
      %v1281 = vpop.f32.mrf.mxu0
      %v1282 = vadd.f32 %v1070, %v1281
      %1283 = vmatmul.f32.gmra.mxu0 %v1169
      %v1284 = vpop.f32.mrf.mxu0
      %v1285 = vadd.f32 %v1073, %v1284
      %1286 = vmatmul.f32.gmra.mxu0 %v1172
      %v1287 = vpop.f32.mrf.mxu0
      %v1288 = vadd.f32 %v1076, %v1287
      %1289 = vmatmul.f32.gmra.mxu0 %v1175
      %v1290 = vpop.f32.mrf.mxu0
      %v1291 = vadd.f32 %v1079, %v1290
      %1292 = vmatmul.f32.gmra.mxu0 %v1178
      %v1293 = vpop.f32.mrf.mxu0
      %v1294 = vadd.f32 %v1082, %v1293
      %1295 = vmatmul.f32.gmra.mxu0 %v1181
      %v1296 = vpop.f32.mrf.mxu0
      %v1297 = vadd.f32 %v1085, %v1296
      %1298 = vmatmul.f32.gmra.mxu0 %v1184
      %v1299 = vpop.f32.mrf.mxu0
      %v1300 = vadd.f32 %v1088, %v1299
      %1301 = vmatmul.f32.gmra.mxu0 %v1187
      %v1302 = vpop.f32.mrf.mxu0
      %v1303 = vadd.f32 %v1091, %v1302
      %1304 = vmatmul.f32.gmra.mxu0 %v1190
      %v1305 = vpop.f32.mrf.mxu0
      %v1306 = vadd.f32 %v1094, %v1305
      %1307 = vmatmul.f32.gmra.mxu0 %v1193
      %v1308 = vpop.f32.mrf.mxu0
      %v1309 = vadd.f32 %v1097, %v1308
      %1310 = vmatmul.f32.gmra.mxu0 %v1196
      %v1311 = vpop.f32.mrf.mxu0
      %v1312 = vadd.f32 %v1100, %v1311
      %1313 = vmatmul.f32.gmra.mxu0 %v1199
      %v1314 = vpop.f32.mrf.mxu0
      %v1315 = vadd.f32 %v1103, %v1314
      %1316 = vmatmul.f32.gmra.mxu0 %v1202
      %v1317 = vpop.f32.mrf.mxu0
      %v1318 = vadd.f32 %v1106, %v1317
      %1319 = vmatmul.f32.gmra.mxu0 %v1205
      %v1320 = vpop.f32.mrf.mxu0
      %v1321 = vadd.f32 %v1109, %v1320
      %1322 = vmatmul.f32.gmra.mxu0 %v1208
      %v1323 = vpop.f32.mrf.mxu0
      %v1324 = vadd.f32 %v1112, %v1323
      %1325 = vmatmul.f32.gmra.mxu0 %v1211
      %v1326 = vpop.f32.mrf.mxu0
      %v1327 = vadd.f32 %v1115, %v1326
      %1328 = vmatmul.f32.gmra.mxu0 %v1214
      %v1329 = vpop.f32.mrf.mxu0
      %v1330 = vadd.f32 %v1118, %v1329
      %1331 = vmatmul.f32.gmra.mxu0 %v1217
      %v1332 = vpop.f32.mrf.mxu0
      %v1333 = vadd.f32 %v1121, %v1332
      %1334 = vmatmul.f32.gmra.mxu0 %v1220
      %v1335 = vpop.f32.mrf.mxu0
      %v1336 = vadd.f32 %v1124, %v1335
      %1337 = vmatmul.f32.gmra.mxu0 %v1223
      %v1338 = vpop.f32.mrf.mxu0
      %v1339 = vadd.f32 %v1127, %v1338
      %1340 = vdwg.mxu0
      %v1341 = vld [vmem:[#allocation2 + $0x2] sm:$0xff]
      %v1342 = vld [vmem:[#allocation2 + $0xa] sm:$0xff]
      %v1343 = vld [vmem:[#allocation2 + $0x12] sm:$0xff]
      %v1344 = vld [vmem:[#allocation2 + $0x1a] sm:$0xff]
      %v1345 = vld [vmem:[#allocation2 + $0x22] sm:$0xff]
      %v1346 = vld [vmem:[#allocation2 + $0x2a] sm:$0xff]
      %v1347 = vld [vmem:[#allocation2 + $0x32] sm:$0xff]
      %v1348 = vld [vmem:[#allocation2 + $0x3a] sm:$0xff]
      %v1349 = vld [vmem:[#allocation2 + $0x42] sm:$0xff]
      %v1350 = vld [vmem:[#allocation2 + $0x4a] sm:$0xff]
      %v1351 = vld [vmem:[#allocation2 + $0x52] sm:$0xff]
      %v1352 = vld [vmem:[#allocation2 + $0x5a] sm:$0xff]
      %v1353 = vld [vmem:[#allocation2 + $0x62] sm:$0xff]
      %v1354 = vld [vmem:[#allocation2 + $0x6a] sm:$0xff]
      %v1355 = vld [vmem:[#allocation2 + $0x72] sm:$0xff]
      %v1356 = vld [vmem:[#allocation2 + $0x7a] sm:$0xff]
      %v1357 = vld [vmem:[#allocation2 + $0x82] sm:$0xff]
      %v1358 = vld [vmem:[#allocation2 + $0x8a] sm:$0xff]
      %v1359 = vld [vmem:[#allocation2 + $0x92] sm:$0xff]
      %v1360 = vld [vmem:[#allocation2 + $0x9a] sm:$0xff]
      %v1361 = vld [vmem:[#allocation2 + $0xa2] sm:$0xff]
      %v1362 = vld [vmem:[#allocation2 + $0xaa] sm:$0xff]
      %v1363 = vld [vmem:[#allocation2 + $0xb2] sm:$0xff]
      %v1364 = vld [vmem:[#allocation2 + $0xba] sm:$0xff]
      %v1365 = vld [vmem:[#allocation2 + $0xc2] sm:$0xff]
      %v1366 = vld [vmem:[#allocation2 + $0xca] sm:$0xff]
      %v1367 = vld [vmem:[#allocation2 + $0xd2] sm:$0xff]
      %v1368 = vld [vmem:[#allocation2 + $0xda] sm:$0xff]
      %v1369 = vld [vmem:[#allocation2 + $0xe2] sm:$0xff]
      %v1370 = vld [vmem:[#allocation2 + $0xea] sm:$0xff]
      %v1371 = vld [vmem:[#allocation2 + $0xf2] sm:$0xff]
      %v1372 = vld [vmem:[#allocation2 + $0xfa] sm:$0xff]
      %s1373 = scalar_lea.vmem %s1, 512
      %v1374 = vld [vmem:[%s1373] sm:$0xff]
      %v1375 = vld [vmem:[%s1373 + $0x8] sm:$0xff]
      %v1376 = vld [vmem:[%s1373 + $0x10] sm:$0xff]
      %v1377 = vld [vmem:[%s1373 + $0x18] sm:$0xff]
      %v1378 = vld [vmem:[%s1373 + $0x20] sm:$0xff]
      %v1379 = vld [vmem:[%s1373 + $0x28] sm:$0xff]
      %v1380 = vld [vmem:[%s1373 + $0x30] sm:$0xff]
      %v1381 = vld [vmem:[%s1373 + $0x38] sm:$0xff]
      %v1382 = vld [vmem:[%s1373 + $0x40] sm:$0xff]
      %v1383 = vld [vmem:[%s1373 + $0x48] sm:$0xff]
      %v1384 = vld [vmem:[%s1373 + $0x50] sm:$0xff]
      %v1385 = vld [vmem:[%s1373 + $0x58] sm:$0xff]
      %v1386 = vld [vmem:[%s1373 + $0x60] sm:$0xff]
      %v1387 = vld [vmem:[%s1373 + $0x68] sm:$0xff]
      %v1388 = vld [vmem:[%s1373 + $0x70] sm:$0xff]
      %v1389 = vld [vmem:[%s1373 + $0x78] sm:$0xff]
      %v1390 = vld [vmem:[%s1373 + $0x80] sm:$0xff]
      %v1391 = vld [vmem:[%s1373 + $0x88] sm:$0xff]
      %v1392 = vld [vmem:[%s1373 + $0x90] sm:$0xff]
      %v1393 = vld [vmem:[%s1373 + $0x98] sm:$0xff]
      %v1394 = vld [vmem:[%s1373 + $0xa0] sm:$0xff]
      %v1395 = vld [vmem:[%s1373 + $0xa8] sm:$0xff]
      %v1396 = vld [vmem:[%s1373 + $0xb0] sm:$0xff]
      %v1397 = vld [vmem:[%s1373 + $0xb8] sm:$0xff]
      %v1398 = vld [vmem:[%s1373 + $0xc0] sm:$0xff]
      %v1399 = vld [vmem:[%s1373 + $0xc8] sm:$0xff]
      %v1400 = vld [vmem:[%s1373 + $0xd0] sm:$0xff]
      %v1401 = vld [vmem:[%s1373 + $0xd8] sm:$0xff]
      %v1402 = vld [vmem:[%s1373 + $0xe0] sm:$0xff]
      %v1403 = vld [vmem:[%s1373 + $0xe8] sm:$0xff]
      %v1404 = vld [vmem:[%s1373 + $0xf0] sm:$0xff]
      %v1405 = vld [vmem:[%s1373 + $0xf8] sm:$0xff]
      %1407 = vset.pattern.permute.xlu0 0
      %1408 = vperm.xlu0 %1407, %v1374
      %v1409 = vpop.permute.xlu0 %1408
      %1412 = vset.pattern.permute.xlu0 0
      %1413 = vperm.xlu0 %1412, %v1375
      %v1414 = vpop.permute.xlu0 %1413
      %1417 = vset.pattern.permute.xlu0 0
      %1418 = vperm.xlu0 %1417, %v1376
      %v1419 = vpop.permute.xlu0 %1418
      %1422 = vset.pattern.permute.xlu0 0
      %1423 = vperm.xlu0 %1422, %v1377
      %v1424 = vpop.permute.xlu0 %1423
      %1427 = vset.pattern.permute.xlu0 0
      %1428 = vperm.xlu0 %1427, %v1378
      %v1429 = vpop.permute.xlu0 %1428
      %1432 = vset.pattern.permute.xlu0 0
      %1433 = vperm.xlu0 %1432, %v1379
      %v1434 = vpop.permute.xlu0 %1433
      %1437 = vset.pattern.permute.xlu0 0
      %1438 = vperm.xlu0 %1437, %v1380
      %v1439 = vpop.permute.xlu0 %1438
      %1442 = vset.pattern.permute.xlu0 0
      %1443 = vperm.xlu0 %1442, %v1381
      %v1444 = vpop.permute.xlu0 %1443
      %1447 = vset.pattern.permute.xlu0 0
      %1448 = vperm.xlu0 %1447, %v1382
      %v1449 = vpop.permute.xlu0 %1448
      %1452 = vset.pattern.permute.xlu0 0
      %1453 = vperm.xlu0 %1452, %v1383
      %v1454 = vpop.permute.xlu0 %1453
      %1457 = vset.pattern.permute.xlu0 0
      %1458 = vperm.xlu0 %1457, %v1384
      %v1459 = vpop.permute.xlu0 %1458
      %1462 = vset.pattern.permute.xlu0 0
      %1463 = vperm.xlu0 %1462, %v1385
      %v1464 = vpop.permute.xlu0 %1463
      %1467 = vset.pattern.permute.xlu0 0
      %1468 = vperm.xlu0 %1467, %v1386
      %v1469 = vpop.permute.xlu0 %1468
      %1472 = vset.pattern.permute.xlu0 0
      %1473 = vperm.xlu0 %1472, %v1387
      %v1474 = vpop.permute.xlu0 %1473
      %1477 = vset.pattern.permute.xlu0 0
      %1478 = vperm.xlu0 %1477, %v1388
      %v1479 = vpop.permute.xlu0 %1478
      %1482 = vset.pattern.permute.xlu0 0
      %1483 = vperm.xlu0 %1482, %v1389
      %v1484 = vpop.permute.xlu0 %1483
      %1487 = vset.pattern.permute.xlu0 0
      %1488 = vperm.xlu0 %1487, %v1390
      %v1489 = vpop.permute.xlu0 %1488
      %1492 = vset.pattern.permute.xlu0 0
      %1493 = vperm.xlu0 %1492, %v1391
      %v1494 = vpop.permute.xlu0 %1493
      %1497 = vset.pattern.permute.xlu0 0
      %1498 = vperm.xlu0 %1497, %v1392
      %v1499 = vpop.permute.xlu0 %1498
      %1502 = vset.pattern.permute.xlu0 0
      %1503 = vperm.xlu0 %1502, %v1393
      %v1504 = vpop.permute.xlu0 %1503
      %1507 = vset.pattern.permute.xlu0 0
      %1508 = vperm.xlu0 %1507, %v1394
      %v1509 = vpop.permute.xlu0 %1508
      %1512 = vset.pattern.permute.xlu0 0
      %1513 = vperm.xlu0 %1512, %v1395
      %v1514 = vpop.permute.xlu0 %1513
      %1517 = vset.pattern.permute.xlu0 0
      %1518 = vperm.xlu0 %1517, %v1396
      %v1519 = vpop.permute.xlu0 %1518
      %1522 = vset.pattern.permute.xlu0 0
      %1523 = vperm.xlu0 %1522, %v1397
      %v1524 = vpop.permute.xlu0 %1523
      %1527 = vset.pattern.permute.xlu0 0
      %1528 = vperm.xlu0 %1527, %v1398
      %v1529 = vpop.permute.xlu0 %1528
      %1532 = vset.pattern.permute.xlu0 0
      %1533 = vperm.xlu0 %1532, %v1399
      %v1534 = vpop.permute.xlu0 %1533
      %1537 = vset.pattern.permute.xlu0 0
      %1538 = vperm.xlu0 %1537, %v1400
      %v1539 = vpop.permute.xlu0 %1538
      %1542 = vset.pattern.permute.xlu0 0
      %1543 = vperm.xlu0 %1542, %v1401
      %v1544 = vpop.permute.xlu0 %1543
      %1547 = vset.pattern.permute.xlu0 0
      %1548 = vperm.xlu0 %1547, %v1402
      %v1549 = vpop.permute.xlu0 %1548
      %1552 = vset.pattern.permute.xlu0 0
      %1553 = vperm.xlu0 %1552, %v1403
      %v1554 = vpop.permute.xlu0 %1553
      %1557 = vset.pattern.permute.xlu0 0
      %1558 = vperm.xlu0 %1557, %v1404
      %v1559 = vpop.permute.xlu0 %1558
      %1562 = vset.pattern.permute.xlu0 0
      %1563 = vperm.xlu0 %1562, %v1405
      %v1564 = vpop.permute.xlu0 %1563
      %v1566 = vmul.f32 %v1341, %v1409
      %v1567 = vmul.f32 %v1342, %v1414
      %v1568 = vmul.f32 %v1343, %v1419
      %v1569 = vmul.f32 %v1344, %v1424
      %v1570 = vmul.f32 %v1345, %v1429
      %v1571 = vmul.f32 %v1346, %v1434
      %v1572 = vmul.f32 %v1347, %v1439
      %v1573 = vmul.f32 %v1348, %v1444
      %v1574 = vmul.f32 %v1349, %v1449
      %v1575 = vmul.f32 %v1350, %v1454
      %v1576 = vmul.f32 %v1351, %v1459
      %v1577 = vmul.f32 %v1352, %v1464
      %v1578 = vmul.f32 %v1353, %v1469
      %v1579 = vmul.f32 %v1354, %v1474
      %v1580 = vmul.f32 %v1355, %v1479
      %v1581 = vmul.f32 %v1356, %v1484
      %v1582 = vmul.f32 %v1357, %v1489
      %v1583 = vmul.f32 %v1358, %v1494
      %v1584 = vmul.f32 %v1359, %v1499
      %v1585 = vmul.f32 %v1360, %v1504
      %v1586 = vmul.f32 %v1361, %v1509
      %v1587 = vmul.f32 %v1362, %v1514
      %v1588 = vmul.f32 %v1363, %v1519
      %v1589 = vmul.f32 %v1364, %v1524
      %v1590 = vmul.f32 %v1365, %v1529
      %v1591 = vmul.f32 %v1366, %v1534
      %v1592 = vmul.f32 %v1367, %v1539
      %v1593 = vmul.f32 %v1368, %v1544
      %v1594 = vmul.f32 %v1369, %v1549
      %v1595 = vmul.f32 %v1370, %v1554
      %v1596 = vmul.f32 %v1371, %v1559
      %v1597 = vmul.f32 %v1372, %v1564
      %v1598 = vld [vmem:[%s4 + $0x8] sm:$0xf]
      %v1600 = vsel %vm586, %v1566, 0
      %v1603 = vsel %vm586, %v1567, 0
      %v1606 = vsel %vm586, %v1568, 0
      %v1609 = vsel %vm586, %v1569, 0
      %v1612 = vsel %vm586, %v1570, 0
      %v1615 = vsel %vm586, %v1571, 0
      %v1618 = vsel %vm586, %v1572, 0
      %v1621 = vsel %vm586, %v1573, 0
      %v1624 = vsel %vm586, %v1574, 0
      %v1627 = vsel %vm586, %v1575, 0
      %v1630 = vsel %vm586, %v1576, 0
      %v1633 = vsel %vm586, %v1577, 0
      %v1636 = vsel %vm586, %v1578, 0
      %v1639 = vsel %vm586, %v1579, 0
      %v1642 = vsel %vm586, %v1580, 0
      %v1645 = vsel %vm586, %v1581, 0
      %v1648 = vsel %vm586, %v1582, 0
      %v1651 = vsel %vm586, %v1583, 0
      %v1654 = vsel %vm586, %v1584, 0
      %v1657 = vsel %vm586, %v1585, 0
      %v1660 = vsel %vm586, %v1586, 0
      %v1663 = vsel %vm586, %v1587, 0
      %v1666 = vsel %vm586, %v1588, 0
      %v1669 = vsel %vm586, %v1589, 0
      %v1672 = vsel %vm586, %v1590, 0
      %v1675 = vsel %vm586, %v1591, 0
      %v1678 = vsel %vm586, %v1592, 0
      %v1681 = vsel %vm586, %v1593, 0
      %v1684 = vsel %vm586, %v1594, 0
      %v1687 = vsel %vm586, %v1595, 0
      %v1690 = vsel %vm586, %v1596, 0
      %v1693 = vsel %vm586, %v1597, 0
      %v1696 = vsel %vm1012, %v1598, 0
      %1698 = vmatpush.msra.mxu0 0.0
      %1699 = vmatpush.msra.mxu0 0.0
      %1700 = vmatpush.msra.mxu0 0.0
      %1701 = vmatpush.msra.mxu0 0.0
      %1702 = vmatpush.msra.mxu0 0.0
      %1703 = vmatpush.msra.mxu0 0.0
      %1704 = vmatpush.msra.mxu0 0.0
      %1705 = vmatpush.msra.mxu0 0.0
      %1706 = vmatpush.msra.mxu0 0.0
      %1707 = vmatpush.msra.mxu0 0.0
      %1708 = vmatpush.msra.mxu0 0.0
      %1709 = vmatpush.msra.mxu0 0.0
      %1710 = vmatpush.msra.mxu0 0.0
      %1711 = vmatpush.msra.mxu0 0.0
      %1712 = vmatpush.msra.mxu0 0.0
      %1713 = vmatpush.msra.mxu0 %v1696
      %1714 = vmatmul.f32.gmra.mxu0 %v1600
      %v1715 = vpop.f32.mrf.mxu0
      %v1716 = vadd.f32 0.0, %v1715
      %1717 = vmatmul.f32.gmra.mxu0 %v1603
      %v1718 = vpop.f32.mrf.mxu0
      %v1719 = vadd.f32 0.0, %v1718
      %1720 = vmatmul.f32.gmra.mxu0 %v1606
      %v1721 = vpop.f32.mrf.mxu0
      %v1722 = vadd.f32 0.0, %v1721
      %1723 = vmatmul.f32.gmra.mxu0 %v1609
      %v1724 = vpop.f32.mrf.mxu0
      %v1725 = vadd.f32 0.0, %v1724
      %1726 = vmatmul.f32.gmra.mxu0 %v1612
      %v1727 = vpop.f32.mrf.mxu0
      %v1728 = vadd.f32 0.0, %v1727
      %1729 = vmatmul.f32.gmra.mxu0 %v1615
      %v1730 = vpop.f32.mrf.mxu0
      %v1731 = vadd.f32 0.0, %v1730
      %1732 = vmatmul.f32.gmra.mxu0 %v1618
      %v1733 = vpop.f32.mrf.mxu0
      %v1734 = vadd.f32 0.0, %v1733
      %1735 = vmatmul.f32.gmra.mxu0 %v1621
      %v1736 = vpop.f32.mrf.mxu0
      %v1737 = vadd.f32 0.0, %v1736
      %1738 = vmatmul.f32.gmra.mxu0 %v1624
      %v1739 = vpop.f32.mrf.mxu0
      %v1740 = vadd.f32 0.0, %v1739
      %1741 = vmatmul.f32.gmra.mxu0 %v1627
      %v1742 = vpop.f32.mrf.mxu0
      %v1743 = vadd.f32 0.0, %v1742
      %1744 = vmatmul.f32.gmra.mxu0 %v1630
      %v1745 = vpop.f32.mrf.mxu0
      %v1746 = vadd.f32 0.0, %v1745
      %1747 = vmatmul.f32.gmra.mxu0 %v1633
      %v1748 = vpop.f32.mrf.mxu0
      %v1749 = vadd.f32 0.0, %v1748
      %1750 = vmatmul.f32.gmra.mxu0 %v1636
      %v1751 = vpop.f32.mrf.mxu0
      %v1752 = vadd.f32 0.0, %v1751
      %1753 = vmatmul.f32.gmra.mxu0 %v1639
      %v1754 = vpop.f32.mrf.mxu0
      %v1755 = vadd.f32 0.0, %v1754
      %1756 = vmatmul.f32.gmra.mxu0 %v1642
      %v1757 = vpop.f32.mrf.mxu0
      %v1758 = vadd.f32 0.0, %v1757
      %1759 = vmatmul.f32.gmra.mxu0 %v1645
      %v1760 = vpop.f32.mrf.mxu0
      %v1761 = vadd.f32 0.0, %v1760
      %1762 = vmatmul.f32.gmra.mxu0 %v1648
      %v1763 = vpop.f32.mrf.mxu0
      %v1764 = vadd.f32 0.0, %v1763
      %1765 = vmatmul.f32.gmra.mxu0 %v1651
      %v1766 = vpop.f32.mrf.mxu0
      %v1767 = vadd.f32 0.0, %v1766
      %1768 = vmatmul.f32.gmra.mxu0 %v1654
      %v1769 = vpop.f32.mrf.mxu0
      %v1770 = vadd.f32 0.0, %v1769
      %1771 = vmatmul.f32.gmra.mxu0 %v1657
      %v1772 = vpop.f32.mrf.mxu0
      %v1773 = vadd.f32 0.0, %v1772
      %1774 = vmatmul.f32.gmra.mxu0 %v1660
      %v1775 = vpop.f32.mrf.mxu0
      %v1776 = vadd.f32 0.0, %v1775
      %1777 = vmatmul.f32.gmra.mxu0 %v1663
      %v1778 = vpop.f32.mrf.mxu0
      %v1779 = vadd.f32 0.0, %v1778
      %1780 = vmatmul.f32.gmra.mxu0 %v1666
      %v1781 = vpop.f32.mrf.mxu0
      %v1782 = vadd.f32 0.0, %v1781
      %1783 = vmatmul.f32.gmra.mxu0 %v1669
      %v1784 = vpop.f32.mrf.mxu0
      %v1785 = vadd.f32 0.0, %v1784
      %1786 = vmatmul.f32.gmra.mxu0 %v1672
      %v1787 = vpop.f32.mrf.mxu0
      %v1788 = vadd.f32 0.0, %v1787
      %1789 = vmatmul.f32.gmra.mxu0 %v1675
      %v1790 = vpop.f32.mrf.mxu0
      %v1791 = vadd.f32 0.0, %v1790
      %1792 = vmatmul.f32.gmra.mxu0 %v1678
      %v1793 = vpop.f32.mrf.mxu0
      %v1794 = vadd.f32 0.0, %v1793
      %1795 = vmatmul.f32.gmra.mxu0 %v1681
      %v1796 = vpop.f32.mrf.mxu0
      %v1797 = vadd.f32 0.0, %v1796
      %1798 = vmatmul.f32.gmra.mxu0 %v1684
      %v1799 = vpop.f32.mrf.mxu0
      %v1800 = vadd.f32 0.0, %v1799
      %1801 = vmatmul.f32.gmra.mxu0 %v1687
      %v1802 = vpop.f32.mrf.mxu0
      %v1803 = vadd.f32 0.0, %v1802
      %1804 = vmatmul.f32.gmra.mxu0 %v1690
      %v1805 = vpop.f32.mrf.mxu0
      %v1806 = vadd.f32 0.0, %v1805
      %1807 = vmatmul.f32.gmra.mxu0 %v1693
      %v1808 = vpop.f32.mrf.mxu0
      %v1809 = vadd.f32 0.0, %v1808
      %1810 = vdwg.mxu0
      %v1811 = vadd.f32 %v1246, %v1716
      %v1812 = vadd.f32 %v1249, %v1719
      %v1813 = vadd.f32 %v1252, %v1722
      %v1814 = vadd.f32 %v1255, %v1725
      %v1815 = vadd.f32 %v1258, %v1728
      %v1816 = vadd.f32 %v1261, %v1731
      %v1817 = vadd.f32 %v1264, %v1734
      %v1818 = vadd.f32 %v1267, %v1737
      %v1819 = vadd.f32 %v1270, %v1740
      %v1820 = vadd.f32 %v1273, %v1743
      %v1821 = vadd.f32 %v1276, %v1746
      %v1822 = vadd.f32 %v1279, %v1749
      %v1823 = vadd.f32 %v1282, %v1752
      %v1824 = vadd.f32 %v1285, %v1755
      %v1825 = vadd.f32 %v1288, %v1758
      %v1826 = vadd.f32 %v1291, %v1761
      %v1827 = vadd.f32 %v1294, %v1764
      %v1828 = vadd.f32 %v1297, %v1767
      %v1829 = vadd.f32 %v1300, %v1770
      %v1830 = vadd.f32 %v1303, %v1773
      %v1831 = vadd.f32 %v1306, %v1776
      %v1832 = vadd.f32 %v1309, %v1779
      %v1833 = vadd.f32 %v1312, %v1782
      %v1834 = vadd.f32 %v1315, %v1785
      %v1835 = vadd.f32 %v1318, %v1788
      %v1836 = vadd.f32 %v1321, %v1791
      %v1837 = vadd.f32 %v1324, %v1794
      %v1838 = vadd.f32 %v1327, %v1797
      %v1839 = vadd.f32 %v1330, %v1800
      %v1840 = vadd.f32 %v1333, %v1803
      %v1841 = vadd.f32 %v1336, %v1806
      %v1842 = vadd.f32 %v1339, %v1809
      %v1843 = vld [vmem:[#allocation2 + $0x10] sm:$0xff]
      %v1844 = vld [vmem:[#allocation2 + $0x18] sm:$0xff]
      %v1845 = vld [vmem:[#allocation2 + $0x20] sm:$0xff]
      %v1846 = vld [vmem:[#allocation2 + $0x28] sm:$0xff]
      %v1847 = vld [vmem:[#allocation2 + $0x30] sm:$0xff]
      %v1848 = vld [vmem:[#allocation2 + $0x38] sm:$0xff]
      %v1849 = vld [vmem:[#allocation2 + $0x40] sm:$0xff]
      %v1850 = vld [vmem:[#allocation2 + $0x48] sm:$0xff]
      %v1851 = vld [vmem:[#allocation2 + $0x50] sm:$0xff]
      %v1852 = vld [vmem:[#allocation2 + $0x58] sm:$0xff]
      %v1853 = vld [vmem:[#allocation2 + $0x60] sm:$0xff]
      %v1854 = vld [vmem:[#allocation2 + $0x68] sm:$0xff]
      %v1855 = vld [vmem:[#allocation2 + $0x70] sm:$0xff]
      %v1856 = vld [vmem:[#allocation2 + $0x78] sm:$0xff]
      %v1857 = vld [vmem:[#allocation2 + $0x80] sm:$0xff]
      %v1858 = vld [vmem:[#allocation2 + $0x88] sm:$0xff]
      %v1859 = vld [vmem:[#allocation2 + $0x90] sm:$0xff]
      %v1860 = vld [vmem:[#allocation2 + $0x98] sm:$0xff]
      %v1861 = vld [vmem:[#allocation2 + $0xa0] sm:$0xff]
      %v1862 = vld [vmem:[#allocation2 + $0xa8] sm:$0xff]
      %v1863 = vld [vmem:[#allocation2 + $0xb0] sm:$0xff]
      %v1864 = vld [vmem:[#allocation2 + $0xb8] sm:$0xff]
      %v1865 = vld [vmem:[#allocation2 + $0xc0] sm:$0xff]
      %v1866 = vld [vmem:[#allocation2 + $0xc8] sm:$0xff]
      %v1867 = vld [vmem:[#allocation2 + $0xd0] sm:$0xff]
      %v1868 = vld [vmem:[#allocation2 + $0xd8] sm:$0xff]
      %v1869 = vld [vmem:[#allocation2 + $0xe0] sm:$0xff]
      %v1870 = vld [vmem:[#allocation2 + $0xe8] sm:$0xff]
      %v1871 = vld [vmem:[#allocation2 + $0xf0] sm:$0xff]
      %v1872 = vld [vmem:[#allocation2 + $0xf8] sm:$0xff]
      %v1873 = vld [vmem:[#allocation2 + $0x100] sm:$0xff]
      %v1874 = vld [vmem:[#allocation2 + $0x108] sm:$0xff]
      %v1875 = vmul.f32 %v1843, %v693
      %v1876 = vmul.f32 %v1844, %v698
      %v1877 = vmul.f32 %v1845, %v703
      %v1878 = vmul.f32 %v1846, %v708
      %v1879 = vmul.f32 %v1847, %v713
      %v1880 = vmul.f32 %v1848, %v718
      %v1881 = vmul.f32 %v1849, %v723
      %v1882 = vmul.f32 %v1850, %v728
      %v1883 = vmul.f32 %v1851, %v733
      %v1884 = vmul.f32 %v1852, %v738
      %v1885 = vmul.f32 %v1853, %v743
      %v1886 = vmul.f32 %v1854, %v748
      %v1887 = vmul.f32 %v1855, %v753
      %v1888 = vmul.f32 %v1856, %v758
      %v1889 = vmul.f32 %v1857, %v763
      %v1890 = vmul.f32 %v1858, %v768
      %v1891 = vmul.f32 %v1859, %v773
      %v1892 = vmul.f32 %v1860, %v778
      %v1893 = vmul.f32 %v1861, %v783
      %v1894 = vmul.f32 %v1862, %v788
      %v1895 = vmul.f32 %v1863, %v793
      %v1896 = vmul.f32 %v1864, %v798
      %v1897 = vmul.f32 %v1865, %v803
      %v1898 = vmul.f32 %v1866, %v808
      %v1899 = vmul.f32 %v1867, %v813
      %v1900 = vmul.f32 %v1868, %v818
      %v1901 = vmul.f32 %v1869, %v823
      %v1902 = vmul.f32 %v1870, %v828
      %v1903 = vmul.f32 %v1871, %v833
      %v1904 = vmul.f32 %v1872, %v838
      %v1905 = vmul.f32 %v1873, %v843
      %v1906 = vmul.f32 %v1874, %v848
      %v1907 = vld [vmem:[%s4 + $0xc] sm:$0xf]
      %v1909 = vsel %vm586, %v1875, 0
      %v1912 = vsel %vm586, %v1876, 0
      %v1915 = vsel %vm586, %v1877, 0
      %v1918 = vsel %vm586, %v1878, 0
      %v1921 = vsel %vm586, %v1879, 0
      %v1924 = vsel %vm586, %v1880, 0
      %v1927 = vsel %vm586, %v1881, 0
      %v1930 = vsel %vm586, %v1882, 0
      %v1933 = vsel %vm586, %v1883, 0
      %v1936 = vsel %vm586, %v1884, 0
      %v1939 = vsel %vm586, %v1885, 0
      %v1942 = vsel %vm586, %v1886, 0
      %v1945 = vsel %vm586, %v1887, 0
      %v1948 = vsel %vm586, %v1888, 0
      %v1951 = vsel %vm586, %v1889, 0
      %v1954 = vsel %vm586, %v1890, 0
      %v1957 = vsel %vm586, %v1891, 0
      %v1960 = vsel %vm586, %v1892, 0
      %v1963 = vsel %vm586, %v1893, 0
      %v1966 = vsel %vm586, %v1894, 0
      %v1969 = vsel %vm586, %v1895, 0
      %v1972 = vsel %vm586, %v1896, 0
      %v1975 = vsel %vm586, %v1897, 0
      %v1978 = vsel %vm586, %v1898, 0
      %v1981 = vsel %vm586, %v1899, 0
      %v1984 = vsel %vm586, %v1900, 0
      %v1987 = vsel %vm586, %v1901, 0
      %v1990 = vsel %vm586, %v1902, 0
      %v1993 = vsel %vm586, %v1903, 0
      %v1996 = vsel %vm586, %v1904, 0
      %v1999 = vsel %vm586, %v1905, 0
      %v2002 = vsel %vm586, %v1906, 0
      %v2005 = vsel %vm1012, %v1907, 0
      %2007 = vmatpush.msra.mxu0 0.0
      %2008 = vmatpush.msra.mxu0 0.0
      %2009 = vmatpush.msra.mxu0 0.0
      %2010 = vmatpush.msra.mxu0 0.0
      %2011 = vmatpush.msra.mxu0 0.0
      %2012 = vmatpush.msra.mxu0 0.0
      %2013 = vmatpush.msra.mxu0 0.0
      %2014 = vmatpush.msra.mxu0 0.0
      %2015 = vmatpush.msra.mxu0 0.0
      %2016 = vmatpush.msra.mxu0 0.0
      %2017 = vmatpush.msra.mxu0 0.0
      %2018 = vmatpush.msra.mxu0 0.0
      %2019 = vmatpush.msra.mxu0 0.0
      %2020 = vmatpush.msra.mxu0 0.0
      %2021 = vmatpush.msra.mxu0 0.0
      %2022 = vmatpush.msra.mxu0 %v2005
      %2023 = vmatmul.f32.gmra.mxu0 %v1909
      %v2024 = vpop.f32.mrf.mxu0
      %v2025 = vadd.f32 0.0, %v2024
      %2026 = vmatmul.f32.gmra.mxu0 %v1912
      %v2027 = vpop.f32.mrf.mxu0
      %v2028 = vadd.f32 0.0, %v2027
      %2029 = vmatmul.f32.gmra.mxu0 %v1915
      %v2030 = vpop.f32.mrf.mxu0
      %v2031 = vadd.f32 0.0, %v2030
      %2032 = vmatmul.f32.gmra.mxu0 %v1918
      %v2033 = vpop.f32.mrf.mxu0
      %v2034 = vadd.f32 0.0, %v2033
      %2035 = vmatmul.f32.gmra.mxu0 %v1921
      %v2036 = vpop.f32.mrf.mxu0
      %v2037 = vadd.f32 0.0, %v2036
      %2038 = vmatmul.f32.gmra.mxu0 %v1924
      %v2039 = vpop.f32.mrf.mxu0
      %v2040 = vadd.f32 0.0, %v2039
      %2041 = vmatmul.f32.gmra.mxu0 %v1927
      %v2042 = vpop.f32.mrf.mxu0
      %v2043 = vadd.f32 0.0, %v2042
      %2044 = vmatmul.f32.gmra.mxu0 %v1930
      %v2045 = vpop.f32.mrf.mxu0
      %v2046 = vadd.f32 0.0, %v2045
      %2047 = vmatmul.f32.gmra.mxu0 %v1933
      %v2048 = vpop.f32.mrf.mxu0
      %v2049 = vadd.f32 0.0, %v2048
      %2050 = vmatmul.f32.gmra.mxu0 %v1936
      %v2051 = vpop.f32.mrf.mxu0
      %v2052 = vadd.f32 0.0, %v2051
      %2053 = vmatmul.f32.gmra.mxu0 %v1939
      %v2054 = vpop.f32.mrf.mxu0
      %v2055 = vadd.f32 0.0, %v2054
      %2056 = vmatmul.f32.gmra.mxu0 %v1942
      %v2057 = vpop.f32.mrf.mxu0
      %v2058 = vadd.f32 0.0, %v2057
      %2059 = vmatmul.f32.gmra.mxu0 %v1945
      %v2060 = vpop.f32.mrf.mxu0
      %v2061 = vadd.f32 0.0, %v2060
      %2062 = vmatmul.f32.gmra.mxu0 %v1948
      %v2063 = vpop.f32.mrf.mxu0
      %v2064 = vadd.f32 0.0, %v2063
      %2065 = vmatmul.f32.gmra.mxu0 %v1951
      %v2066 = vpop.f32.mrf.mxu0
      %v2067 = vadd.f32 0.0, %v2066
      %2068 = vmatmul.f32.gmra.mxu0 %v1954
      %v2069 = vpop.f32.mrf.mxu0
      %v2070 = vadd.f32 0.0, %v2069
      %2071 = vmatmul.f32.gmra.mxu0 %v1957
      %v2072 = vpop.f32.mrf.mxu0
      %v2073 = vadd.f32 0.0, %v2072
      %2074 = vmatmul.f32.gmra.mxu0 %v1960
      %v2075 = vpop.f32.mrf.mxu0
      %v2076 = vadd.f32 0.0, %v2075
      %2077 = vmatmul.f32.gmra.mxu0 %v1963
      %v2078 = vpop.f32.mrf.mxu0
      %v2079 = vadd.f32 0.0, %v2078
      %2080 = vmatmul.f32.gmra.mxu0 %v1966
      %v2081 = vpop.f32.mrf.mxu0
      %v2082 = vadd.f32 0.0, %v2081
      %2083 = vmatmul.f32.gmra.mxu0 %v1969
      %v2084 = vpop.f32.mrf.mxu0
      %v2085 = vadd.f32 0.0, %v2084
      %2086 = vmatmul.f32.gmra.mxu0 %v1972
      %v2087 = vpop.f32.mrf.mxu0
      %v2088 = vadd.f32 0.0, %v2087
      %2089 = vmatmul.f32.gmra.mxu0 %v1975
      %v2090 = vpop.f32.mrf.mxu0
      %v2091 = vadd.f32 0.0, %v2090
      %2092 = vmatmul.f32.gmra.mxu0 %v1978
      %v2093 = vpop.f32.mrf.mxu0
      %v2094 = vadd.f32 0.0, %v2093
      %2095 = vmatmul.f32.gmra.mxu0 %v1981
      %v2096 = vpop.f32.mrf.mxu0
      %v2097 = vadd.f32 0.0, %v2096
      %2098 = vmatmul.f32.gmra.mxu0 %v1984
      %v2099 = vpop.f32.mrf.mxu0
      %v2100 = vadd.f32 0.0, %v2099
      %2101 = vmatmul.f32.gmra.mxu0 %v1987
      %v2102 = vpop.f32.mrf.mxu0
      %v2103 = vadd.f32 0.0, %v2102
      %2104 = vmatmul.f32.gmra.mxu0 %v1990
      %v2105 = vpop.f32.mrf.mxu0
      %v2106 = vadd.f32 0.0, %v2105
      %2107 = vmatmul.f32.gmra.mxu0 %v1993
      %v2108 = vpop.f32.mrf.mxu0
      %v2109 = vadd.f32 0.0, %v2108
      %2110 = vmatmul.f32.gmra.mxu0 %v1996
      %v2111 = vpop.f32.mrf.mxu0
      %v2112 = vadd.f32 0.0, %v2111
      %2113 = vmatmul.f32.gmra.mxu0 %v1999
      %v2114 = vpop.f32.mrf.mxu0
      %v2115 = vadd.f32 0.0, %v2114
      %2116 = vmatmul.f32.gmra.mxu0 %v2002
      %v2117 = vpop.f32.mrf.mxu0
      %v2118 = vadd.f32 0.0, %v2117
      %2119 = vdwg.mxu0
      %v2120 = vadd.f32 %v1811, %v2025
      %v2121 = vadd.f32 %v1812, %v2028
      %v2122 = vadd.f32 %v1813, %v2031
      %v2123 = vadd.f32 %v1814, %v2034
      %v2124 = vadd.f32 %v1815, %v2037
      %v2125 = vadd.f32 %v1816, %v2040
      %v2126 = vadd.f32 %v1817, %v2043
      %v2127 = vadd.f32 %v1818, %v2046
      %v2128 = vadd.f32 %v1819, %v2049
      %v2129 = vadd.f32 %v1820, %v2052
      %v2130 = vadd.f32 %v1821, %v2055
      %v2131 = vadd.f32 %v1822, %v2058
      %v2132 = vadd.f32 %v1823, %v2061
      %v2133 = vadd.f32 %v1824, %v2064
      %v2134 = vadd.f32 %v1825, %v2067
      %v2135 = vadd.f32 %v1826, %v2070
      %v2136 = vadd.f32 %v1827, %v2073
      %v2137 = vadd.f32 %v1828, %v2076
      %v2138 = vadd.f32 %v1829, %v2079
      %v2139 = vadd.f32 %v1830, %v2082
      %v2140 = vadd.f32 %v1831, %v2085
      %v2141 = vadd.f32 %v1832, %v2088
      %v2142 = vadd.f32 %v1833, %v2091
      %v2143 = vadd.f32 %v1834, %v2094
      %v2144 = vadd.f32 %v1835, %v2097
      %v2145 = vadd.f32 %v1836, %v2100
      %v2146 = vadd.f32 %v1837, %v2103
      %v2147 = vadd.f32 %v1838, %v2106
      %v2148 = vadd.f32 %v1839, %v2109
      %v2149 = vadd.f32 %v1840, %v2112
      %v2150 = vadd.f32 %v1841, %v2115
      %v2151 = vadd.f32 %v1842, %v2118
      %v2152 = vld [vmem:[%s4 + $0x10] sm:$0xf]
      %v2154 = vsel %vm586, %v554, 0
      %v2157 = vsel %vm586, %v555, 0
      %v2160 = vsel %vm586, %v556, 0
      %v2163 = vsel %vm586, %v557, 0
      %v2166 = vsel %vm586, %v558, 0
      %v2169 = vsel %vm586, %v559, 0
      %v2172 = vsel %vm586, %v560, 0
      %v2175 = vsel %vm586, %v561, 0
      %v2178 = vsel %vm586, %v562, 0
      %v2181 = vsel %vm586, %v563, 0
      %v2184 = vsel %vm586, %v564, 0
      %v2187 = vsel %vm586, %v565, 0
      %v2190 = vsel %vm586, %v566, 0
      %v2193 = vsel %vm586, %v567, 0
      %v2196 = vsel %vm586, %v568, 0
      %v2199 = vsel %vm586, %v569, 0
      %v2202 = vsel %vm586, %v570, 0
      %v2205 = vsel %vm586, %v571, 0
      %v2208 = vsel %vm586, %v572, 0
      %v2211 = vsel %vm586, %v573, 0
      %v2214 = vsel %vm586, %v574, 0
      %v2217 = vsel %vm586, %v575, 0
      %v2220 = vsel %vm586, %v576, 0
      %v2223 = vsel %vm586, %v577, 0
      %v2226 = vsel %vm586, %v578, 0
      %v2229 = vsel %vm586, %v579, 0
      %v2232 = vsel %vm586, %v580, 0
      %v2235 = vsel %vm586, %v581, 0
      %v2238 = vsel %vm586, %v582, 0
      %v2241 = vsel %vm586, %v583, 0
      %v2244 = vsel %vm586, %v584, 0
      %v2247 = vsel %vm586, %v585, 0
      %v2250 = vsel %vm1012, %v2152, 0
      %2252 = vmatpush.msra.mxu0 0.0
      %2253 = vmatpush.msra.mxu0 0.0
      %2254 = vmatpush.msra.mxu0 0.0
      %2255 = vmatpush.msra.mxu0 0.0
      %2256 = vmatpush.msra.mxu0 0.0
      %2257 = vmatpush.msra.mxu0 0.0
      %2258 = vmatpush.msra.mxu0 0.0
      %2259 = vmatpush.msra.mxu0 0.0
      %2260 = vmatpush.msra.mxu0 0.0
      %2261 = vmatpush.msra.mxu0 0.0
      %2262 = vmatpush.msra.mxu0 0.0
      %2263 = vmatpush.msra.mxu0 0.0
      %2264 = vmatpush.msra.mxu0 0.0
      %2265 = vmatpush.msra.mxu0 0.0
      %2266 = vmatpush.msra.mxu0 0.0
      %2267 = vmatpush.msra.mxu0 %v2250
      %2268 = vmatmul.f32.gmra.mxu0 %v2154
      %v2269 = vpop.f32.mrf.mxu0
      %v2270 = vadd.f32 0.0, %v2269
      %2271 = vmatmul.f32.gmra.mxu0 %v2157
      %v2272 = vpop.f32.mrf.mxu0
      %v2273 = vadd.f32 0.0, %v2272
      %2274 = vmatmul.f32.gmra.mxu0 %v2160
      %v2275 = vpop.f32.mrf.mxu0
      %v2276 = vadd.f32 0.0, %v2275
      %2277 = vmatmul.f32.gmra.mxu0 %v2163
      %v2278 = vpop.f32.mrf.mxu0
      %v2279 = vadd.f32 0.0, %v2278
      %2280 = vmatmul.f32.gmra.mxu0 %v2166
      %v2281 = vpop.f32.mrf.mxu0
      %v2282 = vadd.f32 0.0, %v2281
      %2283 = vmatmul.f32.gmra.mxu0 %v2169
      %v2284 = vpop.f32.mrf.mxu0
      %v2285 = vadd.f32 0.0, %v2284
      %2286 = vmatmul.f32.gmra.mxu0 %v2172
      %v2287 = vpop.f32.mrf.mxu0
      %v2288 = vadd.f32 0.0, %v2287
      %2289 = vmatmul.f32.gmra.mxu0 %v2175
      %v2290 = vpop.f32.mrf.mxu0
      %v2291 = vadd.f32 0.0, %v2290
      %2292 = vmatmul.f32.gmra.mxu0 %v2178
      %v2293 = vpop.f32.mrf.mxu0
      %v2294 = vadd.f32 0.0, %v2293
      %2295 = vmatmul.f32.gmra.mxu0 %v2181
      %v2296 = vpop.f32.mrf.mxu0
      %v2297 = vadd.f32 0.0, %v2296
      %2298 = vmatmul.f32.gmra.mxu0 %v2184
      %v2299 = vpop.f32.mrf.mxu0
      %v2300 = vadd.f32 0.0, %v2299
      %2301 = vmatmul.f32.gmra.mxu0 %v2187
      %v2302 = vpop.f32.mrf.mxu0
      %v2303 = vadd.f32 0.0, %v2302
      %2304 = vmatmul.f32.gmra.mxu0 %v2190
      %v2305 = vpop.f32.mrf.mxu0
      %v2306 = vadd.f32 0.0, %v2305
      %2307 = vmatmul.f32.gmra.mxu0 %v2193
      %v2308 = vpop.f32.mrf.mxu0
      %v2309 = vadd.f32 0.0, %v2308
      %2310 = vmatmul.f32.gmra.mxu0 %v2196
      %v2311 = vpop.f32.mrf.mxu0
      %v2312 = vadd.f32 0.0, %v2311
      %2313 = vmatmul.f32.gmra.mxu0 %v2199
      %v2314 = vpop.f32.mrf.mxu0
      %v2315 = vadd.f32 0.0, %v2314
      %2316 = vmatmul.f32.gmra.mxu0 %v2202
      %v2317 = vpop.f32.mrf.mxu0
      %v2318 = vadd.f32 0.0, %v2317
      %2319 = vmatmul.f32.gmra.mxu0 %v2205
      %v2320 = vpop.f32.mrf.mxu0
      %v2321 = vadd.f32 0.0, %v2320
      %2322 = vmatmul.f32.gmra.mxu0 %v2208
      %v2323 = vpop.f32.mrf.mxu0
      %v2324 = vadd.f32 0.0, %v2323
      %2325 = vmatmul.f32.gmra.mxu0 %v2211
      %v2326 = vpop.f32.mrf.mxu0
      %v2327 = vadd.f32 0.0, %v2326
      %2328 = vmatmul.f32.gmra.mxu0 %v2214
      %v2329 = vpop.f32.mrf.mxu0
      %v2330 = vadd.f32 0.0, %v2329
      %2331 = vmatmul.f32.gmra.mxu0 %v2217
      %v2332 = vpop.f32.mrf.mxu0
      %v2333 = vadd.f32 0.0, %v2332
      %2334 = vmatmul.f32.gmra.mxu0 %v2220
      %v2335 = vpop.f32.mrf.mxu0
      %v2336 = vadd.f32 0.0, %v2335
      %2337 = vmatmul.f32.gmra.mxu0 %v2223
      %v2338 = vpop.f32.mrf.mxu0
      %v2339 = vadd.f32 0.0, %v2338
      %2340 = vmatmul.f32.gmra.mxu0 %v2226
      %v2341 = vpop.f32.mrf.mxu0
      %v2342 = vadd.f32 0.0, %v2341
      %2343 = vmatmul.f32.gmra.mxu0 %v2229
      %v2344 = vpop.f32.mrf.mxu0
      %v2345 = vadd.f32 0.0, %v2344
      %2346 = vmatmul.f32.gmra.mxu0 %v2232
      %v2347 = vpop.f32.mrf.mxu0
      %v2348 = vadd.f32 0.0, %v2347
      %2349 = vmatmul.f32.gmra.mxu0 %v2235
      %v2350 = vpop.f32.mrf.mxu0
      %v2351 = vadd.f32 0.0, %v2350
      %2352 = vmatmul.f32.gmra.mxu0 %v2238
      %v2353 = vpop.f32.mrf.mxu0
      %v2354 = vadd.f32 0.0, %v2353
      %2355 = vmatmul.f32.gmra.mxu0 %v2241
      %v2356 = vpop.f32.mrf.mxu0
      %v2357 = vadd.f32 0.0, %v2356
      %2358 = vmatmul.f32.gmra.mxu0 %v2244
      %v2359 = vpop.f32.mrf.mxu0
      %v2360 = vadd.f32 0.0, %v2359
      %2361 = vmatmul.f32.gmra.mxu0 %v2247
      %v2362 = vpop.f32.mrf.mxu0
      %v2363 = vadd.f32 0.0, %v2362
      %2364 = vdwg.mxu0
      %v2365 = vadd.f32 %v2120, %v2270
      %v2366 = vadd.f32 %v2121, %v2273
      %v2367 = vadd.f32 %v2122, %v2276
      %v2368 = vadd.f32 %v2123, %v2279
      %v2369 = vadd.f32 %v2124, %v2282
      %v2370 = vadd.f32 %v2125, %v2285
      %v2371 = vadd.f32 %v2126, %v2288
      %v2372 = vadd.f32 %v2127, %v2291
      %v2373 = vadd.f32 %v2128, %v2294
      %v2374 = vadd.f32 %v2129, %v2297
      %v2375 = vadd.f32 %v2130, %v2300
      %v2376 = vadd.f32 %v2131, %v2303
      %v2377 = vadd.f32 %v2132, %v2306
      %v2378 = vadd.f32 %v2133, %v2309
      %v2379 = vadd.f32 %v2134, %v2312
      %v2380 = vadd.f32 %v2135, %v2315
      %v2381 = vadd.f32 %v2136, %v2318
      %v2382 = vadd.f32 %v2137, %v2321
      %v2383 = vadd.f32 %v2138, %v2324
      %v2384 = vadd.f32 %v2139, %v2327
      %v2385 = vadd.f32 %v2140, %v2330
      %v2386 = vadd.f32 %v2141, %v2333
      %v2387 = vadd.f32 %v2142, %v2336
      %v2388 = vadd.f32 %v2143, %v2339
      %v2389 = vadd.f32 %v2144, %v2342
      %v2390 = vadd.f32 %v2145, %v2345
      %v2391 = vadd.f32 %v2146, %v2348
      %v2392 = vadd.f32 %v2147, %v2351
      %v2393 = vadd.f32 %v2148, %v2354
      %v2394 = vadd.f32 %v2149, %v2357
      %v2395 = vadd.f32 %v2150, %v2360
      %v2396 = vadd.f32 %v2151, %v2363
      %v2397 = vld [vmem:[#allocation2 + $0x12] sm:$0xff]
      %v2398 = vld [vmem:[#allocation2 + $0x1a] sm:$0xff]
      %v2399 = vld [vmem:[#allocation2 + $0x22] sm:$0xff]
      %v2400 = vld [vmem:[#allocation2 + $0x2a] sm:$0xff]
      %v2401 = vld [vmem:[#allocation2 + $0x32] sm:$0xff]
      %v2402 = vld [vmem:[#allocation2 + $0x3a] sm:$0xff]
      %v2403 = vld [vmem:[#allocation2 + $0x42] sm:$0xff]
      %v2404 = vld [vmem:[#allocation2 + $0x4a] sm:$0xff]
      %v2405 = vld [vmem:[#allocation2 + $0x52] sm:$0xff]
      %v2406 = vld [vmem:[#allocation2 + $0x5a] sm:$0xff]
      %v2407 = vld [vmem:[#allocation2 + $0x62] sm:$0xff]
      %v2408 = vld [vmem:[#allocation2 + $0x6a] sm:$0xff]
      %v2409 = vld [vmem:[#allocation2 + $0x72] sm:$0xff]
      %v2410 = vld [vmem:[#allocation2 + $0x7a] sm:$0xff]
      %v2411 = vld [vmem:[#allocation2 + $0x82] sm:$0xff]
      %v2412 = vld [vmem:[#allocation2 + $0x8a] sm:$0xff]
      %v2413 = vld [vmem:[#allocation2 + $0x92] sm:$0xff]
      %v2414 = vld [vmem:[#allocation2 + $0x9a] sm:$0xff]
      %v2415 = vld [vmem:[#allocation2 + $0xa2] sm:$0xff]
      %v2416 = vld [vmem:[#allocation2 + $0xaa] sm:$0xff]
      %v2417 = vld [vmem:[#allocation2 + $0xb2] sm:$0xff]
      %v2418 = vld [vmem:[#allocation2 + $0xba] sm:$0xff]
      %v2419 = vld [vmem:[#allocation2 + $0xc2] sm:$0xff]
      %v2420 = vld [vmem:[#allocation2 + $0xca] sm:$0xff]
      %v2421 = vld [vmem:[#allocation2 + $0xd2] sm:$0xff]
      %v2422 = vld [vmem:[#allocation2 + $0xda] sm:$0xff]
      %v2423 = vld [vmem:[#allocation2 + $0xe2] sm:$0xff]
      %v2424 = vld [vmem:[#allocation2 + $0xea] sm:$0xff]
      %v2425 = vld [vmem:[#allocation2 + $0xf2] sm:$0xff]
      %v2426 = vld [vmem:[#allocation2 + $0xfa] sm:$0xff]
      %v2427 = vld [vmem:[#allocation2 + $0x102] sm:$0xff]
      %v2428 = vld [vmem:[#allocation2 + $0x10a] sm:$0xff]
      %v2429 = vmul.f32 %v2397, %v1409
      %v2430 = vmul.f32 %v2398, %v1414
      %v2431 = vmul.f32 %v2399, %v1419
      %v2432 = vmul.f32 %v2400, %v1424
      %v2433 = vmul.f32 %v2401, %v1429
      %v2434 = vmul.f32 %v2402, %v1434
      %v2435 = vmul.f32 %v2403, %v1439
      %v2436 = vmul.f32 %v2404, %v1444
      %v2437 = vmul.f32 %v2405, %v1449
      %v2438 = vmul.f32 %v2406, %v1454
      %v2439 = vmul.f32 %v2407, %v1459
      %v2440 = vmul.f32 %v2408, %v1464
      %v2441 = vmul.f32 %v2409, %v1469
      %v2442 = vmul.f32 %v2410, %v1474
      %v2443 = vmul.f32 %v2411, %v1479
      %v2444 = vmul.f32 %v2412, %v1484
      %v2445 = vmul.f32 %v2413, %v1489
      %v2446 = vmul.f32 %v2414, %v1494
      %v2447 = vmul.f32 %v2415, %v1499
      %v2448 = vmul.f32 %v2416, %v1504
      %v2449 = vmul.f32 %v2417, %v1509
      %v2450 = vmul.f32 %v2418, %v1514
      %v2451 = vmul.f32 %v2419, %v1519
      %v2452 = vmul.f32 %v2420, %v1524
      %v2453 = vmul.f32 %v2421, %v1529
      %v2454 = vmul.f32 %v2422, %v1534
      %v2455 = vmul.f32 %v2423, %v1539
      %v2456 = vmul.f32 %v2424, %v1544
      %v2457 = vmul.f32 %v2425, %v1549
      %v2458 = vmul.f32 %v2426, %v1554
      %v2459 = vmul.f32 %v2427, %v1559
      %v2460 = vmul.f32 %v2428, %v1564
      %v2461 = vld [vmem:[%s4 + $0x14] sm:$0xf]
      %v2463 = vsel %vm586, %v2429, 0
      %v2466 = vsel %vm586, %v2430, 0
      %v2469 = vsel %vm586, %v2431, 0
      %v2472 = vsel %vm586, %v2432, 0
      %v2475 = vsel %vm586, %v2433, 0
      %v2478 = vsel %vm586, %v2434, 0
      %v2481 = vsel %vm586, %v2435, 0
      %v2484 = vsel %vm586, %v2436, 0
      %v2487 = vsel %vm586, %v2437, 0
      %v2490 = vsel %vm586, %v2438, 0
      %v2493 = vsel %vm586, %v2439, 0
      %v2496 = vsel %vm586, %v2440, 0
      %v2499 = vsel %vm586, %v2441, 0
      %v2502 = vsel %vm586, %v2442, 0
      %v2505 = vsel %vm586, %v2443, 0
      %v2508 = vsel %vm586, %v2444, 0
      %v2511 = vsel %vm586, %v2445, 0
      %v2514 = vsel %vm586, %v2446, 0
      %v2517 = vsel %vm586, %v2447, 0
      %v2520 = vsel %vm586, %v2448, 0
      %v2523 = vsel %vm586, %v2449, 0
      %v2526 = vsel %vm586, %v2450, 0
      %v2529 = vsel %vm586, %v2451, 0
      %v2532 = vsel %vm586, %v2452, 0
      %v2535 = vsel %vm586, %v2453, 0
      %v2538 = vsel %vm586, %v2454, 0
      %v2541 = vsel %vm586, %v2455, 0
      %v2544 = vsel %vm586, %v2456, 0
      %v2547 = vsel %vm586, %v2457, 0
      %v2550 = vsel %vm586, %v2458, 0
      %v2553 = vsel %vm586, %v2459, 0
      %v2556 = vsel %vm586, %v2460, 0
      %v2559 = vsel %vm1012, %v2461, 0
      %2561 = vmatpush.msra.mxu0 0.0
      %2562 = vmatpush.msra.mxu0 0.0
      %2563 = vmatpush.msra.mxu0 0.0
      %2564 = vmatpush.msra.mxu0 0.0
      %2565 = vmatpush.msra.mxu0 0.0
      %2566 = vmatpush.msra.mxu0 0.0
      %2567 = vmatpush.msra.mxu0 0.0
      %2568 = vmatpush.msra.mxu0 0.0
      %2569 = vmatpush.msra.mxu0 0.0
      %2570 = vmatpush.msra.mxu0 0.0
      %2571 = vmatpush.msra.mxu0 0.0
      %2572 = vmatpush.msra.mxu0 0.0
      %2573 = vmatpush.msra.mxu0 0.0
      %2574 = vmatpush.msra.mxu0 0.0
      %2575 = vmatpush.msra.mxu0 0.0
      %2576 = vmatpush.msra.mxu0 %v2559
      %2577 = vmatmul.f32.gmra.mxu0 %v2463
      %v2578 = vpop.f32.mrf.mxu0
      %v2579 = vadd.f32 0.0, %v2578
      %2580 = vmatmul.f32.gmra.mxu0 %v2466
      %v2581 = vpop.f32.mrf.mxu0
      %v2582 = vadd.f32 0.0, %v2581
      %2583 = vmatmul.f32.gmra.mxu0 %v2469
      %v2584 = vpop.f32.mrf.mxu0
      %v2585 = vadd.f32 0.0, %v2584
      %2586 = vmatmul.f32.gmra.mxu0 %v2472
      %v2587 = vpop.f32.mrf.mxu0
      %v2588 = vadd.f32 0.0, %v2587
      %2589 = vmatmul.f32.gmra.mxu0 %v2475
      %v2590 = vpop.f32.mrf.mxu0
      %v2591 = vadd.f32 0.0, %v2590
      %2592 = vmatmul.f32.gmra.mxu0 %v2478
      %v2593 = vpop.f32.mrf.mxu0
      %v2594 = vadd.f32 0.0, %v2593
      %2595 = vmatmul.f32.gmra.mxu0 %v2481
      %v2596 = vpop.f32.mrf.mxu0
      %v2597 = vadd.f32 0.0, %v2596
      %2598 = vmatmul.f32.gmra.mxu0 %v2484
      %v2599 = vpop.f32.mrf.mxu0
      %v2600 = vadd.f32 0.0, %v2599
      %2601 = vmatmul.f32.gmra.mxu0 %v2487
      %v2602 = vpop.f32.mrf.mxu0
      %v2603 = vadd.f32 0.0, %v2602
      %2604 = vmatmul.f32.gmra.mxu0 %v2490
      %v2605 = vpop.f32.mrf.mxu0
      %v2606 = vadd.f32 0.0, %v2605
      %2607 = vmatmul.f32.gmra.mxu0 %v2493
      %v2608 = vpop.f32.mrf.mxu0
      %v2609 = vadd.f32 0.0, %v2608
      %2610 = vmatmul.f32.gmra.mxu0 %v2496
      %v2611 = vpop.f32.mrf.mxu0
      %v2612 = vadd.f32 0.0, %v2611
      %2613 = vmatmul.f32.gmra.mxu0 %v2499
      %v2614 = vpop.f32.mrf.mxu0
      %v2615 = vadd.f32 0.0, %v2614
      %2616 = vmatmul.f32.gmra.mxu0 %v2502
      %v2617 = vpop.f32.mrf.mxu0
      %v2618 = vadd.f32 0.0, %v2617
      %2619 = vmatmul.f32.gmra.mxu0 %v2505
      %v2620 = vpop.f32.mrf.mxu0
      %v2621 = vadd.f32 0.0, %v2620
      %2622 = vmatmul.f32.gmra.mxu0 %v2508
      %v2623 = vpop.f32.mrf.mxu0
      %v2624 = vadd.f32 0.0, %v2623
      %2625 = vmatmul.f32.gmra.mxu0 %v2511
      %v2626 = vpop.f32.mrf.mxu0
      %v2627 = vadd.f32 0.0, %v2626
      %2628 = vmatmul.f32.gmra.mxu0 %v2514
      %v2629 = vpop.f32.mrf.mxu0
      %v2630 = vadd.f32 0.0, %v2629
      %2631 = vmatmul.f32.gmra.mxu0 %v2517
      %v2632 = vpop.f32.mrf.mxu0
      %v2633 = vadd.f32 0.0, %v2632
      %2634 = vmatmul.f32.gmra.mxu0 %v2520
      %v2635 = vpop.f32.mrf.mxu0
      %v2636 = vadd.f32 0.0, %v2635
      %2637 = vmatmul.f32.gmra.mxu0 %v2523
      %v2638 = vpop.f32.mrf.mxu0
      %v2639 = vadd.f32 0.0, %v2638
      %2640 = vmatmul.f32.gmra.mxu0 %v2526
      %v2641 = vpop.f32.mrf.mxu0
      %v2642 = vadd.f32 0.0, %v2641
      %2643 = vmatmul.f32.gmra.mxu0 %v2529
      %v2644 = vpop.f32.mrf.mxu0
      %v2645 = vadd.f32 0.0, %v2644
      %2646 = vmatmul.f32.gmra.mxu0 %v2532
      %v2647 = vpop.f32.mrf.mxu0
      %v2648 = vadd.f32 0.0, %v2647
      %2649 = vmatmul.f32.gmra.mxu0 %v2535
      %v2650 = vpop.f32.mrf.mxu0
      %v2651 = vadd.f32 0.0, %v2650
      %2652 = vmatmul.f32.gmra.mxu0 %v2538
      %v2653 = vpop.f32.mrf.mxu0
      %v2654 = vadd.f32 0.0, %v2653
      %2655 = vmatmul.f32.gmra.mxu0 %v2541
      %v2656 = vpop.f32.mrf.mxu0
      %v2657 = vadd.f32 0.0, %v2656
      %2658 = vmatmul.f32.gmra.mxu0 %v2544
      %v2659 = vpop.f32.mrf.mxu0
      %v2660 = vadd.f32 0.0, %v2659
      %2661 = vmatmul.f32.gmra.mxu0 %v2547
      %v2662 = vpop.f32.mrf.mxu0
      %v2663 = vadd.f32 0.0, %v2662
      %2664 = vmatmul.f32.gmra.mxu0 %v2550
      %v2665 = vpop.f32.mrf.mxu0
      %v2666 = vadd.f32 0.0, %v2665
      %2667 = vmatmul.f32.gmra.mxu0 %v2553
      %v2668 = vpop.f32.mrf.mxu0
      %v2669 = vadd.f32 0.0, %v2668
      %2670 = vmatmul.f32.gmra.mxu0 %v2556
      %v2671 = vpop.f32.mrf.mxu0
      %v2672 = vadd.f32 0.0, %v2671
      %2673 = vdwg.mxu0
      %v2674 = vadd.f32 %v2365, %v2579
      %v2675 = vadd.f32 %v2366, %v2582
      %v2676 = vadd.f32 %v2367, %v2585
      %v2677 = vadd.f32 %v2368, %v2588
      %v2678 = vadd.f32 %v2369, %v2591
      %v2679 = vadd.f32 %v2370, %v2594
      %v2680 = vadd.f32 %v2371, %v2597
      %v2681 = vadd.f32 %v2372, %v2600
      %v2682 = vadd.f32 %v2373, %v2603
      %v2683 = vadd.f32 %v2374, %v2606
      %v2684 = vadd.f32 %v2375, %v2609
      %v2685 = vadd.f32 %v2376, %v2612
      %v2686 = vadd.f32 %v2377, %v2615
      %v2687 = vadd.f32 %v2378, %v2618
      %v2688 = vadd.f32 %v2379, %v2621
      %v2689 = vadd.f32 %v2380, %v2624
      %v2690 = vadd.f32 %v2381, %v2627
      %v2691 = vadd.f32 %v2382, %v2630
      %v2692 = vadd.f32 %v2383, %v2633
      %v2693 = vadd.f32 %v2384, %v2636
      %v2694 = vadd.f32 %v2385, %v2639
      %v2695 = vadd.f32 %v2386, %v2642
      %v2696 = vadd.f32 %v2387, %v2645
      %v2697 = vadd.f32 %v2388, %v2648
      %v2698 = vadd.f32 %v2389, %v2651
      %v2699 = vadd.f32 %v2390, %v2654
      %v2700 = vadd.f32 %v2391, %v2657
      %v2701 = vadd.f32 %v2392, %v2660
      %v2702 = vadd.f32 %v2393, %v2663
      %v2703 = vadd.f32 %v2394, %v2666
      %v2704 = vadd.f32 %v2395, %v2669
      %v2705 = vadd.f32 %v2396, %v2672
      %v2706 = vld [vmem:[#allocation2 + $0x20] sm:$0xff]
      %v2707 = vld [vmem:[#allocation2 + $0x28] sm:$0xff]
      %v2708 = vld [vmem:[#allocation2 + $0x30] sm:$0xff]
      %v2709 = vld [vmem:[#allocation2 + $0x38] sm:$0xff]
      %v2710 = vld [vmem:[#allocation2 + $0x40] sm:$0xff]
      %v2711 = vld [vmem:[#allocation2 + $0x48] sm:$0xff]
      %v2712 = vld [vmem:[#allocation2 + $0x50] sm:$0xff]
      %v2713 = vld [vmem:[#allocation2 + $0x58] sm:$0xff]
      %v2714 = vld [vmem:[#allocation2 + $0x60] sm:$0xff]
      %v2715 = vld [vmem:[#allocation2 + $0x68] sm:$0xff]
      %v2716 = vld [vmem:[#allocation2 + $0x70] sm:$0xff]
      %v2717 = vld [vmem:[#allocation2 + $0x78] sm:$0xff]
      %v2718 = vld [vmem:[#allocation2 + $0x80] sm:$0xff]
      %v2719 = vld [vmem:[#allocation2 + $0x88] sm:$0xff]
      %v2720 = vld [vmem:[#allocation2 + $0x90] sm:$0xff]
      %v2721 = vld [vmem:[#allocation2 + $0x98] sm:$0xff]
      %v2722 = vld [vmem:[#allocation2 + $0xa0] sm:$0xff]
      %v2723 = vld [vmem:[#allocation2 + $0xa8] sm:$0xff]
      %v2724 = vld [vmem:[#allocation2 + $0xb0] sm:$0xff]
      %v2725 = vld [vmem:[#allocation2 + $0xb8] sm:$0xff]
      %v2726 = vld [vmem:[#allocation2 + $0xc0] sm:$0xff]
      %v2727 = vld [vmem:[#allocation2 + $0xc8] sm:$0xff]
      %v2728 = vld [vmem:[#allocation2 + $0xd0] sm:$0xff]
      %v2729 = vld [vmem:[#allocation2 + $0xd8] sm:$0xff]
      %v2730 = vld [vmem:[#allocation2 + $0xe0] sm:$0xff]
      %v2731 = vld [vmem:[#allocation2 + $0xe8] sm:$0xff]
      %v2732 = vld [vmem:[#allocation2 + $0xf0] sm:$0xff]
      %v2733 = vld [vmem:[#allocation2 + $0xf8] sm:$0xff]
      %v2734 = vld [vmem:[#allocation2 + $0x100] sm:$0xff]
      %v2735 = vld [vmem:[#allocation2 + $0x108] sm:$0xff]
      %v2736 = vld [vmem:[#allocation2 + $0x110] sm:$0xff]
      %v2737 = vld [vmem:[#allocation2 + $0x118] sm:$0xff]
      %v2738 = vmul.f32 %v2706, %v693
      %v2739 = vmul.f32 %v2707, %v698
      %v2740 = vmul.f32 %v2708, %v703
      %v2741 = vmul.f32 %v2709, %v708
      %v2742 = vmul.f32 %v2710, %v713
      %v2743 = vmul.f32 %v2711, %v718
      %v2744 = vmul.f32 %v2712, %v723
      %v2745 = vmul.f32 %v2713, %v728
      %v2746 = vmul.f32 %v2714, %v733
      %v2747 = vmul.f32 %v2715, %v738
      %v2748 = vmul.f32 %v2716, %v743
      %v2749 = vmul.f32 %v2717, %v748
      %v2750 = vmul.f32 %v2718, %v753
      %v2751 = vmul.f32 %v2719, %v758
      %v2752 = vmul.f32 %v2720, %v763
      %v2753 = vmul.f32 %v2721, %v768
      %v2754 = vmul.f32 %v2722, %v773
      %v2755 = vmul.f32 %v2723, %v778
      %v2756 = vmul.f32 %v2724, %v783
      %v2757 = vmul.f32 %v2725, %v788
      %v2758 = vmul.f32 %v2726, %v793
      %v2759 = vmul.f32 %v2727, %v798
      %v2760 = vmul.f32 %v2728, %v803
      %v2761 = vmul.f32 %v2729, %v808
      %v2762 = vmul.f32 %v2730, %v813
      %v2763 = vmul.f32 %v2731, %v818
      %v2764 = vmul.f32 %v2732, %v823
      %v2765 = vmul.f32 %v2733, %v828
      %v2766 = vmul.f32 %v2734, %v833
      %v2767 = vmul.f32 %v2735, %v838
      %v2768 = vmul.f32 %v2736, %v843
      %v2769 = vmul.f32 %v2737, %v848
      %v2770 = vld [vmem:[%s4 + $0x18] sm:$0xf]
      %v2772 = vsel %vm586, %v2738, 0
      %v2775 = vsel %vm586, %v2739, 0
      %v2778 = vsel %vm586, %v2740, 0
      %v2781 = vsel %vm586, %v2741, 0
      %v2784 = vsel %vm586, %v2742, 0
      %v2787 = vsel %vm586, %v2743, 0
      %v2790 = vsel %vm586, %v2744, 0
      %v2793 = vsel %vm586, %v2745, 0
      %v2796 = vsel %vm586, %v2746, 0
      %v2799 = vsel %vm586, %v2747, 0
      %v2802 = vsel %vm586, %v2748, 0
      %v2805 = vsel %vm586, %v2749, 0
      %v2808 = vsel %vm586, %v2750, 0
      %v2811 = vsel %vm586, %v2751, 0
      %v2814 = vsel %vm586, %v2752, 0
      %v2817 = vsel %vm586, %v2753, 0
      %v2820 = vsel %vm586, %v2754, 0
      %v2823 = vsel %vm586, %v2755, 0
      %v2826 = vsel %vm586, %v2756, 0
      %v2829 = vsel %vm586, %v2757, 0
      %v2832 = vsel %vm586, %v2758, 0
      %v2835 = vsel %vm586, %v2759, 0
      %v2838 = vsel %vm586, %v2760, 0
      %v2841 = vsel %vm586, %v2761, 0
      %v2844 = vsel %vm586, %v2762, 0
      %v2847 = vsel %vm586, %v2763, 0
      %v2850 = vsel %vm586, %v2764, 0
      %v2853 = vsel %vm586, %v2765, 0
      %v2856 = vsel %vm586, %v2766, 0
      %v2859 = vsel %vm586, %v2767, 0
      %v2862 = vsel %vm586, %v2768, 0
      %v2865 = vsel %vm586, %v2769, 0
      %v2868 = vsel %vm1012, %v2770, 0
      %2870 = vmatpush.msra.mxu0 0.0
      %2871 = vmatpush.msra.mxu0 0.0
      %2872 = vmatpush.msra.mxu0 0.0
      %2873 = vmatpush.msra.mxu0 0.0
      %2874 = vmatpush.msra.mxu0 0.0
      %2875 = vmatpush.msra.mxu0 0.0
      %2876 = vmatpush.msra.mxu0 0.0
      %2877 = vmatpush.msra.mxu0 0.0
      %2878 = vmatpush.msra.mxu0 0.0
      %2879 = vmatpush.msra.mxu0 0.0
      %2880 = vmatpush.msra.mxu0 0.0
      %2881 = vmatpush.msra.mxu0 0.0
      %2882 = vmatpush.msra.mxu0 0.0
      %2883 = vmatpush.msra.mxu0 0.0
      %2884 = vmatpush.msra.mxu0 0.0
      %2885 = vmatpush.msra.mxu0 %v2868
      %2886 = vmatmul.f32.gmra.mxu0 %v2772
      %v2887 = vpop.f32.mrf.mxu0
      %v2888 = vadd.f32 0.0, %v2887
      %2889 = vmatmul.f32.gmra.mxu0 %v2775
      %v2890 = vpop.f32.mrf.mxu0
      %v2891 = vadd.f32 0.0, %v2890
      %2892 = vmatmul.f32.gmra.mxu0 %v2778
      %v2893 = vpop.f32.mrf.mxu0
      %v2894 = vadd.f32 0.0, %v2893
      %2895 = vmatmul.f32.gmra.mxu0 %v2781
      %v2896 = vpop.f32.mrf.mxu0
      %v2897 = vadd.f32 0.0, %v2896
      %2898 = vmatmul.f32.gmra.mxu0 %v2784
      %v2899 = vpop.f32.mrf.mxu0
      %v2900 = vadd.f32 0.0, %v2899
      %2901 = vmatmul.f32.gmra.mxu0 %v2787
      %v2902 = vpop.f32.mrf.mxu0
      %v2903 = vadd.f32 0.0, %v2902
      %2904 = vmatmul.f32.gmra.mxu0 %v2790
      %v2905 = vpop.f32.mrf.mxu0
      %v2906 = vadd.f32 0.0, %v2905
      %2907 = vmatmul.f32.gmra.mxu0 %v2793
      %v2908 = vpop.f32.mrf.mxu0
      %v2909 = vadd.f32 0.0, %v2908
      %2910 = vmatmul.f32.gmra.mxu0 %v2796
      %v2911 = vpop.f32.mrf.mxu0
      %v2912 = vadd.f32 0.0, %v2911
      %2913 = vmatmul.f32.gmra.mxu0 %v2799
      %v2914 = vpop.f32.mrf.mxu0
      %v2915 = vadd.f32 0.0, %v2914
      %2916 = vmatmul.f32.gmra.mxu0 %v2802
      %v2917 = vpop.f32.mrf.mxu0
      %v2918 = vadd.f32 0.0, %v2917
      %2919 = vmatmul.f32.gmra.mxu0 %v2805
      %v2920 = vpop.f32.mrf.mxu0
      %v2921 = vadd.f32 0.0, %v2920
      %2922 = vmatmul.f32.gmra.mxu0 %v2808
      %v2923 = vpop.f32.mrf.mxu0
      %v2924 = vadd.f32 0.0, %v2923
      %2925 = vmatmul.f32.gmra.mxu0 %v2811
      %v2926 = vpop.f32.mrf.mxu0
      %v2927 = vadd.f32 0.0, %v2926
      %2928 = vmatmul.f32.gmra.mxu0 %v2814
      %v2929 = vpop.f32.mrf.mxu0
      %v2930 = vadd.f32 0.0, %v2929
      %2931 = vmatmul.f32.gmra.mxu0 %v2817
      %v2932 = vpop.f32.mrf.mxu0
      %v2933 = vadd.f32 0.0, %v2932
      %2934 = vmatmul.f32.gmra.mxu0 %v2820
      %v2935 = vpop.f32.mrf.mxu0
      %v2936 = vadd.f32 0.0, %v2935
      %2937 = vmatmul.f32.gmra.mxu0 %v2823
      %v2938 = vpop.f32.mrf.mxu0
      %v2939 = vadd.f32 0.0, %v2938
      %2940 = vmatmul.f32.gmra.mxu0 %v2826
      %v2941 = vpop.f32.mrf.mxu0
      %v2942 = vadd.f32 0.0, %v2941
      %2943 = vmatmul.f32.gmra.mxu0 %v2829
      %v2944 = vpop.f32.mrf.mxu0
      %v2945 = vadd.f32 0.0, %v2944
      %2946 = vmatmul.f32.gmra.mxu0 %v2832
      %v2947 = vpop.f32.mrf.mxu0
      %v2948 = vadd.f32 0.0, %v2947
      %2949 = vmatmul.f32.gmra.mxu0 %v2835
      %v2950 = vpop.f32.mrf.mxu0
      %v2951 = vadd.f32 0.0, %v2950
      %2952 = vmatmul.f32.gmra.mxu0 %v2838
      %v2953 = vpop.f32.mrf.mxu0
      %v2954 = vadd.f32 0.0, %v2953
      %2955 = vmatmul.f32.gmra.mxu0 %v2841
      %v2956 = vpop.f32.mrf.mxu0
      %v2957 = vadd.f32 0.0, %v2956
      %2958 = vmatmul.f32.gmra.mxu0 %v2844
      %v2959 = vpop.f32.mrf.mxu0
      %v2960 = vadd.f32 0.0, %v2959
      %2961 = vmatmul.f32.gmra.mxu0 %v2847
      %v2962 = vpop.f32.mrf.mxu0
      %v2963 = vadd.f32 0.0, %v2962
      %2964 = vmatmul.f32.gmra.mxu0 %v2850
      %v2965 = vpop.f32.mrf.mxu0
      %v2966 = vadd.f32 0.0, %v2965
      %2967 = vmatmul.f32.gmra.mxu0 %v2853
      %v2968 = vpop.f32.mrf.mxu0
      %v2969 = vadd.f32 0.0, %v2968
      %2970 = vmatmul.f32.gmra.mxu0 %v2856
      %v2971 = vpop.f32.mrf.mxu0
      %v2972 = vadd.f32 0.0, %v2971
      %2973 = vmatmul.f32.gmra.mxu0 %v2859
      %v2974 = vpop.f32.mrf.mxu0
      %v2975 = vadd.f32 0.0, %v2974
      %2976 = vmatmul.f32.gmra.mxu0 %v2862
      %v2977 = vpop.f32.mrf.mxu0
      %v2978 = vadd.f32 0.0, %v2977
      %2979 = vmatmul.f32.gmra.mxu0 %v2865
      %v2980 = vpop.f32.mrf.mxu0
      %v2981 = vadd.f32 0.0, %v2980
      %2982 = vdwg.mxu0
      %v2983 = vadd.f32 %v2674, %v2888
      %v2984 = vadd.f32 %v2675, %v2891
      %v2985 = vadd.f32 %v2676, %v2894
      %v2986 = vadd.f32 %v2677, %v2897
      %v2987 = vadd.f32 %v2678, %v2900
      %v2988 = vadd.f32 %v2679, %v2903
      %v2989 = vadd.f32 %v2680, %v2906
      %v2990 = vadd.f32 %v2681, %v2909
      %v2991 = vadd.f32 %v2682, %v2912
      %v2992 = vadd.f32 %v2683, %v2915
      %v2993 = vadd.f32 %v2684, %v2918
      %v2994 = vadd.f32 %v2685, %v2921
      %v2995 = vadd.f32 %v2686, %v2924
      %v2996 = vadd.f32 %v2687, %v2927
      %v2997 = vadd.f32 %v2688, %v2930
      %v2998 = vadd.f32 %v2689, %v2933
      %v2999 = vadd.f32 %v2690, %v2936
      %v3000 = vadd.f32 %v2691, %v2939
      %v3001 = vadd.f32 %v2692, %v2942
      %v3002 = vadd.f32 %v2693, %v2945
      %v3003 = vadd.f32 %v2694, %v2948
      %v3004 = vadd.f32 %v2695, %v2951
      %v3005 = vadd.f32 %v2696, %v2954
      %v3006 = vadd.f32 %v2697, %v2957
      %v3007 = vadd.f32 %v2698, %v2960
      %v3008 = vadd.f32 %v2699, %v2963
      %v3009 = vadd.f32 %v2700, %v2966
      %v3010 = vadd.f32 %v2701, %v2969
      %v3011 = vadd.f32 %v2702, %v2972
      %v3012 = vadd.f32 %v2703, %v2975
      %v3013 = vadd.f32 %v2704, %v2978
      %v3014 = vadd.f32 %v2705, %v2981
      %v3015 = vld [vmem:[#allocation2 + $0x21] sm:$0xff]
      %v3016 = vld [vmem:[#allocation2 + $0x29] sm:$0xff]
      %v3017 = vld [vmem:[#allocation2 + $0x31] sm:$0xff]
      %v3018 = vld [vmem:[#allocation2 + $0x39] sm:$0xff]
      %v3019 = vld [vmem:[#allocation2 + $0x41] sm:$0xff]
      %v3020 = vld [vmem:[#allocation2 + $0x49] sm:$0xff]
      %v3021 = vld [vmem:[#allocation2 + $0x51] sm:$0xff]
      %v3022 = vld [vmem:[#allocation2 + $0x59] sm:$0xff]
      %v3023 = vld [vmem:[#allocation2 + $0x61] sm:$0xff]
      %v3024 = vld [vmem:[#allocation2 + $0x69] sm:$0xff]
      %v3025 = vld [vmem:[#allocation2 + $0x71] sm:$0xff]
      %v3026 = vld [vmem:[#allocation2 + $0x79] sm:$0xff]
      %v3027 = vld [vmem:[#allocation2 + $0x81] sm:$0xff]
      %v3028 = vld [vmem:[#allocation2 + $0x89] sm:$0xff]
      %v3029 = vld [vmem:[#allocation2 + $0x91] sm:$0xff]
      %v3030 = vld [vmem:[#allocation2 + $0x99] sm:$0xff]
      %v3031 = vld [vmem:[#allocation2 + $0xa1] sm:$0xff]
      %v3032 = vld [vmem:[#allocation2 + $0xa9] sm:$0xff]
      %v3033 = vld [vmem:[#allocation2 + $0xb1] sm:$0xff]
      %v3034 = vld [vmem:[#allocation2 + $0xb9] sm:$0xff]
      %v3035 = vld [vmem:[#allocation2 + $0xc1] sm:$0xff]
      %v3036 = vld [vmem:[#allocation2 + $0xc9] sm:$0xff]
      %v3037 = vld [vmem:[#allocation2 + $0xd1] sm:$0xff]
      %v3038 = vld [vmem:[#allocation2 + $0xd9] sm:$0xff]
      %v3039 = vld [vmem:[#allocation2 + $0xe1] sm:$0xff]
      %v3040 = vld [vmem:[#allocation2 + $0xe9] sm:$0xff]
      %v3041 = vld [vmem:[#allocation2 + $0xf1] sm:$0xff]
      %v3042 = vld [vmem:[#allocation2 + $0xf9] sm:$0xff]
      %v3043 = vld [vmem:[#allocation2 + $0x101] sm:$0xff]
      %v3044 = vld [vmem:[#allocation2 + $0x109] sm:$0xff]
      %v3045 = vld [vmem:[#allocation2 + $0x111] sm:$0xff]
      %v3046 = vld [vmem:[#allocation2 + $0x119] sm:$0xff]
      %v3047 = vld [vmem:[%s4 + $0x1c] sm:$0xf]
      %v3049 = vsel %vm586, %v3015, 0
      %v3052 = vsel %vm586, %v3016, 0
      %v3055 = vsel %vm586, %v3017, 0
      %v3058 = vsel %vm586, %v3018, 0
      %v3061 = vsel %vm586, %v3019, 0
      %v3064 = vsel %vm586, %v3020, 0
      %v3067 = vsel %vm586, %v3021, 0
      %v3070 = vsel %vm586, %v3022, 0
      %v3073 = vsel %vm586, %v3023, 0
      %v3076 = vsel %vm586, %v3024, 0
      %v3079 = vsel %vm586, %v3025, 0
      %v3082 = vsel %vm586, %v3026, 0
      %v3085 = vsel %vm586, %v3027, 0
      %v3088 = vsel %vm586, %v3028, 0
      %v3091 = vsel %vm586, %v3029, 0
      %v3094 = vsel %vm586, %v3030, 0
      %v3097 = vsel %vm586, %v3031, 0
      %v3100 = vsel %vm586, %v3032, 0
      %v3103 = vsel %vm586, %v3033, 0
      %v3106 = vsel %vm586, %v3034, 0
      %v3109 = vsel %vm586, %v3035, 0
      %v3112 = vsel %vm586, %v3036, 0
      %v3115 = vsel %vm586, %v3037, 0
      %v3118 = vsel %vm586, %v3038, 0
      %v3121 = vsel %vm586, %v3039, 0
      %v3124 = vsel %vm586, %v3040, 0
      %v3127 = vsel %vm586, %v3041, 0
      %v3130 = vsel %vm586, %v3042, 0
      %v3133 = vsel %vm586, %v3043, 0
      %v3136 = vsel %vm586, %v3044, 0
      %v3139 = vsel %vm586, %v3045, 0
      %v3142 = vsel %vm586, %v3046, 0
      %v3145 = vsel %vm1012, %v3047, 0
      %3147 = vmatpush.msra.mxu0 0.0
      %3148 = vmatpush.msra.mxu0 0.0
      %3149 = vmatpush.msra.mxu0 0.0
      %3150 = vmatpush.msra.mxu0 0.0
      %3151 = vmatpush.msra.mxu0 0.0
      %3152 = vmatpush.msra.mxu0 0.0
      %3153 = vmatpush.msra.mxu0 0.0
      %3154 = vmatpush.msra.mxu0 0.0
      %3155 = vmatpush.msra.mxu0 0.0
      %3156 = vmatpush.msra.mxu0 0.0
      %3157 = vmatpush.msra.mxu0 0.0
      %3158 = vmatpush.msra.mxu0 0.0
      %3159 = vmatpush.msra.mxu0 0.0
      %3160 = vmatpush.msra.mxu0 0.0
      %3161 = vmatpush.msra.mxu0 0.0
      %3162 = vmatpush.msra.mxu0 %v3145
      %3163 = vmatmul.f32.gmra.mxu0 %v3049
      %v3164 = vpop.f32.mrf.mxu0
      %v3165 = vadd.f32 0.0, %v3164
      %3166 = vmatmul.f32.gmra.mxu0 %v3052
      %v3167 = vpop.f32.mrf.mxu0
      %v3168 = vadd.f32 0.0, %v3167
      %3169 = vmatmul.f32.gmra.mxu0 %v3055
      %v3170 = vpop.f32.mrf.mxu0
      %v3171 = vadd.f32 0.0, %v3170
      %3172 = vmatmul.f32.gmra.mxu0 %v3058
      %v3173 = vpop.f32.mrf.mxu0
      %v3174 = vadd.f32 0.0, %v3173
      %3175 = vmatmul.f32.gmra.mxu0 %v3061
      %v3176 = vpop.f32.mrf.mxu0
      %v3177 = vadd.f32 0.0, %v3176
      %3178 = vmatmul.f32.gmra.mxu0 %v3064
      %v3179 = vpop.f32.mrf.mxu0
      %v3180 = vadd.f32 0.0, %v3179
      %3181 = vmatmul.f32.gmra.mxu0 %v3067
      %v3182 = vpop.f32.mrf.mxu0
      %v3183 = vadd.f32 0.0, %v3182
      %3184 = vmatmul.f32.gmra.mxu0 %v3070
      %v3185 = vpop.f32.mrf.mxu0
      %v3186 = vadd.f32 0.0, %v3185
      %3187 = vmatmul.f32.gmra.mxu0 %v3073
      %v3188 = vpop.f32.mrf.mxu0
      %v3189 = vadd.f32 0.0, %v3188
      %3190 = vmatmul.f32.gmra.mxu0 %v3076
      %v3191 = vpop.f32.mrf.mxu0
      %v3192 = vadd.f32 0.0, %v3191
      %3193 = vmatmul.f32.gmra.mxu0 %v3079
      %v3194 = vpop.f32.mrf.mxu0
      %v3195 = vadd.f32 0.0, %v3194
      %3196 = vmatmul.f32.gmra.mxu0 %v3082
      %v3197 = vpop.f32.mrf.mxu0
      %v3198 = vadd.f32 0.0, %v3197
      %3199 = vmatmul.f32.gmra.mxu0 %v3085
      %v3200 = vpop.f32.mrf.mxu0
      %v3201 = vadd.f32 0.0, %v3200
      %3202 = vmatmul.f32.gmra.mxu0 %v3088
      %v3203 = vpop.f32.mrf.mxu0
      %v3204 = vadd.f32 0.0, %v3203
      %3205 = vmatmul.f32.gmra.mxu0 %v3091
      %v3206 = vpop.f32.mrf.mxu0
      %v3207 = vadd.f32 0.0, %v3206
      %3208 = vmatmul.f32.gmra.mxu0 %v3094
      %v3209 = vpop.f32.mrf.mxu0
      %v3210 = vadd.f32 0.0, %v3209
      %3211 = vmatmul.f32.gmra.mxu0 %v3097
      %v3212 = vpop.f32.mrf.mxu0
      %v3213 = vadd.f32 0.0, %v3212
      %3214 = vmatmul.f32.gmra.mxu0 %v3100
      %v3215 = vpop.f32.mrf.mxu0
      %v3216 = vadd.f32 0.0, %v3215
      %3217 = vmatmul.f32.gmra.mxu0 %v3103
      %v3218 = vpop.f32.mrf.mxu0
      %v3219 = vadd.f32 0.0, %v3218
      %3220 = vmatmul.f32.gmra.mxu0 %v3106
      %v3221 = vpop.f32.mrf.mxu0
      %v3222 = vadd.f32 0.0, %v3221
      %3223 = vmatmul.f32.gmra.mxu0 %v3109
      %v3224 = vpop.f32.mrf.mxu0
      %v3225 = vadd.f32 0.0, %v3224
      %3226 = vmatmul.f32.gmra.mxu0 %v3112
      %v3227 = vpop.f32.mrf.mxu0
      %v3228 = vadd.f32 0.0, %v3227
      %3229 = vmatmul.f32.gmra.mxu0 %v3115
      %v3230 = vpop.f32.mrf.mxu0
      %v3231 = vadd.f32 0.0, %v3230
      %3232 = vmatmul.f32.gmra.mxu0 %v3118
      %v3233 = vpop.f32.mrf.mxu0
      %v3234 = vadd.f32 0.0, %v3233
      %3235 = vmatmul.f32.gmra.mxu0 %v3121
      %v3236 = vpop.f32.mrf.mxu0
      %v3237 = vadd.f32 0.0, %v3236
      %3238 = vmatmul.f32.gmra.mxu0 %v3124
      %v3239 = vpop.f32.mrf.mxu0
      %v3240 = vadd.f32 0.0, %v3239
      %3241 = vmatmul.f32.gmra.mxu0 %v3127
      %v3242 = vpop.f32.mrf.mxu0
      %v3243 = vadd.f32 0.0, %v3242
      %3244 = vmatmul.f32.gmra.mxu0 %v3130
      %v3245 = vpop.f32.mrf.mxu0
      %v3246 = vadd.f32 0.0, %v3245
      %3247 = vmatmul.f32.gmra.mxu0 %v3133
      %v3248 = vpop.f32.mrf.mxu0
      %v3249 = vadd.f32 0.0, %v3248
      %3250 = vmatmul.f32.gmra.mxu0 %v3136
      %v3251 = vpop.f32.mrf.mxu0
      %v3252 = vadd.f32 0.0, %v3251
      %3253 = vmatmul.f32.gmra.mxu0 %v3139
      %v3254 = vpop.f32.mrf.mxu0
      %v3255 = vadd.f32 0.0, %v3254
      %3256 = vmatmul.f32.gmra.mxu0 %v3142
      %v3257 = vpop.f32.mrf.mxu0
      %v3258 = vadd.f32 0.0, %v3257
      %3259 = vdwg.mxu0
      %v3260 = vadd.f32 %v2983, %v3165
      %v3261 = vadd.f32 %v2984, %v3168
      %v3262 = vadd.f32 %v2985, %v3171
      %v3263 = vadd.f32 %v2986, %v3174
      %v3264 = vadd.f32 %v2987, %v3177
      %v3265 = vadd.f32 %v2988, %v3180
      %v3266 = vadd.f32 %v2989, %v3183
      %v3267 = vadd.f32 %v2990, %v3186
      %v3268 = vadd.f32 %v2991, %v3189
      %v3269 = vadd.f32 %v2992, %v3192
      %v3270 = vadd.f32 %v2993, %v3195
      %v3271 = vadd.f32 %v2994, %v3198
      %v3272 = vadd.f32 %v2995, %v3201
      %v3273 = vadd.f32 %v2996, %v3204
      %v3274 = vadd.f32 %v2997, %v3207
      %v3275 = vadd.f32 %v2998, %v3210
      %v3276 = vadd.f32 %v2999, %v3213
      %v3277 = vadd.f32 %v3000, %v3216
      %v3278 = vadd.f32 %v3001, %v3219
      %v3279 = vadd.f32 %v3002, %v3222
      %v3280 = vadd.f32 %v3003, %v3225
      %v3281 = vadd.f32 %v3004, %v3228
      %v3282 = vadd.f32 %v3005, %v3231
      %v3283 = vadd.f32 %v3006, %v3234
      %v3284 = vadd.f32 %v3007, %v3237
      %v3285 = vadd.f32 %v3008, %v3240
      %v3286 = vadd.f32 %v3009, %v3243
      %v3287 = vadd.f32 %v3010, %v3246
      %v3288 = vadd.f32 %v3011, %v3249
      %v3289 = vadd.f32 %v3012, %v3252
      %v3290 = vadd.f32 %v3013, %v3255
      %v3291 = vadd.f32 %v3014, %v3258
      %v3292 = vld [vmem:[#allocation2 + $0x22] sm:$0xff]
      %v3293 = vld [vmem:[#allocation2 + $0x2a] sm:$0xff]
      %v3294 = vld [vmem:[#allocation2 + $0x32] sm:$0xff]
      %v3295 = vld [vmem:[#allocation2 + $0x3a] sm:$0xff]
      %v3296 = vld [vmem:[#allocation2 + $0x42] sm:$0xff]
      %v3297 = vld [vmem:[#allocation2 + $0x4a] sm:$0xff]
      %v3298 = vld [vmem:[#allocation2 + $0x52] sm:$0xff]
      %v3299 = vld [vmem:[#allocation2 + $0x5a] sm:$0xff]
      %v3300 = vld [vmem:[#allocation2 + $0x62] sm:$0xff]
      %v3301 = vld [vmem:[#allocation2 + $0x6a] sm:$0xff]
      %v3302 = vld [vmem:[#allocation2 + $0x72] sm:$0xff]
      %v3303 = vld [vmem:[#allocation2 + $0x7a] sm:$0xff]
      %v3304 = vld [vmem:[#allocation2 + $0x82] sm:$0xff]
      %v3305 = vld [vmem:[#allocation2 + $0x8a] sm:$0xff]
      %v3306 = vld [vmem:[#allocation2 + $0x92] sm:$0xff]
      %v3307 = vld [vmem:[#allocation2 + $0x9a] sm:$0xff]
      %v3308 = vld [vmem:[#allocation2 + $0xa2] sm:$0xff]
      %v3309 = vld [vmem:[#allocation2 + $0xaa] sm:$0xff]
      %v3310 = vld [vmem:[#allocation2 + $0xb2] sm:$0xff]
      %v3311 = vld [vmem:[#allocation2 + $0xba] sm:$0xff]
      %v3312 = vld [vmem:[#allocation2 + $0xc2] sm:$0xff]
      %v3313 = vld [vmem:[#allocation2 + $0xca] sm:$0xff]
      %v3314 = vld [vmem:[#allocation2 + $0xd2] sm:$0xff]
      %v3315 = vld [vmem:[#allocation2 + $0xda] sm:$0xff]
      %v3316 = vld [vmem:[#allocation2 + $0xe2] sm:$0xff]
      %v3317 = vld [vmem:[#allocation2 + $0xea] sm:$0xff]
      %v3318 = vld [vmem:[#allocation2 + $0xf2] sm:$0xff]
      %v3319 = vld [vmem:[#allocation2 + $0xfa] sm:$0xff]
      %v3320 = vld [vmem:[#allocation2 + $0x102] sm:$0xff]
      %v3321 = vld [vmem:[#allocation2 + $0x10a] sm:$0xff]
      %v3322 = vld [vmem:[#allocation2 + $0x112] sm:$0xff]
      %v3323 = vld [vmem:[#allocation2 + $0x11a] sm:$0xff]
      %v3324 = vmul.f32 %v3292, %v1409
      %v3325 = vmul.f32 %v3293, %v1414
      %v3326 = vmul.f32 %v3294, %v1419
      %v3327 = vmul.f32 %v3295, %v1424
      %v3328 = vmul.f32 %v3296, %v1429
      %v3329 = vmul.f32 %v3297, %v1434
      %v3330 = vmul.f32 %v3298, %v1439
      %v3331 = vmul.f32 %v3299, %v1444
      %v3332 = vmul.f32 %v3300, %v1449
      %v3333 = vmul.f32 %v3301, %v1454
      %v3334 = vmul.f32 %v3302, %v1459
      %v3335 = vmul.f32 %v3303, %v1464
      %v3336 = vmul.f32 %v3304, %v1469
      %v3337 = vmul.f32 %v3305, %v1474
      %v3338 = vmul.f32 %v3306, %v1479
      %v3339 = vmul.f32 %v3307, %v1484
      %v3340 = vmul.f32 %v3308, %v1489
      %v3341 = vmul.f32 %v3309, %v1494
      %v3342 = vmul.f32 %v3310, %v1499
      %v3343 = vmul.f32 %v3311, %v1504
      %v3344 = vmul.f32 %v3312, %v1509
      %v3345 = vmul.f32 %v3313, %v1514
      %v3346 = vmul.f32 %v3314, %v1519
      %v3347 = vmul.f32 %v3315, %v1524
      %v3348 = vmul.f32 %v3316, %v1529
      %v3349 = vmul.f32 %v3317, %v1534
      %v3350 = vmul.f32 %v3318, %v1539
      %v3351 = vmul.f32 %v3319, %v1544
      %v3352 = vmul.f32 %v3320, %v1549
      %v3353 = vmul.f32 %v3321, %v1554
      %v3354 = vmul.f32 %v3322, %v1559
      %v3355 = vmul.f32 %v3323, %v1564
      %v3356 = vld [vmem:[%s4 + $0x20] sm:$0xf]
      %v3358 = vsel %vm586, %v3324, 0
      %v3361 = vsel %vm586, %v3325, 0
      %v3364 = vsel %vm586, %v3326, 0
      %v3367 = vsel %vm586, %v3327, 0
      %v3370 = vsel %vm586, %v3328, 0
      %v3373 = vsel %vm586, %v3329, 0
      %v3376 = vsel %vm586, %v3330, 0
      %v3379 = vsel %vm586, %v3331, 0
      %v3382 = vsel %vm586, %v3332, 0
      %v3385 = vsel %vm586, %v3333, 0
      %v3388 = vsel %vm586, %v3334, 0
      %v3391 = vsel %vm586, %v3335, 0
      %v3394 = vsel %vm586, %v3336, 0
      %v3397 = vsel %vm586, %v3337, 0
      %v3400 = vsel %vm586, %v3338, 0
      %v3403 = vsel %vm586, %v3339, 0
      %v3406 = vsel %vm586, %v3340, 0
      %v3409 = vsel %vm586, %v3341, 0
      %v3412 = vsel %vm586, %v3342, 0
      %v3415 = vsel %vm586, %v3343, 0
      %v3418 = vsel %vm586, %v3344, 0
      %v3421 = vsel %vm586, %v3345, 0
      %v3424 = vsel %vm586, %v3346, 0
      %v3427 = vsel %vm586, %v3347, 0
      %v3430 = vsel %vm586, %v3348, 0
      %v3433 = vsel %vm586, %v3349, 0
      %v3436 = vsel %vm586, %v3350, 0
      %v3439 = vsel %vm586, %v3351, 0
      %v3442 = vsel %vm586, %v3352, 0
      %v3445 = vsel %vm586, %v3353, 0
      %v3448 = vsel %vm586, %v3354, 0
      %v3451 = vsel %vm586, %v3355, 0
      %v3454 = vsel %vm1012, %v3356, 0
      %3456 = vmatpush.msra.mxu0 0.0
      %3457 = vmatpush.msra.mxu0 0.0
      %3458 = vmatpush.msra.mxu0 0.0
      %3459 = vmatpush.msra.mxu0 0.0
      %3460 = vmatpush.msra.mxu0 0.0
      %3461 = vmatpush.msra.mxu0 0.0
      %3462 = vmatpush.msra.mxu0 0.0
      %3463 = vmatpush.msra.mxu0 0.0
      %3464 = vmatpush.msra.mxu0 0.0
      %3465 = vmatpush.msra.mxu0 0.0
      %3466 = vmatpush.msra.mxu0 0.0
      %3467 = vmatpush.msra.mxu0 0.0
      %3468 = vmatpush.msra.mxu0 0.0
      %3469 = vmatpush.msra.mxu0 0.0
      %3470 = vmatpush.msra.mxu0 0.0
      %3471 = vmatpush.msra.mxu0 %v3454
      %3472 = vmatmul.f32.gmra.mxu0 %v3358
      %v3473 = vpop.f32.mrf.mxu0
      %v3474 = vadd.f32 0.0, %v3473
      %3475 = vmatmul.f32.gmra.mxu0 %v3361
      %v3476 = vpop.f32.mrf.mxu0
      %v3477 = vadd.f32 0.0, %v3476
      %3478 = vmatmul.f32.gmra.mxu0 %v3364
      %v3479 = vpop.f32.mrf.mxu0
      %v3480 = vadd.f32 0.0, %v3479
      %3481 = vmatmul.f32.gmra.mxu0 %v3367
      %v3482 = vpop.f32.mrf.mxu0
      %v3483 = vadd.f32 0.0, %v3482
      %3484 = vmatmul.f32.gmra.mxu0 %v3370
      %v3485 = vpop.f32.mrf.mxu0
      %v3486 = vadd.f32 0.0, %v3485
      %3487 = vmatmul.f32.gmra.mxu0 %v3373
      %v3488 = vpop.f32.mrf.mxu0
      %v3489 = vadd.f32 0.0, %v3488
      %3490 = vmatmul.f32.gmra.mxu0 %v3376
      %v3491 = vpop.f32.mrf.mxu0
      %v3492 = vadd.f32 0.0, %v3491
      %3493 = vmatmul.f32.gmra.mxu0 %v3379
      %v3494 = vpop.f32.mrf.mxu0
      %v3495 = vadd.f32 0.0, %v3494
      %3496 = vmatmul.f32.gmra.mxu0 %v3382
      %v3497 = vpop.f32.mrf.mxu0
      %v3498 = vadd.f32 0.0, %v3497
      %3499 = vmatmul.f32.gmra.mxu0 %v3385
      %v3500 = vpop.f32.mrf.mxu0
      %v3501 = vadd.f32 0.0, %v3500
      %3502 = vmatmul.f32.gmra.mxu0 %v3388
      %v3503 = vpop.f32.mrf.mxu0
      %v3504 = vadd.f32 0.0, %v3503
      %3505 = vmatmul.f32.gmra.mxu0 %v3391
      %v3506 = vpop.f32.mrf.mxu0
      %v3507 = vadd.f32 0.0, %v3506
      %3508 = vmatmul.f32.gmra.mxu0 %v3394
      %v3509 = vpop.f32.mrf.mxu0
      %v3510 = vadd.f32 0.0, %v3509
      %3511 = vmatmul.f32.gmra.mxu0 %v3397
      %v3512 = vpop.f32.mrf.mxu0
      %v3513 = vadd.f32 0.0, %v3512
      %3514 = vmatmul.f32.gmra.mxu0 %v3400
      %v3515 = vpop.f32.mrf.mxu0
      %v3516 = vadd.f32 0.0, %v3515
      %3517 = vmatmul.f32.gmra.mxu0 %v3403
      %v3518 = vpop.f32.mrf.mxu0
      %v3519 = vadd.f32 0.0, %v3518
      %3520 = vmatmul.f32.gmra.mxu0 %v3406
      %v3521 = vpop.f32.mrf.mxu0
      %v3522 = vadd.f32 0.0, %v3521
      %3523 = vmatmul.f32.gmra.mxu0 %v3409
      %v3524 = vpop.f32.mrf.mxu0
      %v3525 = vadd.f32 0.0, %v3524
      %3526 = vmatmul.f32.gmra.mxu0 %v3412
      %v3527 = vpop.f32.mrf.mxu0
      %v3528 = vadd.f32 0.0, %v3527
      %3529 = vmatmul.f32.gmra.mxu0 %v3415
      %v3530 = vpop.f32.mrf.mxu0
      %v3531 = vadd.f32 0.0, %v3530
      %3532 = vmatmul.f32.gmra.mxu0 %v3418
      %v3533 = vpop.f32.mrf.mxu0
      %v3534 = vadd.f32 0.0, %v3533
      %3535 = vmatmul.f32.gmra.mxu0 %v3421
      %v3536 = vpop.f32.mrf.mxu0
      %v3537 = vadd.f32 0.0, %v3536
      %3538 = vmatmul.f32.gmra.mxu0 %v3424
      %v3539 = vpop.f32.mrf.mxu0
      %v3540 = vadd.f32 0.0, %v3539
      %3541 = vmatmul.f32.gmra.mxu0 %v3427
      %v3542 = vpop.f32.mrf.mxu0
      %v3543 = vadd.f32 0.0, %v3542
      %3544 = vmatmul.f32.gmra.mxu0 %v3430
      %v3545 = vpop.f32.mrf.mxu0
      %v3546 = vadd.f32 0.0, %v3545
      %3547 = vmatmul.f32.gmra.mxu0 %v3433
      %v3548 = vpop.f32.mrf.mxu0
      %v3549 = vadd.f32 0.0, %v3548
      %3550 = vmatmul.f32.gmra.mxu0 %v3436
      %v3551 = vpop.f32.mrf.mxu0
      %v3552 = vadd.f32 0.0, %v3551
      %3553 = vmatmul.f32.gmra.mxu0 %v3439
      %v3554 = vpop.f32.mrf.mxu0
      %v3555 = vadd.f32 0.0, %v3554
      %3556 = vmatmul.f32.gmra.mxu0 %v3442
      %v3557 = vpop.f32.mrf.mxu0
      %v3558 = vadd.f32 0.0, %v3557
      %3559 = vmatmul.f32.gmra.mxu0 %v3445
      %v3560 = vpop.f32.mrf.mxu0
      %v3561 = vadd.f32 0.0, %v3560
      %3562 = vmatmul.f32.gmra.mxu0 %v3448
      %v3563 = vpop.f32.mrf.mxu0
      %v3564 = vadd.f32 0.0, %v3563
      %3565 = vmatmul.f32.gmra.mxu0 %v3451
      %v3566 = vpop.f32.mrf.mxu0
      %v3567 = vadd.f32 0.0, %v3566
      %3568 = vdwg.mxu0
      %v3569 = vadd.f32 %v3260, %v3474
      %v3570 = vadd.f32 %v3261, %v3477
      %v3571 = vadd.f32 %v3262, %v3480
      %v3572 = vadd.f32 %v3263, %v3483
      %v3573 = vadd.f32 %v3264, %v3486
      %v3574 = vadd.f32 %v3265, %v3489
      %v3575 = vadd.f32 %v3266, %v3492
      %v3576 = vadd.f32 %v3267, %v3495
      %v3577 = vadd.f32 %v3268, %v3498
      %v3578 = vadd.f32 %v3269, %v3501
      %v3579 = vadd.f32 %v3270, %v3504
      %v3580 = vadd.f32 %v3271, %v3507
      %v3581 = vadd.f32 %v3272, %v3510
      %v3582 = vadd.f32 %v3273, %v3513
      %v3583 = vadd.f32 %v3274, %v3516
      %v3584 = vadd.f32 %v3275, %v3519
      %v3585 = vadd.f32 %v3276, %v3522
      %v3586 = vadd.f32 %v3277, %v3525
      %v3587 = vadd.f32 %v3278, %v3528
      %v3588 = vadd.f32 %v3279, %v3531
      %v3589 = vadd.f32 %v3280, %v3534
      %v3590 = vadd.f32 %v3281, %v3537
      %v3591 = vadd.f32 %v3282, %v3540
      %v3592 = vadd.f32 %v3283, %v3543
      %v3593 = vadd.f32 %v3284, %v3546
      %v3594 = vadd.f32 %v3285, %v3549
      %v3595 = vadd.f32 %v3286, %v3552
      %v3596 = vadd.f32 %v3287, %v3555
      %v3597 = vadd.f32 %v3288, %v3558
      %v3598 = vadd.f32 %v3289, %v3561
      %v3599 = vadd.f32 %v3290, %v3564
      %v3600 = vadd.f32 %v3291, %v3567
      %v3601 = vld [vmem:[%s5] sm:$0x1]
      %v3603 = vperm.slane %v3601, 0
      %v3605 = vadd.f32 %v3569, %v3603
      %v3606 = vadd.f32 %v3570, %v3603
      %v3607 = vadd.f32 %v3571, %v3603
      %v3608 = vadd.f32 %v3572, %v3603
      %v3609 = vadd.f32 %v3573, %v3603
      %v3610 = vadd.f32 %v3574, %v3603
      %v3611 = vadd.f32 %v3575, %v3603
      %v3612 = vadd.f32 %v3576, %v3603
      %v3613 = vadd.f32 %v3577, %v3603
      %v3614 = vadd.f32 %v3578, %v3603
      %v3615 = vadd.f32 %v3579, %v3603
      %v3616 = vadd.f32 %v3580, %v3603
      %v3617 = vadd.f32 %v3581, %v3603
      %v3618 = vadd.f32 %v3582, %v3603
      %v3619 = vadd.f32 %v3583, %v3603
      %v3620 = vadd.f32 %v3584, %v3603
      %v3621 = vadd.f32 %v3585, %v3603
      %v3622 = vadd.f32 %v3586, %v3603
      %v3623 = vadd.f32 %v3587, %v3603
      %v3624 = vadd.f32 %v3588, %v3603
      %v3625 = vadd.f32 %v3589, %v3603
      %v3626 = vadd.f32 %v3590, %v3603
      %v3627 = vadd.f32 %v3591, %v3603
      %v3628 = vadd.f32 %v3592, %v3603
      %v3629 = vadd.f32 %v3593, %v3603
      %v3630 = vadd.f32 %v3594, %v3603
      %v3631 = vadd.f32 %v3595, %v3603
      %v3632 = vadd.f32 %v3596, %v3603
      %v3633 = vadd.f32 %v3597, %v3603
      %v3634 = vadd.f32 %v3598, %v3603
      %v3635 = vadd.f32 %v3599, %v3603
      %v3636 = vadd.f32 %v3600, %v3603
      %v3637 = vmax.f32 %v3605, 0.0
      %v3638 = vmax.f32 %v3606, 0.0
      %v3639 = vmax.f32 %v3607, 0.0
      %v3640 = vmax.f32 %v3608, 0.0
      %v3641 = vmax.f32 %v3609, 0.0
      %v3642 = vmax.f32 %v3610, 0.0
      %v3643 = vmax.f32 %v3611, 0.0
      %v3644 = vmax.f32 %v3612, 0.0
      %v3645 = vmax.f32 %v3613, 0.0
      %v3646 = vmax.f32 %v3614, 0.0
      %v3647 = vmax.f32 %v3615, 0.0
      %v3648 = vmax.f32 %v3616, 0.0
      %v3649 = vmax.f32 %v3617, 0.0
      %v3650 = vmax.f32 %v3618, 0.0
      %v3651 = vmax.f32 %v3619, 0.0
      %v3652 = vmax.f32 %v3620, 0.0
      %v3653 = vmax.f32 %v3621, 0.0
      %v3654 = vmax.f32 %v3622, 0.0
      %v3655 = vmax.f32 %v3623, 0.0
      %v3656 = vmax.f32 %v3624, 0.0
      %v3657 = vmax.f32 %v3625, 0.0
      %v3658 = vmax.f32 %v3626, 0.0
      %v3659 = vmax.f32 %v3627, 0.0
      %v3660 = vmax.f32 %v3628, 0.0
      %v3661 = vmax.f32 %v3629, 0.0
      %v3662 = vmax.f32 %v3630, 0.0
      %v3663 = vmax.f32 %v3631, 0.0
      %v3664 = vmax.f32 %v3632, 0.0
      %v3665 = vmax.f32 %v3633, 0.0
      %v3666 = vmax.f32 %v3634, 0.0
      %v3667 = vmax.f32 %v3635, 0.0
      %v3668 = vmax.f32 %v3636, 0.0
      %v3669 = vld [vmem:[%s6] sm:$0xf]
      %v3670 = vld [vmem:[%s7] sm:$0x1]
      %v3672 = vperm.slane %v3670, 0
      %v3675 = vsel %vm586, %v3637, 0
      %v3678 = vsel %vm586, %v3638, 0
      %v3681 = vsel %vm586, %v3639, 0
      %v3684 = vsel %vm586, %v3640, 0
      %v3687 = vsel %vm586, %v3641, 0
      %v3690 = vsel %vm586, %v3642, 0
      %v3693 = vsel %vm586, %v3643, 0
      %v3696 = vsel %vm586, %v3644, 0
      %v3699 = vsel %vm586, %v3645, 0
      %v3702 = vsel %vm586, %v3646, 0
      %v3705 = vsel %vm586, %v3647, 0
      %v3708 = vsel %vm586, %v3648, 0
      %v3711 = vsel %vm586, %v3649, 0
      %v3714 = vsel %vm586, %v3650, 0
      %v3717 = vsel %vm586, %v3651, 0
      %v3720 = vsel %vm586, %v3652, 0
      %v3723 = vsel %vm586, %v3653, 0
      %v3726 = vsel %vm586, %v3654, 0
      %v3729 = vsel %vm586, %v3655, 0
      %v3732 = vsel %vm586, %v3656, 0
      %v3735 = vsel %vm586, %v3657, 0
      %v3738 = vsel %vm586, %v3658, 0
      %v3741 = vsel %vm586, %v3659, 0
      %v3744 = vsel %vm586, %v3660, 0
      %v3747 = vsel %vm586, %v3661, 0
      %v3750 = vsel %vm586, %v3662, 0
      %v3753 = vsel %vm586, %v3663, 0
      %v3756 = vsel %vm586, %v3664, 0
      %v3759 = vsel %vm586, %v3665, 0
      %v3762 = vsel %vm586, %v3666, 0
      %v3765 = vsel %vm586, %v3667, 0
      %v3768 = vsel %vm586, %v3668, 0
      %v3771 = vsel %vm1012, %v3669, 0
      %3773 = vmatpush.msra.mxu0 0.0
      %3774 = vmatpush.msra.mxu0 0.0
      %3775 = vmatpush.msra.mxu0 0.0
      %3776 = vmatpush.msra.mxu0 0.0
      %3777 = vmatpush.msra.mxu0 0.0
      %3778 = vmatpush.msra.mxu0 0.0
      %3779 = vmatpush.msra.mxu0 0.0
      %3780 = vmatpush.msra.mxu0 0.0
      %3781 = vmatpush.msra.mxu0 0.0
      %3782 = vmatpush.msra.mxu0 0.0
      %3783 = vmatpush.msra.mxu0 0.0
      %3784 = vmatpush.msra.mxu0 0.0
      %3785 = vmatpush.msra.mxu0 0.0
      %3786 = vmatpush.msra.mxu0 0.0
      %3787 = vmatpush.msra.mxu0 0.0
      %3788 = vmatpush.msra.mxu0 %v3771
      %3789 = vmatmul.f32.gmra.mxu0 %v3675
      %v3790 = vpop.f32.mrf.mxu0
      %v3791 = vadd.f32 %v3672, %v3790
      %3792 = vmatmul.f32.gmra.mxu0 %v3678
      %v3793 = vpop.f32.mrf.mxu0
      %v3794 = vadd.f32 %v3672, %v3793
      %3795 = vmatmul.f32.gmra.mxu0 %v3681
      %v3796 = vpop.f32.mrf.mxu0
      %v3797 = vadd.f32 %v3672, %v3796
      %3798 = vmatmul.f32.gmra.mxu0 %v3684
      %v3799 = vpop.f32.mrf.mxu0
      %v3800 = vadd.f32 %v3672, %v3799
      %3801 = vmatmul.f32.gmra.mxu0 %v3687
      %v3802 = vpop.f32.mrf.mxu0
      %v3803 = vadd.f32 %v3672, %v3802
      %3804 = vmatmul.f32.gmra.mxu0 %v3690
      %v3805 = vpop.f32.mrf.mxu0
      %v3806 = vadd.f32 %v3672, %v3805
      %3807 = vmatmul.f32.gmra.mxu0 %v3693
      %v3808 = vpop.f32.mrf.mxu0
      %v3809 = vadd.f32 %v3672, %v3808
      %3810 = vmatmul.f32.gmra.mxu0 %v3696
      %v3811 = vpop.f32.mrf.mxu0
      %v3812 = vadd.f32 %v3672, %v3811
      %3813 = vmatmul.f32.gmra.mxu0 %v3699
      %v3814 = vpop.f32.mrf.mxu0
      %v3815 = vadd.f32 %v3672, %v3814
      %3816 = vmatmul.f32.gmra.mxu0 %v3702
      %v3817 = vpop.f32.mrf.mxu0
      %v3818 = vadd.f32 %v3672, %v3817
      %3819 = vmatmul.f32.gmra.mxu0 %v3705
      %v3820 = vpop.f32.mrf.mxu0
      %v3821 = vadd.f32 %v3672, %v3820
      %3822 = vmatmul.f32.gmra.mxu0 %v3708
      %v3823 = vpop.f32.mrf.mxu0
      %v3824 = vadd.f32 %v3672, %v3823
      %3825 = vmatmul.f32.gmra.mxu0 %v3711
      %v3826 = vpop.f32.mrf.mxu0
      %v3827 = vadd.f32 %v3672, %v3826
      %3828 = vmatmul.f32.gmra.mxu0 %v3714
      %v3829 = vpop.f32.mrf.mxu0
      %v3830 = vadd.f32 %v3672, %v3829
      %3831 = vmatmul.f32.gmra.mxu0 %v3717
      %v3832 = vpop.f32.mrf.mxu0
      %v3833 = vadd.f32 %v3672, %v3832
      %3834 = vmatmul.f32.gmra.mxu0 %v3720
      %v3835 = vpop.f32.mrf.mxu0
      %v3836 = vadd.f32 %v3672, %v3835
      %3837 = vmatmul.f32.gmra.mxu0 %v3723
      %v3838 = vpop.f32.mrf.mxu0
      %v3839 = vadd.f32 %v3672, %v3838
      %3840 = vmatmul.f32.gmra.mxu0 %v3726
      %v3841 = vpop.f32.mrf.mxu0
      %v3842 = vadd.f32 %v3672, %v3841
      %3843 = vmatmul.f32.gmra.mxu0 %v3729
      %v3844 = vpop.f32.mrf.mxu0
      %v3845 = vadd.f32 %v3672, %v3844
      %3846 = vmatmul.f32.gmra.mxu0 %v3732
      %v3847 = vpop.f32.mrf.mxu0
      %v3848 = vadd.f32 %v3672, %v3847
      %3849 = vmatmul.f32.gmra.mxu0 %v3735
      %v3850 = vpop.f32.mrf.mxu0
      %v3851 = vadd.f32 %v3672, %v3850
      %3852 = vmatmul.f32.gmra.mxu0 %v3738
      %v3853 = vpop.f32.mrf.mxu0
      %v3854 = vadd.f32 %v3672, %v3853
      %3855 = vmatmul.f32.gmra.mxu0 %v3741
      %v3856 = vpop.f32.mrf.mxu0
      %v3857 = vadd.f32 %v3672, %v3856
      %3858 = vmatmul.f32.gmra.mxu0 %v3744
      %v3859 = vpop.f32.mrf.mxu0
      %v3860 = vadd.f32 %v3672, %v3859
      %3861 = vmatmul.f32.gmra.mxu0 %v3747
      %v3862 = vpop.f32.mrf.mxu0
      %v3863 = vadd.f32 %v3672, %v3862
      %3864 = vmatmul.f32.gmra.mxu0 %v3750
      %v3865 = vpop.f32.mrf.mxu0
      %v3866 = vadd.f32 %v3672, %v3865
      %3867 = vmatmul.f32.gmra.mxu0 %v3753
      %v3868 = vpop.f32.mrf.mxu0
      %v3869 = vadd.f32 %v3672, %v3868
      %3870 = vmatmul.f32.gmra.mxu0 %v3756
      %v3871 = vpop.f32.mrf.mxu0
      %v3872 = vadd.f32 %v3672, %v3871
      %3873 = vmatmul.f32.gmra.mxu0 %v3759
      %v3874 = vpop.f32.mrf.mxu0
      %v3875 = vadd.f32 %v3672, %v3874
      %3876 = vmatmul.f32.gmra.mxu0 %v3762
      %v3877 = vpop.f32.mrf.mxu0
      %v3878 = vadd.f32 %v3672, %v3877
      %3879 = vmatmul.f32.gmra.mxu0 %v3765
      %v3880 = vpop.f32.mrf.mxu0
      %v3881 = vadd.f32 %v3672, %v3880
      %3882 = vmatmul.f32.gmra.mxu0 %v3768
      %v3883 = vpop.f32.mrf.mxu0
      %v3884 = vadd.f32 %v3672, %v3883
      %3885 = vdwg.mxu0
      %v3886 = vadd.f32 %v3791, %v306
      %v3887 = vadd.f32 %v3794, %v307
      %v3888 = vadd.f32 %v3797, %v308
      %v3889 = vadd.f32 %v3800, %v309
      %v3890 = vadd.f32 %v3803, %v310
      %v3891 = vadd.f32 %v3806, %v311
      %v3892 = vadd.f32 %v3809, %v312
      %v3893 = vadd.f32 %v3812, %v313
      %v3894 = vadd.f32 %v3815, %v314
      %v3895 = vadd.f32 %v3818, %v315
      %v3896 = vadd.f32 %v3821, %v316
      %v3897 = vadd.f32 %v3824, %v317
      %v3898 = vadd.f32 %v3827, %v318
      %v3899 = vadd.f32 %v3830, %v319
      %v3900 = vadd.f32 %v3833, %v320
      %v3901 = vadd.f32 %v3836, %v321
      %v3902 = vadd.f32 %v3839, %v322
      %v3903 = vadd.f32 %v3842, %v323
      %v3904 = vadd.f32 %v3845, %v324
      %v3905 = vadd.f32 %v3848, %v325
      %v3906 = vadd.f32 %v3851, %v326
      %v3907 = vadd.f32 %v3854, %v327
      %v3908 = vadd.f32 %v3857, %v328
      %v3909 = vadd.f32 %v3860, %v329
      %v3910 = vadd.f32 %v3863, %v330
      %v3911 = vadd.f32 %v3866, %v331
      %v3912 = vadd.f32 %v3869, %v332
      %v3913 = vadd.f32 %v3872, %v333
      %v3914 = vadd.f32 %v3875, %v334
      %v3915 = vadd.f32 %v3878, %v335
      %v3916 = vadd.f32 %v3881, %v336
      %v3917 = vadd.f32 %v3884, %v337
      %v3918 = vmax.f32 %v3886, 0.0
      %v3919 = vmax.f32 %v3887, 0.0
      %v3920 = vmax.f32 %v3888, 0.0
      %v3921 = vmax.f32 %v3889, 0.0
      %v3922 = vmax.f32 %v3890, 0.0
      %v3923 = vmax.f32 %v3891, 0.0
      %v3924 = vmax.f32 %v3892, 0.0
      %v3925 = vmax.f32 %v3893, 0.0
      %v3926 = vmax.f32 %v3894, 0.0
      %v3927 = vmax.f32 %v3895, 0.0
      %v3928 = vmax.f32 %v3896, 0.0
      %v3929 = vmax.f32 %v3897, 0.0
      %v3930 = vmax.f32 %v3898, 0.0
      %v3931 = vmax.f32 %v3899, 0.0
      %v3932 = vmax.f32 %v3900, 0.0
      %v3933 = vmax.f32 %v3901, 0.0
      %v3934 = vmax.f32 %v3902, 0.0
      %v3935 = vmax.f32 %v3903, 0.0
      %v3936 = vmax.f32 %v3904, 0.0
      %v3937 = vmax.f32 %v3905, 0.0
      %v3938 = vmax.f32 %v3906, 0.0
      %v3939 = vmax.f32 %v3907, 0.0
      %v3940 = vmax.f32 %v3908, 0.0
      %v3941 = vmax.f32 %v3909, 0.0
      %v3942 = vmax.f32 %v3910, 0.0
      %v3943 = vmax.f32 %v3911, 0.0
      %v3944 = vmax.f32 %v3912, 0.0
      %v3945 = vmax.f32 %v3913, 0.0
      %v3946 = vmax.f32 %v3914, 0.0
      %v3947 = vmax.f32 %v3915, 0.0
      %v3948 = vmax.f32 %v3916, 0.0
      %v3949 = vmax.f32 %v3917, 0.0
      %3950 = vst.msk [vmem:[%s305] sm:$0xff] %vm344, %v3918
      %3951 = vst.msk [vmem:[%s305 + $0x8] sm:$0xff] %vm344, %v3919
      %3952 = vst.msk [vmem:[%s305 + $0x10] sm:$0xff] %vm344, %v3920
      %3953 = vst.msk [vmem:[%s305 + $0x18] sm:$0xff] %vm344, %v3921
      %3954 = vst.msk [vmem:[%s305 + $0x20] sm:$0xff] %vm344, %v3922
      %3955 = vst.msk [vmem:[%s305 + $0x28] sm:$0xff] %vm344, %v3923
      %3956 = vst.msk [vmem:[%s305 + $0x30] sm:$0xff] %vm344, %v3924
      %3957 = vst.msk [vmem:[%s305 + $0x38] sm:$0xff] %vm344, %v3925
      %3958 = vst.msk [vmem:[%s305 + $0x40] sm:$0xff] %vm344, %v3926
      %3959 = vst.msk [vmem:[%s305 + $0x48] sm:$0xff] %vm344, %v3927
      %3960 = vst.msk [vmem:[%s305 + $0x50] sm:$0xff] %vm344, %v3928
      %3961 = vst.msk [vmem:[%s305 + $0x58] sm:$0xff] %vm344, %v3929
      %3962 = vst.msk [vmem:[%s305 + $0x60] sm:$0xff] %vm344, %v3930
      %3963 = vst.msk [vmem:[%s305 + $0x68] sm:$0xff] %vm344, %v3931
      %3964 = vst.msk [vmem:[%s305 + $0x70] sm:$0xff] %vm344, %v3932
      %3965 = vst.msk [vmem:[%s305 + $0x78] sm:$0xff] %vm344, %v3933
      %3966 = vst.msk [vmem:[%s305 + $0x80] sm:$0xff] %vm344, %v3934
      %3967 = vst.msk [vmem:[%s305 + $0x88] sm:$0xff] %vm344, %v3935
      %3968 = vst.msk [vmem:[%s305 + $0x90] sm:$0xff] %vm344, %v3936
      %3969 = vst.msk [vmem:[%s305 + $0x98] sm:$0xff] %vm344, %v3937
      %3970 = vst.msk [vmem:[%s305 + $0xa0] sm:$0xff] %vm344, %v3938
      %3971 = vst.msk [vmem:[%s305 + $0xa8] sm:$0xff] %vm344, %v3939
      %3972 = vst.msk [vmem:[%s305 + $0xb0] sm:$0xff] %vm344, %v3940
      %3973 = vst.msk [vmem:[%s305 + $0xb8] sm:$0xff] %vm344, %v3941
      %3974 = vst.msk [vmem:[%s305 + $0xc0] sm:$0xff] %vm344, %v3942
      %3975 = vst.msk [vmem:[%s305 + $0xc8] sm:$0xff] %vm344, %v3943
      %3976 = vst.msk [vmem:[%s305 + $0xd0] sm:$0xff] %vm344, %v3944
      %3977 = vst.msk [vmem:[%s305 + $0xd8] sm:$0xff] %vm344, %v3945
      %3978 = vst.msk [vmem:[%s305 + $0xe0] sm:$0xff] %vm344, %v3946
      %3979 = vst.msk [vmem:[%s305 + $0xe8] sm:$0xff] %vm344, %v3947
      %3980 = vst.msk [vmem:[%s305 + $0xf0] sm:$0xff] %vm344, %v3948
      %3981 = vst.msk [vmem:[%s305 + $0xf8] sm:$0xff] %vm344, %v3949
      %p3982 = scmp.lt.s32.totalorder %s19, 1
      %s3983 = scalar_select %p3982, %s19, 1
      %s3984 = smul.addr %s3983, 32
      %s3985 = smul.addr %s3984, 8
      %s3986 = scalar_lea.vmem %s8, %s3985
      // Predicated region
      $region53: #{sre_bottleneck_forward.1} parent=51 // pred_check
        %p3987 = pneg %p210
      $region54: #{sre_bottleneck_forward.1} parent=51 // pred_check_branch
        %3989 = sbr.rel (%p3987) target = $region56
      $region55: #{sre_bottleneck_forward.1} parent=51 // pred_region
        _
      $region56: #{sre_bottleneck_forward.1} parent=51 // pred_fallthru
        _
    $region52: #{sre_bottleneck_forward.1} parent=5 // pred_fallthru
      _
    %p3990 = scmp.le.s32.totalorder 2, %s14
    // Predicated region
    $region57: #{sre_bottleneck_forward.1} parent=5 // pred_check
      %p3991 = pneg %p3990
    $region58: #{sre_bottleneck_forward.1} parent=5 // pred_check_branch
      %3993 = sbr.rel (%p3991) target = $region60
    $region59: #{sre_bottleneck_forward.1} parent=5 // pred_region
      %s3994 = ssub.s32 %s14, 2
      // Predicated region
      $region61: #{sre_bottleneck_forward.1} parent=59 // pred_check
        %p3995 = pneg %p216
      $region62: #{sre_bottleneck_forward.1} parent=59 // pred_check_branch
        %3997 = sbr.rel (%p3995) target = $region64
      $region63: #{sre_bottleneck_forward.1} parent=59 // pred_region
        %p3998 = scmp.lt.s32.totalorder %s20, 1
        %s3999 = scalar_select %p3998, %s20, 1
        %s4000 = smul.addr %s3999, 32
        %s4001 = smul.addr %s4000, 8
        %s4002 = scalar_lea.vmem %s8, %s4001
      $region64: #{sre_bottleneck_forward.1} parent=59 // pred_fallthru
        _
    $region60: #{sre_bottleneck_forward.1} parent=5 // pred_fallthru
      _
  $region6: #{sre_bottleneck_forward.1} parent=0 // loop_footer
    %s18 = sadd.s32 1, %s14
  $region7: #{sre_bottleneck_forward.1} parent=0 // loop_footer_branch
    %13 = sbr.rel target = $region3
  $region8: #{sre_bottleneck_forward.1} parent=0 // loop_exit
    _

</llo_original>
